<compile_context>
chip_gen: v7x
topology: tpu7x:2x2x1
jax: 0.10.0
libtpu: 0.0.40
codegen_flags: <defaults>
</compile_context>

<pallas_src>
import functools

import jax
import jax.numpy as jnp
from jax.experimental import pallas as pl
from jax.experimental.pallas import tpu as pltpu

LANE = 128
SUBLANE = 8


def _round_up(x, m):
    return ((x + m - 1) // m) * m


# ----------------------------------------------------------------------------- kernel
def rqn_block_kernel(total_t,                  # python int: true sequence length
                     states_ref,               # (T_blk, B, S)  block of timesteps
                     h0_ref,                   # (B, H)         initial hidden (resident)
                     w1_ref, b1_ref,           # (S, H), (1, H)
                     wih_ref, bih_ref,         # (H, 3H), (1, 3H)  [r|z|n], r/z biases pre-summed
                     whh_ref, bhhn_ref,        # (H, 3H), (1, H)   n-gate hidden bias
                     w3_ref, b3_ref,           # (H, A), (1, A)
                     out_ref,                  # (T_blk, B, A)  per-block output
                     hout_ref,                 # (B, H)         final hidden
                     h_scr,                    # VMEM (B, H)        hidden carry
                     gi_scr,                   # VMEM (T_blk, B, 3H) hoisted input gates
                     hseq_scr):                # VMEM (T_blk, B, H)  per-step hidden
    blk = pl.program_id(0)
    nblk = pl.num_programs(0)
    t_blk, b, s = states_ref.shape
    h = h_scr.shape[-1]
    a = out_ref.shape[-1]

    @pl.when(blk == 0)
    def _():
        h_scr[...] = h0_ref[...]

    # ---- hoisted (state-only) work for the whole block: two big batched matmuls
    x = states_ref[...].reshape(t_blk * b, s)
    x = jnp.dot(x, w1_ref[...], preferred_element_type=jnp.float32) + b1_ref[...]
    x = jnp.maximum(x, 0.0)
    gi = jnp.dot(x, wih_ref[...], preferred_element_type=jnp.float32) + bih_ref[...]
    gi_scr[...] = gi.reshape(t_blk, b, 3 * h)

    t_base = blk * t_blk

    # ---- serial recurrence: one fused (B,H)@(H,3H) matmul + pointwise per step
    def step(t, carry):
        h_prev = h_scr[...]
        gi_t = gi_scr[t]                                             # (B, 3H)
        gh = jnp.dot(h_prev, whh_ref[...], preferred_element_type=jnp.float32)
        r = jax.nn.sigmoid(gi_t[:, 0:h] + gh[:, 0:h])                # 128-aligned slices
        z = jax.nn.sigmoid(gi_t[:, h:2 * h] + gh[:, h:2 * h])
        n = jnp.tanh(gi_t[:, 2 * h:3 * h] + r * (gh[:, 2 * h:3 * h] + bhhn_ref[...]))
        h_new = (1.0 - z) * n + z * h_prev
        hseq_scr[t] = h_new

        @pl.when(t_base + t < total_t)     # don't advance carry on padded tail steps
        def _():
            h_scr[...] = h_new

        return carry

    jax.lax.fori_loop(0, t_blk, step, 0, unroll=True)

    # ---- hoisted layer3 for the whole block (one batched matmul)
    hs = hseq_scr[...].reshape(t_blk * b, h)
    out = jnp.dot(hs, w3_ref[...], preferred_element_type=jnp.float32) + b3_ref[...]
    out_ref[...] = out.reshape(t_blk, b, a)

    @pl.when(blk == nblk - 1)
    def _():
        hout_ref[...] = h_scr[...]


# ----------------------------------------------------------------------------- wrapper
def rqn_forward_sequence(states, h0, kparams, t_block=16):
    """states: (T, B, state_size) f32, h0: (B, hidden_size) f32.
    Returns (out_seq (T, B, action_size), h_final (B, hidden_size))."""
    T, B, S = states.shape
    H = h0.shape[-1]
    A = kparams["action_size"]

    S_pad, H_pad = kparams["w1"].shape
    A_pad = kparams["w3"].shape[-1]
    B_pad = _round_up(max(B, 1), SUBLANE)

    T_blk = max(1, min(t_block, T))
    num_blocks = pl.cdiv(T, T_blk)
    T_pad = num_blocks * T_blk

    states_p = jnp.zeros((T_pad, B_pad, S_pad), jnp.float32).at[:T, :B, :S].set(states)
    h0_p = jnp.zeros((B_pad, H_pad), jnp.float32).at[:B, :H].set(h0)

    const2 = lambda b: (0, 0)

    grid_spec = pltpu.PrefetchScalarGridSpec(
        num_scalar_prefetch=0,
        grid=(num_blocks,),
        in_specs=[
            pl.BlockSpec((T_blk, B_pad, S_pad), lambda b: (b, 0, 0)),   # states block
            pl.BlockSpec((B_pad, H_pad), const2),                       # h0 (resident)
            pl.BlockSpec((S_pad, H_pad), const2),                       # w1
            pl.BlockSpec((1, H_pad), const2),                           # b1
            pl.BlockSpec((H_pad, 3 * H_pad), const2),                   # w_ih [r|z|n]
            pl.BlockSpec((1, 3 * H_pad), const2),                       # b_ih (+b_hh for r,z)
            pl.BlockSpec((H_pad, 3 * H_pad), const2),                   # w_hh [r|z|n]
            pl.BlockSpec((1, H_pad), const2),                           # b_hh (n gate)
            pl.BlockSpec((H_pad, A_pad), const2),                       # w3
            pl.BlockSpec((1, A_pad), const2),                           # b3
        ],
        out_specs=[
            pl.BlockSpec((T_blk, B_pad, A_pad), lambda b: (b, 0, 0)),   # out block
            pl.BlockSpec((B_pad, H_pad), const2),                       # final hidden
        ],
        scratch_shapes=[
            pltpu.VMEM((B_pad, H_pad), jnp.float32),                    # h carry
            pltpu.VMEM((T_blk, B_pad, 3 * H_pad), jnp.float32),         # gi (hoisted)
            pltpu.VMEM((T_blk, B_pad, H_pad), jnp.float32),             # per-step hidden
        ],
    )

    out_p, h_p = pl.pallas_call(
        functools.partial(rqn_block_kernel, T),
        out_shape=(jax.ShapeDtypeStruct((T_pad, B_pad, A_pad), jnp.float32),
                   jax.ShapeDtypeStruct((B_pad, H_pad), jnp.float32)),
        grid_spec=grid_spec,
        compiler_params=pltpu.CompilerParams(
            dimension_semantics=("arbitrary",),        # time axis is a recurrence
            vmem_limit_bytes=32 * 1024 * 1024,         # explicit; safe on v5e/v6e/v7x
        ),
    )(states_p, h0_p,
      kparams["w1"], kparams["b1"],
      kparams["w_ih_cat"], kparams["b_ih_cat"],
      kparams["w_hh_cat"], kparams["b_hh_n"],
      kparams["w3"], kparams["b3"])

    return out_p[:T, :B, :A], h_p[:B, :H]


def rqn_forward(state, hidden, kparams):
    """Single-step forward matching the PyTorch module signature."""
    out_seq, h_new = rqn_forward_sequence(state[None], hidden, kparams)
    return out_seq[0], h_new


# ----------------------------------------------------------------------------- params
def init_params(key, state_size, action_size, hidden_size):
    """Synthetic params. Weights stored (in, out); GRU weights/biases stored with the
    gate index [r, z, n] on a leading axis (PyTorch GRUCell weights split & transposed)."""
    ks = jax.random.split(key, 8)
    u = lambda k, shape, s: jax.random.uniform(k, shape, jnp.float32, -s, s)
    s1 = 1.0 / float(state_size) ** 0.5
    s2 = 1.0 / float(hidden_size) ** 0.5
    return {
        "w1": u(ks[0], (state_size, hidden_size), s1),
        "b1": u(ks[1], (1, hidden_size), s1),
        "w_ih": u(ks[2], (3, hidden_size, hidden_size), s2),
        "w_hh": u(ks[3], (3, hidden_size, hidden_size), s2),
        "b_ih": u(ks[4], (3, 1, hidden_size), s2),
        "b_hh": u(ks[5], (3, 1, hidden_size), s2),
        "w3": u(ks[6], (hidden_size, action_size), s2),
        "b3": u(ks[7], (1, action_size), s2),
    }


def pad_params_for_kernel(p, state_size, action_size, hidden_size):
    """Zero-pad feature dims to 128 lanes and lane-concatenate GRU gate weights [r|z|n].
    r/z biases pre-summed (b_ih+b_hh); n-gate hidden bias kept separate (exact)."""
    S_pad = _round_up(state_size, LANE)
    H_pad = _round_up(hidden_size, LANE)
    A_pad = _round_up(action_size, LANE)

    def pad2(a, r, c):
        return jnp.pad(a, ((0, r - a.shape[0]), (0, c - a.shape[1])))

    w_ih_cat = jnp.concatenate([pad2(p["w_ih"][g], H_pad, H_pad) for g in range(3)], axis=1)
    w_hh_cat = jnp.concatenate([pad2(p["w_hh"][g], H_pad, H_pad) for g in range(3)], axis=1)
    b_ih = [pad2(p["b_ih"][g], 1, H_pad) for g in range(3)]
    b_hh = [pad2(p["b_hh"][g], 1, H_pad) for g in range(3)]
    b_ih_cat = jnp.concatenate([b_ih[0] + b_hh[0], b_ih[1] + b_hh[1], b_ih[2]], axis=1)

    return {
        "w1": pad2(p["w1"], S_pad, H_pad),
        "b1": pad2(p["b1"], 1, H_pad),
        "w_ih_cat": w_ih_cat,
        "b_ih_cat": b_ih_cat,
        "w_hh_cat": w_hh_cat,
        "b_hh_n": b_hh[2],
        "w3": pad2(p["w3"], H_pad, A_pad),
        "b3": pad2(p["b3"], 1, A_pad),
        "action_size": action_size,
    }


# ----------------------------------------------------------------------------- reference
def rqn_step_reference(state, hidden, p):
    x = jax.nn.relu(state @ p["w1"] + p["b1"])
    gi_r = x @ p["w_ih"][0] + p["b_ih"][0]
    gi_z = x @ p["w_ih"][1] + p["b_ih"][1]
    gi_n = x @ p["w_ih"][2] + p["b_ih"][2]
    gh_r = hidden @ p["w_hh"][0] + p["b_hh"][0]
    gh_z = hidden @ p["w_hh"][1] + p["b_hh"][1]
    gh_n = hidden @ p["w_hh"][2] + p["b_hh"][2]
    r = jax.nn.sigmoid(gi_r + gh_r)
    z = jax.nn.sigmoid(gi_z + gh_z)
    n = jnp.tanh(gi_n + r * gh_n)
    h_new = (1.0 - z) * n + z * hidden
    out = h_new @ p["w3"] + p["b3"]
    return out, h_new


def rqn_sequence_reference(states, h0, p):
    def step(h, s):
        out, h_new = rqn_step_reference(s, h, p)
        return h_new, out
    h_final, outs = jax.lax.scan(step, h0, states)
    return outs, h_final


# ----------------------------------------------------------------------------- main
if __name__ == "__main__":
    key = jax.random.PRNGKey(0)
    k_state, k_hidden, k_params, k_state2 = jax.random.split(key, 4)

    batch = 2
    state_size = 16
    hidden_size = 32
    action_size = 4

    params = init_params(k_params, state_size, action_size, hidden_size)
    kparams = pad_params_for_kernel(params, state_size, action_size, hidden_size)

    # --- short sequence (single time block)
    T = 8
    states = jax.random.normal(k_state, (T, batch, state_size), dtype=jnp.float32)
    h0 = jax.random.normal(k_hidden, (batch, hidden_size), dtype=jnp.float32)

    out_seq, h_final = rqn_forward_sequence(states, h0, kparams)
    out_seq = jax.block_until_ready(out_seq)
    h_final = jax.block_until_ready(h_final)

    ref_out, ref_h = rqn_sequence_reference(states, h0, params)
    assert jnp.allclose(out_seq, ref_out, atol=1e-4, rtol=1e-4), "sequence output mismatch"
    assert jnp.allclose(h_final, ref_h, atol=1e-4, rtol=1e-4), "final hidden mismatch"

    # --- longer sequence: exercises multi-block grid + masked padded tail steps
    T2 = 37
    states2 = jax.random.normal(k_state2, (T2, batch, state_size), dtype=jnp.float32)
    out2, h2 = rqn_forward_sequence(states2, h0, kparams, t_block=16)
    out2 = jax.block_until_ready(out2)
    ref_out2, ref_h2 = rqn_sequence_reference(states2, h0, params)
    assert jnp.allclose(out2, ref_out2, atol=1e-3, rtol=1e-3), "long sequence output mismatch"
    assert jnp.allclose(h2, ref_h2, atol=1e-3, rtol=1e-3), "long sequence hidden mismatch"

    # --- single-step interface (matches the PyTorch module forward)
    out1, h1 = rqn_forward(states[0], h0, kparams)
    out1 = jax.block_until_ready(out1)
    r_out1, r_h1 = rqn_step_reference(states[0], h0, params)
    assert jnp.allclose(out1, r_out1, atol=1e-4, rtol=1e-4), "step output mismatch"
    assert jnp.allclose(h1, r_h1, atol=1e-4, rtol=1e-4), "step hidden mismatch"

    print("KERNEL_OK")
</pallas_src>

<mosaic_0001>
module attributes {stable_mosaic.version = 11 : i64} {
  func.func @rqn_block_kernel(%arg0: i32, %arg1: memref<8x8x128xf32, #tpu.memory_space<vmem>>, %arg2: memref<8x128xf32, #tpu.memory_space<vmem>>, %arg3: memref<128x128xf32, #tpu.memory_space<vmem>>, %arg4: memref<1x128xf32, #tpu.memory_space<vmem>>, %arg5: memref<128x384xf32, #tpu.memory_space<vmem>>, %arg6: memref<1x384xf32, #tpu.memory_space<vmem>>, %arg7: memref<128x384xf32, #tpu.memory_space<vmem>>, %arg8: memref<1x128xf32, #tpu.memory_space<vmem>>, %arg9: memref<128x128xf32, #tpu.memory_space<vmem>>, %arg10: memref<1x128xf32, #tpu.memory_space<vmem>>, %arg11: memref<8x8x128xf32, #tpu.memory_space<vmem>>, %arg12: memref<8x128xf32, #tpu.memory_space<vmem>>, %arg13: memref<8x128xf32, #tpu.memory_space<vmem>>, %arg14: memref<8x8x384xf32, #tpu.memory_space<vmem>>, %arg15: memref<8x8x128xf32, #tpu.memory_space<vmem>>) attributes {dimension_semantics = [#tpu.dimension_semantics<arbitrary>], iteration_bounds = array<i64: 1>, scalar_prefetch = 0 : i64, scratch_operands = 3 : i64, tpu.core_type = #tpu.core_type<tc>, window_params = [{transform_indices = @transform_0, window_bounds = array<i64: 8, 8, 128>}, {pipeline_mode = #tpu.pipeline_mode<synchronous>, transform_indices = @transform_1, window_bounds = array<i64: 8, 128>}, {pipeline_mode = #tpu.pipeline_mode<synchronous>, transform_indices = @transform_2, window_bounds = array<i64: 128, 128>}, {pipeline_mode = #tpu.pipeline_mode<synchronous>, transform_indices = @transform_3, window_bounds = array<i64: 1, 128>}, {pipeline_mode = #tpu.pipeline_mode<synchronous>, transform_indices = @transform_4, window_bounds = array<i64: 128, 384>}, {pipeline_mode = #tpu.pipeline_mode<synchronous>, transform_indices = @transform_5, window_bounds = array<i64: 1, 384>}, {pipeline_mode = #tpu.pipeline_mode<synchronous>, transform_indices = @transform_6, window_bounds = array<i64: 128, 384>}, {pipeline_mode = #tpu.pipeline_mode<synchronous>, transform_indices = @transform_7, window_bounds = array<i64: 1, 128>}, {pipeline_mode = #tpu.pipeline_mode<synchronous>, transform_indices = @transform_8, window_bounds = array<i64: 128, 128>}, {pipeline_mode = #tpu.pipeline_mode<synchronous>, transform_indices = @transform_9, window_bounds = array<i64: 1, 128>}, {transform_indices = @transform_10, window_bounds = array<i64: 8, 8, 128>}, {pipeline_mode = #tpu.pipeline_mode<synchronous>, transform_indices = @transform_11, window_bounds = array<i64: 8, 128>}]} {
    %c0_i32 = arith.constant 0 : i32
    %0 = arith.cmpi eq, %arg0, %c0_i32 : i32
    %1 = arith.extui %0 : i1 to i32
    %c0_i32_0 = arith.constant 0 : i32
    %2 = arith.cmpi ne, %1, %c0_i32_0 : i32
    scf.if %2 {
      %c0_159 = arith.constant 0 : index
      %c0_160 = arith.constant 0 : index
      %376 = vector.load %arg2[%c0_159, %c0_160] : memref<8x128xf32, #tpu.memory_space<vmem>>, vector<8x128xf32>
      %c0_161 = arith.constant 0 : index
      %c0_162 = arith.constant 0 : index
      %377 = vector.load %arg13[%c0_161, %c0_162] : memref<8x128xf32, #tpu.memory_space<vmem>>, vector<8x128xf32>
      tpu.vector_store %arg13[%c0_161, %c0_162], %376 {strides = array<i32>} : memref<8x128xf32, #tpu.memory_space<vmem>>, vector<8x128xf32>,
    } else {
    }
    %c0 = arith.constant 0 : index
    %c0_1 = arith.constant 0 : index
    %c0_2 = arith.constant 0 : index
    %3 = vector.load %arg1[%c0, %c0_1, %c0_2] : memref<8x8x128xf32, #tpu.memory_space<vmem>>, vector<8x8x128xf32>
    %4 = vector.shape_cast %3 : vector<8x8x128xf32> to vector<64x128xf32>
    %c0_3 = arith.constant 0 : index
    %c0_4 = arith.constant 0 : index
    %5 = vector.load %arg3[%c0_3, %c0_4] : memref<128x128xf32, #tpu.memory_space<vmem>>, vector<128x128xf32>
    %cst = arith.constant dense<0.000000e+00> : vector<64x128xf32>
    %6 = tpu.matmul %4, %5, %cst {dimension_numbers = #tpu.dot_dimension_numbers<[1], [0], [0], [1], [0, 0, 1, 1], [], []>} : vector<64x128xf32>, vector<128x128xf32>, vector<64x128xf32> -> vector<64x128xf32>
    %c0_5 = arith.constant 0 : index
    %c0_6 = arith.constant 0 : index
    %7 = vector.load %arg4[%c0_5, %c0_6] : memref<1x128xf32, #tpu.memory_space<vmem>>, vector<1x128xf32>
    %8 = vector.broadcast %7 : vector<1x128xf32> to vector<64x128xf32>
    %9 = arith.addf %6, %8 : vector<64x128xf32>
    %cst_7 = arith.constant 0.000000e+00 : f32
    %10 = vector.broadcast %cst_7 : f32 to vector<64x128xf32>
    %11 = arith.maximumf %9, %10 : vector<64x128xf32>
    %c0_8 = arith.constant 0 : index
    %c0_9 = arith.constant 0 : index
    %12 = vector.load %arg5[%c0_8, %c0_9] : memref<128x384xf32, #tpu.memory_space<vmem>>, vector<128x384xf32>
    %cst_10 = arith.constant dense<0.000000e+00> : vector<64x384xf32>
    %13 = tpu.matmul %11, %12, %cst_10 {dimension_numbers = #tpu.dot_dimension_numbers<[1], [0], [0], [1], [0, 0, 1, 1], [], []>} : vector<64x128xf32>, vector<128x384xf32>, vector<64x384xf32> -> vector<64x384xf32>
    %c0_11 = arith.constant 0 : index
    %c0_12 = arith.constant 0 : index
    %14 = vector.load %arg6[%c0_11, %c0_12] : memref<1x384xf32, #tpu.memory_space<vmem>>, vector<1x384xf32>
    %15 = vector.broadcast %14 : vector<1x384xf32> to vector<64x384xf32>
    %16 = arith.addf %13, %15 : vector<64x384xf32>
    %17 = vector.shape_cast %16 : vector<64x384xf32> to vector<8x8x384xf32>
    %c0_13 = arith.constant 0 : index
    %c0_14 = arith.constant 0 : index
    %c0_15 = arith.constant 0 : index
    %18 = vector.load %arg14[%c0_13, %c0_14, %c0_15] : memref<8x8x384xf32, #tpu.memory_space<vmem>>, vector<8x8x384xf32>
    tpu.vector_store %arg14[%c0_13, %c0_14, %c0_15], %17 {strides = array<i32>} : memref<8x8x384xf32, #tpu.memory_space<vmem>>, vector<8x8x384xf32>,
    %c8_i32 = arith.constant 8 : i32
    %19 = arith.muli %arg0, %c8_i32 : i32
    %c0_i32_16 = arith.constant 0 : i32
    %c0_17 = arith.constant 0 : index
    %c0_18 = arith.constant 0 : index
    %20 = vector.load %arg13[%c0_17, %c0_18] : memref<8x128xf32, #tpu.memory_space<vmem>>, vector<8x128xf32>
    %21 = arith.index_cast %c0_i32_16 : i32 to index
    %c0_19 = arith.constant 0 : index
    %c0_20 = arith.constant 0 : index
    %22 = vector.load %arg14[%21, %c0_19, %c0_20] : memref<8x8x384xf32, #tpu.memory_space<vmem>>, vector<1x8x384xf32>
    %23 = vector.shape_cast %22 : vector<1x8x384xf32> to vector<8x384xf32>
    %c0_21 = arith.constant 0 : index
    %c0_22 = arith.constant 0 : index
    %24 = vector.load %arg7[%c0_21, %c0_22] : memref<128x384xf32, #tpu.memory_space<vmem>>, vector<128x384xf32>
    %cst_23 = arith.constant dense<0.000000e+00> : vector<8x384xf32>
    %25 = tpu.matmul %20, %24, %cst_23 {dimension_numbers = #tpu.dot_dimension_numbers<[1], [0], [0], [1], [0, 0, 1, 1], [], []>} : vector<8x128xf32>, vector<128x384xf32>, vector<8x384xf32> -> vector<8x384xf32>
    %26 = vector.extract_strided_slice %23 {offsets = [0, 0], sizes = [8, 128], strides = [1, 1]} : vector<8x384xf32> to vector<8x128xf32>
    %27 = vector.extract_strided_slice %25 {offsets = [0, 0], sizes = [8, 128], strides = [1, 1]} : vector<8x384xf32> to vector<8x128xf32>
    %28 = arith.addf %26, %27 : vector<8x128xf32>
    %29 = arith.negf %28 : vector<8x128xf32>
    %30 = math.exp %29 : vector<8x128xf32>
    %cst_24 = arith.constant 1.000000e+00 : f32
    %31 = vector.broadcast %cst_24 : f32 to vector<8x128xf32>
    %32 = arith.addf %31, %30 : vector<8x128xf32>
    %33 = arith.divf %31, %32 : vector<8x128xf32>
    %34 = vector.extract_strided_slice %23 {offsets = [0, 128], sizes = [8, 128], strides = [1, 1]} : vector<8x384xf32> to vector<8x128xf32>
    %35 = vector.extract_strided_slice %25 {offsets = [0, 128], sizes = [8, 128], strides = [1, 1]} : vector<8x384xf32> to vector<8x128xf32>
    %36 = arith.addf %34, %35 : vector<8x128xf32>
    %37 = arith.negf %36 : vector<8x128xf32>
    %38 = math.exp %37 : vector<8x128xf32>
    %cst_25 = arith.constant 1.000000e+00 : f32
    %39 = vector.broadcast %cst_25 : f32 to vector<8x128xf32>
    %40 = arith.addf %39, %38 : vector<8x128xf32>
    %41 = arith.divf %39, %40 : vector<8x128xf32>
    %42 = vector.extract_strided_slice %23 {offsets = [0, 256], sizes = [8, 128], strides = [1, 1]} : vector<8x384xf32> to vector<8x128xf32>
    %43 = vector.extract_strided_slice %25 {offsets = [0, 256], sizes = [8, 128], strides = [1, 1]} : vector<8x384xf32> to vector<8x128xf32>
    %c0_26 = arith.constant 0 : index
    %c0_27 = arith.constant 0 : index
    %44 = vector.load %arg8[%c0_26, %c0_27] : memref<1x128xf32, #tpu.memory_space<vmem>>, vector<1x128xf32>
    %45 = vector.broadcast %44 : vector<1x128xf32> to vector<8x128xf32>
    %46 = arith.addf %43, %45 : vector<8x128xf32>
    %47 = arith.mulf %33, %46 : vector<8x128xf32>
    %48 = arith.addf %42, %47 : vector<8x128xf32>
    %49 = math.tanh %48 : vector<8x128xf32>
    %cst_28 = arith.constant 1.000000e+00 : f32
    %50 = vector.broadcast %cst_28 : f32 to vector<8x128xf32>
    %51 = arith.subf %50, %41 : vector<8x128xf32>
    %52 = arith.mulf %51, %49 : vector<8x128xf32>
    %53 = arith.mulf %41, %20 : vector<8x128xf32>
    %54 = arith.addf %52, %53 : vector<8x128xf32>
    %55 = arith.index_cast %c0_i32_16 : i32 to index
    %c0_29 = arith.constant 0 : index
    %c0_30 = arith.constant 0 : index
    %56 = vector.load %arg15[%55, %c0_29, %c0_30] : memref<8x8x128xf32, #tpu.memory_space<vmem>>, vector<1x8x128xf32>
    %57 = vector.shape_cast %56 : vector<1x8x128xf32> to vector<8x128xf32>
    %58 = vector.shape_cast %54 : vector<8x128xf32> to vector<1x8x128xf32>
    tpu.vector_store %arg15[%55, %c0_29, %c0_30], %58 {strides = array<i32>} : memref<8x8x128xf32, #tpu.memory_space<vmem>>, vector<1x8x128xf32>,
    %59 = arith.addi %19, %c0_i32_16 : i32
    %c8_i32_31 = arith.constant 8 : i32
    %60 = arith.cmpi slt, %59, %c8_i32_31 : i32
    %61 = arith.extui %60 : i1 to i32
    %c0_i32_32 = arith.constant 0 : i32
    %62 = arith.cmpi ne, %61, %c0_i32_32 : i32
    scf.if %62 {
      %c0_159 = arith.constant 0 : index
      %c0_160 = arith.constant 0 : index
      %376 = vector.load %arg13[%c0_159, %c0_160] : memref<8x128xf32, #tpu.memory_space<vmem>>, vector<8x128xf32>
      tpu.vector_store %arg13[%c0_159, %c0_160], %54 {strides = array<i32>} : memref<8x128xf32, #tpu.memory_space<vmem>>, vector<8x128xf32>,
    } else {
    }
    %c1_i32 = arith.constant 1 : i32
    %c0_33 = arith.constant 0 : index
    %c0_34 = arith.constant 0 : index
    %63 = vector.load %arg13[%c0_33, %c0_34] : memref<8x128xf32, #tpu.memory_space<vmem>>, vector<8x128xf32>
    %64 = arith.index_cast %c1_i32 : i32 to index
    %c0_35 = arith.constant 0 : index
    %c0_36 = arith.constant 0 : index
    %65 = vector.load %arg14[%64, %c0_35, %c0_36] : memref<8x8x384xf32, #tpu.memory_space<vmem>>, vector<1x8x384xf32>
    %66 = vector.shape_cast %65 : vector<1x8x384xf32> to vector<8x384xf32>
    %c0_37 = arith.constant 0 : index
    %c0_38 = arith.constant 0 : index
    %67 = vector.load %arg7[%c0_37, %c0_38] : memref<128x384xf32, #tpu.memory_space<vmem>>, vector<128x384xf32>
    %cst_39 = arith.constant dense<0.000000e+00> : vector<8x384xf32>
    %68 = tpu.matmul %63, %67, %cst_39 {dimension_numbers = #tpu.dot_dimension_numbers<[1], [0], [0], [1], [0, 0, 1, 1], [], []>} : vector<8x128xf32>, vector<128x384xf32>, vector<8x384xf32> -> vector<8x384xf32>
    %69 = vector.extract_strided_slice %66 {offsets = [0, 0], sizes = [8, 128], strides = [1, 1]} : vector<8x384xf32> to vector<8x128xf32>
    %70 = vector.extract_strided_slice %68 {offsets = [0, 0], sizes = [8, 128], strides = [1, 1]} : vector<8x384xf32> to vector<8x128xf32>
    %71 = arith.addf %69, %70 : vector<8x128xf32>
    %72 = arith.negf %71 : vector<8x128xf32>
    %73 = math.exp %72 : vector<8x128xf32>
    %cst_40 = arith.constant 1.000000e+00 : f32
    %74 = vector.broadcast %cst_40 : f32 to vector<8x128xf32>
    %75 = arith.addf %74, %73 : vector<8x128xf32>
    %76 = arith.divf %74, %75 : vector<8x128xf32>
    %77 = vector.extract_strided_slice %66 {offsets = [0, 128], sizes = [8, 128], strides = [1, 1]} : vector<8x384xf32> to vector<8x128xf32>
    %78 = vector.extract_strided_slice %68 {offsets = [0, 128], sizes = [8, 128], strides = [1, 1]} : vector<8x384xf32> to vector<8x128xf32>
    %79 = arith.addf %77, %78 : vector<8x128xf32>
    %80 = arith.negf %79 : vector<8x128xf32>
    %81 = math.exp %80 : vector<8x128xf32>
    %cst_41 = arith.constant 1.000000e+00 : f32
    %82 = vector.broadcast %cst_41 : f32 to vector<8x128xf32>
    %83 = arith.addf %82, %81 : vector<8x128xf32>
    %84 = arith.divf %82, %83 : vector<8x128xf32>
    %85 = vector.extract_strided_slice %66 {offsets = [0, 256], sizes = [8, 128], strides = [1, 1]} : vector<8x384xf32> to vector<8x128xf32>
    %86 = vector.extract_strided_slice %68 {offsets = [0, 256], sizes = [8, 128], strides = [1, 1]} : vector<8x384xf32> to vector<8x128xf32>
    %c0_42 = arith.constant 0 : index
    %c0_43 = arith.constant 0 : index
    %87 = vector.load %arg8[%c0_42, %c0_43] : memref<1x128xf32, #tpu.memory_space<vmem>>, vector<1x128xf32>
    %88 = vector.broadcast %87 : vector<1x128xf32> to vector<8x128xf32>
    %89 = arith.addf %86, %88 : vector<8x128xf32>
    %90 = arith.mulf %76, %89 : vector<8x128xf32>
    %91 = arith.addf %85, %90 : vector<8x128xf32>
    %92 = math.tanh %91 : vector<8x128xf32>
    %cst_44 = arith.constant 1.000000e+00 : f32
    %93 = vector.broadcast %cst_44 : f32 to vector<8x128xf32>
    %94 = arith.subf %93, %84 : vector<8x128xf32>
    %95 = arith.mulf %94, %92 : vector<8x128xf32>
    %96 = arith.mulf %84, %63 : vector<8x128xf32>
    %97 = arith.addf %95, %96 : vector<8x128xf32>
    %98 = arith.index_cast %c1_i32 : i32 to index
    %c0_45 = arith.constant 0 : index
    %c0_46 = arith.constant 0 : index
    %99 = vector.load %arg15[%98, %c0_45, %c0_46] : memref<8x8x128xf32, #tpu.memory_space<vmem>>, vector<1x8x128xf32>
    %100 = vector.shape_cast %99 : vector<1x8x128xf32> to vector<8x128xf32>
    %101 = vector.shape_cast %97 : vector<8x128xf32> to vector<1x8x128xf32>
    tpu.vector_store %arg15[%98, %c0_45, %c0_46], %101 {strides = array<i32>} : memref<8x8x128xf32, #tpu.memory_space<vmem>>, vector<1x8x128xf32>,
    %102 = arith.addi %19, %c1_i32 : i32
    %c8_i32_47 = arith.constant 8 : i32
    %103 = arith.cmpi slt, %102, %c8_i32_47 : i32
    %104 = arith.extui %103 : i1 to i32
    %c0_i32_48 = arith.constant 0 : i32
    %105 = arith.cmpi ne, %104, %c0_i32_48 : i32
    scf.if %105 {
      %c0_159 = arith.constant 0 : index
      %c0_160 = arith.constant 0 : index
      %376 = vector.load %arg13[%c0_159, %c0_160] : memref<8x128xf32, #tpu.memory_space<vmem>>, vector<8x128xf32>
      tpu.vector_store %arg13[%c0_159, %c0_160], %97 {strides = array<i32>} : memref<8x128xf32, #tpu.memory_space<vmem>>, vector<8x128xf32>,
    } else {
    }
    %c2_i32 = arith.constant 2 : i32
    %c0_49 = arith.constant 0 : index
    %c0_50 = arith.constant 0 : index
    %106 = vector.load %arg13[%c0_49, %c0_50] : memref<8x128xf32, #tpu.memory_space<vmem>>, vector<8x128xf32>
    %107 = arith.index_cast %c2_i32 : i32 to index
    %c0_51 = arith.constant 0 : index
    %c0_52 = arith.constant 0 : index
    %108 = vector.load %arg14[%107, %c0_51, %c0_52] : memref<8x8x384xf32, #tpu.memory_space<vmem>>, vector<1x8x384xf32>
    %109 = vector.shape_cast %108 : vector<1x8x384xf32> to vector<8x384xf32>
    %c0_53 = arith.constant 0 : index
    %c0_54 = arith.constant 0 : index
    %110 = vector.load %arg7[%c0_53, %c0_54] : memref<128x384xf32, #tpu.memory_space<vmem>>, vector<128x384xf32>
    %cst_55 = arith.constant dense<0.000000e+00> : vector<8x384xf32>
    %111 = tpu.matmul %106, %110, %cst_55 {dimension_numbers = #tpu.dot_dimension_numbers<[1], [0], [0], [1], [0, 0, 1, 1], [], []>} : vector<8x128xf32>, vector<128x384xf32>, vector<8x384xf32> -> vector<8x384xf32>
    %112 = vector.extract_strided_slice %109 {offsets = [0, 0], sizes = [8, 128], strides = [1, 1]} : vector<8x384xf32> to vector<8x128xf32>
    %113 = vector.extract_strided_slice %111 {offsets = [0, 0], sizes = [8, 128], strides = [1, 1]} : vector<8x384xf32> to vector<8x128xf32>
    %114 = arith.addf %112, %113 : vector<8x128xf32>
    %115 = arith.negf %114 : vector<8x128xf32>
    %116 = math.exp %115 : vector<8x128xf32>
    %cst_56 = arith.constant 1.000000e+00 : f32
    %117 = vector.broadcast %cst_56 : f32 to vector<8x128xf32>
    %118 = arith.addf %117, %116 : vector<8x128xf32>
    %119 = arith.divf %117, %118 : vector<8x128xf32>
    %120 = vector.extract_strided_slice %109 {offsets = [0, 128], sizes = [8, 128], strides = [1, 1]} : vector<8x384xf32> to vector<8x128xf32>
    %121 = vector.extract_strided_slice %111 {offsets = [0, 128], sizes = [8, 128], strides = [1, 1]} : vector<8x384xf32> to vector<8x128xf32>
    %122 = arith.addf %120, %121 : vector<8x128xf32>
    %123 = arith.negf %122 : vector<8x128xf32>
    %124 = math.exp %123 : vector<8x128xf32>
    %cst_57 = arith.constant 1.000000e+00 : f32
    %125 = vector.broadcast %cst_57 : f32 to vector<8x128xf32>
    %126 = arith.addf %125, %124 : vector<8x128xf32>
    %127 = arith.divf %125, %126 : vector<8x128xf32>
    %128 = vector.extract_strided_slice %109 {offsets = [0, 256], sizes = [8, 128], strides = [1, 1]} : vector<8x384xf32> to vector<8x128xf32>
    %129 = vector.extract_strided_slice %111 {offsets = [0, 256], sizes = [8, 128], strides = [1, 1]} : vector<8x384xf32> to vector<8x128xf32>
    %c0_58 = arith.constant 0 : index
    %c0_59 = arith.constant 0 : index
    %130 = vector.load %arg8[%c0_58, %c0_59] : memref<1x128xf32, #tpu.memory_space<vmem>>, vector<1x128xf32>
    %131 = vector.broadcast %130 : vector<1x128xf32> to vector<8x128xf32>
    %132 = arith.addf %129, %131 : vector<8x128xf32>
    %133 = arith.mulf %119, %132 : vector<8x128xf32>
    %134 = arith.addf %128, %133 : vector<8x128xf32>
    %135 = math.tanh %134 : vector<8x128xf32>
    %cst_60 = arith.constant 1.000000e+00 : f32
    %136 = vector.broadcast %cst_60 : f32 to vector<8x128xf32>
    %137 = arith.subf %136, %127 : vector<8x128xf32>
    %138 = arith.mulf %137, %135 : vector<8x128xf32>
    %139 = arith.mulf %127, %106 : vector<8x128xf32>
    %140 = arith.addf %138, %139 : vector<8x128xf32>
    %141 = arith.index_cast %c2_i32 : i32 to index
    %c0_61 = arith.constant 0 : index
    %c0_62 = arith.constant 0 : index
    %142 = vector.load %arg15[%141, %c0_61, %c0_62] : memref<8x8x128xf32, #tpu.memory_space<vmem>>, vector<1x8x128xf32>
    %143 = vector.shape_cast %142 : vector<1x8x128xf32> to vector<8x128xf32>
    %144 = vector.shape_cast %140 : vector<8x128xf32> to vector<1x8x128xf32>
    tpu.vector_store %arg15[%141, %c0_61, %c0_62], %144 {strides = array<i32>} : memref<8x8x128xf32, #tpu.memory_space<vmem>>, vector<1x8x128xf32>,
    %145 = arith.addi %19, %c2_i32 : i32
    %c8_i32_63 = arith.constant 8 : i32
    %146 = arith.cmpi slt, %145, %c8_i32_63 : i32
    %147 = arith.extui %146 : i1 to i32
    %c0_i32_64 = arith.constant 0 : i32
    %148 = arith.cmpi ne, %147, %c0_i32_64 : i32
    scf.if %148 {
      %c0_159 = arith.constant 0 : index
      %c0_160 = arith.constant 0 : index
      %376 = vector.load %arg13[%c0_159, %c0_160] : memref<8x128xf32, #tpu.memory_space<vmem>>, vector<8x128xf32>
      tpu.vector_store %arg13[%c0_159, %c0_160], %140 {strides = array<i32>} : memref<8x128xf32, #tpu.memory_space<vmem>>, vector<8x128xf32>,
    } else {
    }
    %c3_i32 = arith.constant 3 : i32
    %c0_65 = arith.constant 0 : index
    %c0_66 = arith.constant 0 : index
    %149 = vector.load %arg13[%c0_65, %c0_66] : memref<8x128xf32, #tpu.memory_space<vmem>>, vector<8x128xf32>
    %150 = arith.index_cast %c3_i32 : i32 to index
    %c0_67 = arith.constant 0 : index
    %c0_68 = arith.constant 0 : index
    %151 = vector.load %arg14[%150, %c0_67, %c0_68] : memref<8x8x384xf32, #tpu.memory_space<vmem>>, vector<1x8x384xf32>
    %152 = vector.shape_cast %151 : vector<1x8x384xf32> to vector<8x384xf32>
    %c0_69 = arith.constant 0 : index
    %c0_70 = arith.constant 0 : index
    %153 = vector.load %arg7[%c0_69, %c0_70] : memref<128x384xf32, #tpu.memory_space<vmem>>, vector<128x384xf32>
    %cst_71 = arith.constant dense<0.000000e+00> : vector<8x384xf32>
    %154 = tpu.matmul %149, %153, %cst_71 {dimension_numbers = #tpu.dot_dimension_numbers<[1], [0], [0], [1], [0, 0, 1, 1], [], []>} : vector<8x128xf32>, vector<128x384xf32>, vector<8x384xf32> -> vector<8x384xf32>
    %155 = vector.extract_strided_slice %152 {offsets = [0, 0], sizes = [8, 128], strides = [1, 1]} : vector<8x384xf32> to vector<8x128xf32>
    %156 = vector.extract_strided_slice %154 {offsets = [0, 0], sizes = [8, 128], strides = [1, 1]} : vector<8x384xf32> to vector<8x128xf32>
    %157 = arith.addf %155, %156 : vector<8x128xf32>
    %158 = arith.negf %157 : vector<8x128xf32>
    %159 = math.exp %158 : vector<8x128xf32>
    %cst_72 = arith.constant 1.000000e+00 : f32
    %160 = vector.broadcast %cst_72 : f32 to vector<8x128xf32>
    %161 = arith.addf %160, %159 : vector<8x128xf32>
    %162 = arith.divf %160, %161 : vector<8x128xf32>
    %163 = vector.extract_strided_slice %152 {offsets = [0, 128], sizes = [8, 128], strides = [1, 1]} : vector<8x384xf32> to vector<8x128xf32>
    %164 = vector.extract_strided_slice %154 {offsets = [0, 128], sizes = [8, 128], strides = [1, 1]} : vector<8x384xf32> to vector<8x128xf32>
    %165 = arith.addf %163, %164 : vector<8x128xf32>
    %166 = arith.negf %165 : vector<8x128xf32>
    %167 = math.exp %166 : vector<8x128xf32>
    %cst_73 = arith.constant 1.000000e+00 : f32
    %168 = vector.broadcast %cst_73 : f32 to vector<8x128xf32>
    %169 = arith.addf %168, %167 : vector<8x128xf32>
    %170 = arith.divf %168, %169 : vector<8x128xf32>
    %171 = vector.extract_strided_slice %152 {offsets = [0, 256], sizes = [8, 128], strides = [1, 1]} : vector<8x384xf32> to vector<8x128xf32>
    %172 = vector.extract_strided_slice %154 {offsets = [0, 256], sizes = [8, 128], strides = [1, 1]} : vector<8x384xf32> to vector<8x128xf32>
    %c0_74 = arith.constant 0 : index
    %c0_75 = arith.constant 0 : index
    %173 = vector.load %arg8[%c0_74, %c0_75] : memref<1x128xf32, #tpu.memory_space<vmem>>, vector<1x128xf32>
    %174 = vector.broadcast %173 : vector<1x128xf32> to vector<8x128xf32>
    %175 = arith.addf %172, %174 : vector<8x128xf32>
    %176 = arith.mulf %162, %175 : vector<8x128xf32>
    %177 = arith.addf %171, %176 : vector<8x128xf32>
    %178 = math.tanh %177 : vector<8x128xf32>
    %cst_76 = arith.constant 1.000000e+00 : f32
    %179 = vector.broadcast %cst_76 : f32 to vector<8x128xf32>
    %180 = arith.subf %179, %170 : vector<8x128xf32>
    %181 = arith.mulf %180, %178 : vector<8x128xf32>
    %182 = arith.mulf %170, %149 : vector<8x128xf32>
    %183 = arith.addf %181, %182 : vector<8x128xf32>
    %184 = arith.index_cast %c3_i32 : i32 to index
    %c0_77 = arith.constant 0 : index
    %c0_78 = arith.constant 0 : index
    %185 = vector.load %arg15[%184, %c0_77, %c0_78] : memref<8x8x128xf32, #tpu.memory_space<vmem>>, vector<1x8x128xf32>
    %186 = vector.shape_cast %185 : vector<1x8x128xf32> to vector<8x128xf32>
    %187 = vector.shape_cast %183 : vector<8x128xf32> to vector<1x8x128xf32>
    tpu.vector_store %arg15[%184, %c0_77, %c0_78], %187 {strides = array<i32>} : memref<8x8x128xf32, #tpu.memory_space<vmem>>, vector<1x8x128xf32>,
    %188 = arith.addi %19, %c3_i32 : i32
    %c8_i32_79 = arith.constant 8 : i32
    %189 = arith.cmpi slt, %188, %c8_i32_79 : i32
    %190 = arith.extui %189 : i1 to i32
    %c0_i32_80 = arith.constant 0 : i32
    %191 = arith.cmpi ne, %190, %c0_i32_80 : i32
    scf.if %191 {
      %c0_159 = arith.constant 0 : index
      %c0_160 = arith.constant 0 : index
      %376 = vector.load %arg13[%c0_159, %c0_160] : memref<8x128xf32, #tpu.memory_space<vmem>>, vector<8x128xf32>
      tpu.vector_store %arg13[%c0_159, %c0_160], %183 {strides = array<i32>} : memref<8x128xf32, #tpu.memory_space<vmem>>, vector<8x128xf32>,
    } else {
    }
    %c4_i32 = arith.constant 4 : i32
    %c0_81 = arith.constant 0 : index
    %c0_82 = arith.constant 0 : index
    %192 = vector.load %arg13[%c0_81, %c0_82] : memref<8x128xf32, #tpu.memory_space<vmem>>, vector<8x128xf32>
    %193 = arith.index_cast %c4_i32 : i32 to index
    %c0_83 = arith.constant 0 : index
    %c0_84 = arith.constant 0 : index
    %194 = vector.load %arg14[%193, %c0_83, %c0_84] : memref<8x8x384xf32, #tpu.memory_space<vmem>>, vector<1x8x384xf32>
    %195 = vector.shape_cast %194 : vector<1x8x384xf32> to vector<8x384xf32>
    %c0_85 = arith.constant 0 : index
    %c0_86 = arith.constant 0 : index
    %196 = vector.load %arg7[%c0_85, %c0_86] : memref<128x384xf32, #tpu.memory_space<vmem>>, vector<128x384xf32>
    %cst_87 = arith.constant dense<0.000000e+00> : vector<8x384xf32>
    %197 = tpu.matmul %192, %196, %cst_87 {dimension_numbers = #tpu.dot_dimension_numbers<[1], [0], [0], [1], [0, 0, 1, 1], [], []>} : vector<8x128xf32>, vector<128x384xf32>, vector<8x384xf32> -> vector<8x384xf32>
    %198 = vector.extract_strided_slice %195 {offsets = [0, 0], sizes = [8, 128], strides = [1, 1]} : vector<8x384xf32> to vector<8x128xf32>
    %199 = vector.extract_strided_slice %197 {offsets = [0, 0], sizes = [8, 128], strides = [1, 1]} : vector<8x384xf32> to vector<8x128xf32>
    %200 = arith.addf %198, %199 : vector<8x128xf32>
    %201 = arith.negf %200 : vector<8x128xf32>
    %202 = math.exp %201 : vector<8x128xf32>
    %cst_88 = arith.constant 1.000000e+00 : f32
    %203 = vector.broadcast %cst_88 : f32 to vector<8x128xf32>
    %204 = arith.addf %203, %202 : vector<8x128xf32>
    %205 = arith.divf %203, %204 : vector<8x128xf32>
    %206 = vector.extract_strided_slice %195 {offsets = [0, 128], sizes = [8, 128], strides = [1, 1]} : vector<8x384xf32> to vector<8x128xf32>
    %207 = vector.extract_strided_slice %197 {offsets = [0, 128], sizes = [8, 128], strides = [1, 1]} : vector<8x384xf32> to vector<8x128xf32>
    %208 = arith.addf %206, %207 : vector<8x128xf32>
    %209 = arith.negf %208 : vector<8x128xf32>
    %210 = math.exp %209 : vector<8x128xf32>
    %cst_89 = arith.constant 1.000000e+00 : f32
    %211 = vector.broadcast %cst_89 : f32 to vector<8x128xf32>
    %212 = arith.addf %211, %210 : vector<8x128xf32>
    %213 = arith.divf %211, %212 : vector<8x128xf32>
    %214 = vector.extract_strided_slice %195 {offsets = [0, 256], sizes = [8, 128], strides = [1, 1]} : vector<8x384xf32> to vector<8x128xf32>
    %215 = vector.extract_strided_slice %197 {offsets = [0, 256], sizes = [8, 128], strides = [1, 1]} : vector<8x384xf32> to vector<8x128xf32>
    %c0_90 = arith.constant 0 : index
    %c0_91 = arith.constant 0 : index
    %216 = vector.load %arg8[%c0_90, %c0_91] : memref<1x128xf32, #tpu.memory_space<vmem>>, vector<1x128xf32>
    %217 = vector.broadcast %216 : vector<1x128xf32> to vector<8x128xf32>
    %218 = arith.addf %215, %217 : vector<8x128xf32>
    %219 = arith.mulf %205, %218 : vector<8x128xf32>
    %220 = arith.addf %214, %219 : vector<8x128xf32>
    %221 = math.tanh %220 : vector<8x128xf32>
    %cst_92 = arith.constant 1.000000e+00 : f32
    %222 = vector.broadcast %cst_92 : f32 to vector<8x128xf32>
    %223 = arith.subf %222, %213 : vector<8x128xf32>
    %224 = arith.mulf %223, %221 : vector<8x128xf32>
    %225 = arith.mulf %213, %192 : vector<8x128xf32>
    %226 = arith.addf %224, %225 : vector<8x128xf32>
    %227 = arith.index_cast %c4_i32 : i32 to index
    %c0_93 = arith.constant 0 : index
    %c0_94 = arith.constant 0 : index
    %228 = vector.load %arg15[%227, %c0_93, %c0_94] : memref<8x8x128xf32, #tpu.memory_space<vmem>>, vector<1x8x128xf32>
    %229 = vector.shape_cast %228 : vector<1x8x128xf32> to vector<8x128xf32>
    %230 = vector.shape_cast %226 : vector<8x128xf32> to vector<1x8x128xf32>
    tpu.vector_store %arg15[%227, %c0_93, %c0_94], %230 {strides = array<i32>} : memref<8x8x128xf32, #tpu.memory_space<vmem>>, vector<1x8x128xf32>,
    %231 = arith.addi %19, %c4_i32 : i32
    %c8_i32_95 = arith.constant 8 : i32
    %232 = arith.cmpi slt, %231, %c8_i32_95 : i32
    %233 = arith.extui %232 : i1 to i32
    %c0_i32_96 = arith.constant 0 : i32
    %234 = arith.cmpi ne, %233, %c0_i32_96 : i32
    scf.if %234 {
      %c0_159 = arith.constant 0 : index
      %c0_160 = arith.constant 0 : index
      %376 = vector.load %arg13[%c0_159, %c0_160] : memref<8x128xf32, #tpu.memory_space<vmem>>, vector<8x128xf32>
      tpu.vector_store %arg13[%c0_159, %c0_160], %226 {strides = array<i32>} : memref<8x128xf32, #tpu.memory_space<vmem>>, vector<8x128xf32>,
    } else {
    }
    %c5_i32 = arith.constant 5 : i32
    %c0_97 = arith.constant 0 : index
    %c0_98 = arith.constant 0 : index
    %235 = vector.load %arg13[%c0_97, %c0_98] : memref<8x128xf32, #tpu.memory_space<vmem>>, vector<8x128xf32>
    %236 = arith.index_cast %c5_i32 : i32 to index
    %c0_99 = arith.constant 0 : index
    %c0_100 = arith.constant 0 : index
    %237 = vector.load %arg14[%236, %c0_99, %c0_100] : memref<8x8x384xf32, #tpu.memory_space<vmem>>, vector<1x8x384xf32>
    %238 = vector.shape_cast %237 : vector<1x8x384xf32> to vector<8x384xf32>
    %c0_101 = arith.constant 0 : index
    %c0_102 = arith.constant 0 : index
    %239 = vector.load %arg7[%c0_101, %c0_102] : memref<128x384xf32, #tpu.memory_space<vmem>>, vector<128x384xf32>
    %cst_103 = arith.constant dense<0.000000e+00> : vector<8x384xf32>
    %240 = tpu.matmul %235, %239, %cst_103 {dimension_numbers = #tpu.dot_dimension_numbers<[1], [0], [0], [1], [0, 0, 1, 1], [], []>} : vector<8x128xf32>, vector<128x384xf32>, vector<8x384xf32> -> vector<8x384xf32>
    %241 = vector.extract_strided_slice %238 {offsets = [0, 0], sizes = [8, 128], strides = [1, 1]} : vector<8x384xf32> to vector<8x128xf32>
    %242 = vector.extract_strided_slice %240 {offsets = [0, 0], sizes = [8, 128], strides = [1, 1]} : vector<8x384xf32> to vector<8x128xf32>
    %243 = arith.addf %241, %242 : vector<8x128xf32>
    %244 = arith.negf %243 : vector<8x128xf32>
    %245 = math.exp %244 : vector<8x128xf32>
    %cst_104 = arith.constant 1.000000e+00 : f32
    %246 = vector.broadcast %cst_104 : f32 to vector<8x128xf32>
    %247 = arith.addf %246, %245 : vector<8x128xf32>
    %248 = arith.divf %246, %247 : vector<8x128xf32>
    %249 = vector.extract_strided_slice %238 {offsets = [0, 128], sizes = [8, 128], strides = [1, 1]} : vector<8x384xf32> to vector<8x128xf32>
    %250 = vector.extract_strided_slice %240 {offsets = [0, 128], sizes = [8, 128], strides = [1, 1]} : vector<8x384xf32> to vector<8x128xf32>
    %251 = arith.addf %249, %250 : vector<8x128xf32>
    %252 = arith.negf %251 : vector<8x128xf32>
    %253 = math.exp %252 : vector<8x128xf32>
    %cst_105 = arith.constant 1.000000e+00 : f32
    %254 = vector.broadcast %cst_105 : f32 to vector<8x128xf32>
    %255 = arith.addf %254, %253 : vector<8x128xf32>
    %256 = arith.divf %254, %255 : vector<8x128xf32>
    %257 = vector.extract_strided_slice %238 {offsets = [0, 256], sizes = [8, 128], strides = [1, 1]} : vector<8x384xf32> to vector<8x128xf32>
    %258 = vector.extract_strided_slice %240 {offsets = [0, 256], sizes = [8, 128], strides = [1, 1]} : vector<8x384xf32> to vector<8x128xf32>
    %c0_106 = arith.constant 0 : index
    %c0_107 = arith.constant 0 : index
    %259 = vector.load %arg8[%c0_106, %c0_107] : memref<1x128xf32, #tpu.memory_space<vmem>>, vector<1x128xf32>
    %260 = vector.broadcast %259 : vector<1x128xf32> to vector<8x128xf32>
    %261 = arith.addf %258, %260 : vector<8x128xf32>
    %262 = arith.mulf %248, %261 : vector<8x128xf32>
    %263 = arith.addf %257, %262 : vector<8x128xf32>
    %264 = math.tanh %263 : vector<8x128xf32>
    %cst_108 = arith.constant 1.000000e+00 : f32
    %265 = vector.broadcast %cst_108 : f32 to vector<8x128xf32>
    %266 = arith.subf %265, %256 : vector<8x128xf32>
    %267 = arith.mulf %266, %264 : vector<8x128xf32>
    %268 = arith.mulf %256, %235 : vector<8x128xf32>
    %269 = arith.addf %267, %268 : vector<8x128xf32>
    %270 = arith.index_cast %c5_i32 : i32 to index
    %c0_109 = arith.constant 0 : index
    %c0_110 = arith.constant 0 : index
    %271 = vector.load %arg15[%270, %c0_109, %c0_110] : memref<8x8x128xf32, #tpu.memory_space<vmem>>, vector<1x8x128xf32>
    %272 = vector.shape_cast %271 : vector<1x8x128xf32> to vector<8x128xf32>
    %273 = vector.shape_cast %269 : vector<8x128xf32> to vector<1x8x128xf32>
    tpu.vector_store %arg15[%270, %c0_109, %c0_110], %273 {strides = array<i32>} : memref<8x8x128xf32, #tpu.memory_space<vmem>>, vector<1x8x128xf32>,
    %274 = arith.addi %19, %c5_i32 : i32
    %c8_i32_111 = arith.constant 8 : i32
    %275 = arith.cmpi slt, %274, %c8_i32_111 : i32
    %276 = arith.extui %275 : i1 to i32
    %c0_i32_112 = arith.constant 0 : i32
    %277 = arith.cmpi ne, %276, %c0_i32_112 : i32
    scf.if %277 {
      %c0_159 = arith.constant 0 : index
      %c0_160 = arith.constant 0 : index
      %376 = vector.load %arg13[%c0_159, %c0_160] : memref<8x128xf32, #tpu.memory_space<vmem>>, vector<8x128xf32>
      tpu.vector_store %arg13[%c0_159, %c0_160], %269 {strides = array<i32>} : memref<8x128xf32, #tpu.memory_space<vmem>>, vector<8x128xf32>,
    } else {
    }
    %c6_i32 = arith.constant 6 : i32
    %c0_113 = arith.constant 0 : index
    %c0_114 = arith.constant 0 : index
    %278 = vector.load %arg13[%c0_113, %c0_114] : memref<8x128xf32, #tpu.memory_space<vmem>>, vector<8x128xf32>
    %279 = arith.index_cast %c6_i32 : i32 to index
    %c0_115 = arith.constant 0 : index
    %c0_116 = arith.constant 0 : index
    %280 = vector.load %arg14[%279, %c0_115, %c0_116] : memref<8x8x384xf32, #tpu.memory_space<vmem>>, vector<1x8x384xf32>
    %281 = vector.shape_cast %280 : vector<1x8x384xf32> to vector<8x384xf32>
    %c0_117 = arith.constant 0 : index
    %c0_118 = arith.constant 0 : index
    %282 = vector.load %arg7[%c0_117, %c0_118] : memref<128x384xf32, #tpu.memory_space<vmem>>, vector<128x384xf32>
    %cst_119 = arith.constant dense<0.000000e+00> : vector<8x384xf32>
    %283 = tpu.matmul %278, %282, %cst_119 {dimension_numbers = #tpu.dot_dimension_numbers<[1], [0], [0], [1], [0, 0, 1, 1], [], []>} : vector<8x128xf32>, vector<128x384xf32>, vector<8x384xf32> -> vector<8x384xf32>
    %284 = vector.extract_strided_slice %281 {offsets = [0, 0], sizes = [8, 128], strides = [1, 1]} : vector<8x384xf32> to vector<8x128xf32>
    %285 = vector.extract_strided_slice %283 {offsets = [0, 0], sizes = [8, 128], strides = [1, 1]} : vector<8x384xf32> to vector<8x128xf32>
    %286 = arith.addf %284, %285 : vector<8x128xf32>
    %287 = arith.negf %286 : vector<8x128xf32>
    %288 = math.exp %287 : vector<8x128xf32>
    %cst_120 = arith.constant 1.000000e+00 : f32
    %289 = vector.broadcast %cst_120 : f32 to vector<8x128xf32>
    %290 = arith.addf %289, %288 : vector<8x128xf32>
    %291 = arith.divf %289, %290 : vector<8x128xf32>
    %292 = vector.extract_strided_slice %281 {offsets = [0, 128], sizes = [8, 128], strides = [1, 1]} : vector<8x384xf32> to vector<8x128xf32>
    %293 = vector.extract_strided_slice %283 {offsets = [0, 128], sizes = [8, 128], strides = [1, 1]} : vector<8x384xf32> to vector<8x128xf32>
    %294 = arith.addf %292, %293 : vector<8x128xf32>
    %295 = arith.negf %294 : vector<8x128xf32>
    %296 = math.exp %295 : vector<8x128xf32>
    %cst_121 = arith.constant 1.000000e+00 : f32
    %297 = vector.broadcast %cst_121 : f32 to vector<8x128xf32>
    %298 = arith.addf %297, %296 : vector<8x128xf32>
    %299 = arith.divf %297, %298 : vector<8x128xf32>
    %300 = vector.extract_strided_slice %281 {offsets = [0, 256], sizes = [8, 128], strides = [1, 1]} : vector<8x384xf32> to vector<8x128xf32>
    %301 = vector.extract_strided_slice %283 {offsets = [0, 256], sizes = [8, 128], strides = [1, 1]} : vector<8x384xf32> to vector<8x128xf32>
    %c0_122 = arith.constant 0 : index
    %c0_123 = arith.constant 0 : index
    %302 = vector.load %arg8[%c0_122, %c0_123] : memref<1x128xf32, #tpu.memory_space<vmem>>, vector<1x128xf32>
    %303 = vector.broadcast %302 : vector<1x128xf32> to vector<8x128xf32>
    %304 = arith.addf %301, %303 : vector<8x128xf32>
    %305 = arith.mulf %291, %304 : vector<8x128xf32>
    %306 = arith.addf %300, %305 : vector<8x128xf32>
    %307 = math.tanh %306 : vector<8x128xf32>
    %cst_124 = arith.constant 1.000000e+00 : f32
    %308 = vector.broadcast %cst_124 : f32 to vector<8x128xf32>
    %309 = arith.subf %308, %299 : vector<8x128xf32>
    %310 = arith.mulf %309, %307 : vector<8x128xf32>
    %311 = arith.mulf %299, %278 : vector<8x128xf32>
    %312 = arith.addf %310, %311 : vector<8x128xf32>
    %313 = arith.index_cast %c6_i32 : i32 to index
    %c0_125 = arith.constant 0 : index
    %c0_126 = arith.constant 0 : index
    %314 = vector.load %arg15[%313, %c0_125, %c0_126] : memref<8x8x128xf32, #tpu.memory_space<vmem>>, vector<1x8x128xf32>
    %315 = vector.shape_cast %314 : vector<1x8x128xf32> to vector<8x128xf32>
    %316 = vector.shape_cast %312 : vector<8x128xf32> to vector<1x8x128xf32>
    tpu.vector_store %arg15[%313, %c0_125, %c0_126], %316 {strides = array<i32>} : memref<8x8x128xf32, #tpu.memory_space<vmem>>, vector<1x8x128xf32>,
    %317 = arith.addi %19, %c6_i32 : i32
    %c8_i32_127 = arith.constant 8 : i32
    %318 = arith.cmpi slt, %317, %c8_i32_127 : i32
    %319 = arith.extui %318 : i1 to i32
    %c0_i32_128 = arith.constant 0 : i32
    %320 = arith.cmpi ne, %319, %c0_i32_128 : i32
    scf.if %320 {
      %c0_159 = arith.constant 0 : index
      %c0_160 = arith.constant 0 : index
      %376 = vector.load %arg13[%c0_159, %c0_160] : memref<8x128xf32, #tpu.memory_space<vmem>>, vector<8x128xf32>
      tpu.vector_store %arg13[%c0_159, %c0_160], %312 {strides = array<i32>} : memref<8x128xf32, #tpu.memory_space<vmem>>, vector<8x128xf32>,
    } else {
    }
    %c7_i32 = arith.constant 7 : i32
    %c0_129 = arith.constant 0 : index
    %c0_130 = arith.constant 0 : index
    %321 = vector.load %arg13[%c0_129, %c0_130] : memref<8x128xf32, #tpu.memory_space<vmem>>, vector<8x128xf32>
    %322 = arith.index_cast %c7_i32 : i32 to index
    %c0_131 = arith.constant 0 : index
    %c0_132 = arith.constant 0 : index
    %323 = vector.load %arg14[%322, %c0_131, %c0_132] : memref<8x8x384xf32, #tpu.memory_space<vmem>>, vector<1x8x384xf32>
    %324 = vector.shape_cast %323 : vector<1x8x384xf32> to vector<8x384xf32>
    %c0_133 = arith.constant 0 : index
    %c0_134 = arith.constant 0 : index
    %325 = vector.load %arg7[%c0_133, %c0_134] : memref<128x384xf32, #tpu.memory_space<vmem>>, vector<128x384xf32>
    %cst_135 = arith.constant dense<0.000000e+00> : vector<8x384xf32>
    %326 = tpu.matmul %321, %325, %cst_135 {dimension_numbers = #tpu.dot_dimension_numbers<[1], [0], [0], [1], [0, 0, 1, 1], [], []>} : vector<8x128xf32>, vector<128x384xf32>, vector<8x384xf32> -> vector<8x384xf32>
    %327 = vector.extract_strided_slice %324 {offsets = [0, 0], sizes = [8, 128], strides = [1, 1]} : vector<8x384xf32> to vector<8x128xf32>
    %328 = vector.extract_strided_slice %326 {offsets = [0, 0], sizes = [8, 128], strides = [1, 1]} : vector<8x384xf32> to vector<8x128xf32>
    %329 = arith.addf %327, %328 : vector<8x128xf32>
    %330 = arith.negf %329 : vector<8x128xf32>
    %331 = math.exp %330 : vector<8x128xf32>
    %cst_136 = arith.constant 1.000000e+00 : f32
    %332 = vector.broadcast %cst_136 : f32 to vector<8x128xf32>
    %333 = arith.addf %332, %331 : vector<8x128xf32>
    %334 = arith.divf %332, %333 : vector<8x128xf32>
    %335 = vector.extract_strided_slice %324 {offsets = [0, 128], sizes = [8, 128], strides = [1, 1]} : vector<8x384xf32> to vector<8x128xf32>
    %336 = vector.extract_strided_slice %326 {offsets = [0, 128], sizes = [8, 128], strides = [1, 1]} : vector<8x384xf32> to vector<8x128xf32>
    %337 = arith.addf %335, %336 : vector<8x128xf32>
    %338 = arith.negf %337 : vector<8x128xf32>
    %339 = math.exp %338 : vector<8x128xf32>
    %cst_137 = arith.constant 1.000000e+00 : f32
    %340 = vector.broadcast %cst_137 : f32 to vector<8x128xf32>
    %341 = arith.addf %340, %339 : vector<8x128xf32>
    %342 = arith.divf %340, %341 : vector<8x128xf32>
    %343 = vector.extract_strided_slice %324 {offsets = [0, 256], sizes = [8, 128], strides = [1, 1]} : vector<8x384xf32> to vector<8x128xf32>
    %344 = vector.extract_strided_slice %326 {offsets = [0, 256], sizes = [8, 128], strides = [1, 1]} : vector<8x384xf32> to vector<8x128xf32>
    %c0_138 = arith.constant 0 : index
    %c0_139 = arith.constant 0 : index
    %345 = vector.load %arg8[%c0_138, %c0_139] : memref<1x128xf32, #tpu.memory_space<vmem>>, vector<1x128xf32>
    %346 = vector.broadcast %345 : vector<1x128xf32> to vector<8x128xf32>
    %347 = arith.addf %344, %346 : vector<8x128xf32>
    %348 = arith.mulf %334, %347 : vector<8x128xf32>
    %349 = arith.addf %343, %348 : vector<8x128xf32>
    %350 = math.tanh %349 : vector<8x128xf32>
    %cst_140 = arith.constant 1.000000e+00 : f32
    %351 = vector.broadcast %cst_140 : f32 to vector<8x128xf32>
    %352 = arith.subf %351, %342 : vector<8x128xf32>
    %353 = arith.mulf %352, %350 : vector<8x128xf32>
    %354 = arith.mulf %342, %321 : vector<8x128xf32>
    %355 = arith.addf %353, %354 : vector<8x128xf32>
    %356 = arith.index_cast %c7_i32 : i32 to index
    %c0_141 = arith.constant 0 : index
    %c0_142 = arith.constant 0 : index
    %357 = vector.load %arg15[%356, %c0_141, %c0_142] : memref<8x8x128xf32, #tpu.memory_space<vmem>>, vector<1x8x128xf32>
    %358 = vector.shape_cast %357 : vector<1x8x128xf32> to vector<8x128xf32>
    %359 = vector.shape_cast %355 : vector<8x128xf32> to vector<1x8x128xf32>
    tpu.vector_store %arg15[%356, %c0_141, %c0_142], %359 {strides = array<i32>} : memref<8x8x128xf32, #tpu.memory_space<vmem>>, vector<1x8x128xf32>,
    %360 = arith.addi %19, %c7_i32 : i32
    %c8_i32_143 = arith.constant 8 : i32
    %361 = arith.cmpi slt, %360, %c8_i32_143 : i32
    %362 = arith.extui %361 : i1 to i32
    %c0_i32_144 = arith.constant 0 : i32
    %363 = arith.cmpi ne, %362, %c0_i32_144 : i32
    scf.if %363 {
      %c0_159 = arith.constant 0 : index
      %c0_160 = arith.constant 0 : index
      %376 = vector.load %arg13[%c0_159, %c0_160] : memref<8x128xf32, #tpu.memory_space<vmem>>, vector<8x128xf32>
      tpu.vector_store %arg13[%c0_159, %c0_160], %355 {strides = array<i32>} : memref<8x128xf32, #tpu.memory_space<vmem>>, vector<8x128xf32>,
    } else {
    }
    %c8_i32_145 = arith.constant 8 : i32
    %c0_146 = arith.constant 0 : index
    %c0_147 = arith.constant 0 : index
    %c0_148 = arith.constant 0 : index
    %364 = vector.load %arg15[%c0_146, %c0_147, %c0_148] : memref<8x8x128xf32, #tpu.memory_space<vmem>>, vector<8x8x128xf32>
    %365 = vector.shape_cast %364 : vector<8x8x128xf32> to vector<64x128xf32>
    %c0_149 = arith.constant 0 : index
    %c0_150 = arith.constant 0 : index
    %366 = vector.load %arg9[%c0_149, %c0_150] : memref<128x128xf32, #tpu.memory_space<vmem>>, vector<128x128xf32>
    %cst_151 = arith.constant dense<0.000000e+00> : vector<64x128xf32>
    %367 = tpu.matmul %365, %366, %cst_151 {dimension_numbers = #tpu.dot_dimension_numbers<[1], [0], [0], [1], [0, 0, 1, 1], [], []>} : vector<64x128xf32>, vector<128x128xf32>, vector<64x128xf32> -> vector<64x128xf32>
    %c0_152 = arith.constant 0 : index
    %c0_153 = arith.constant 0 : index
    %368 = vector.load %arg10[%c0_152, %c0_153] : memref<1x128xf32, #tpu.memory_space<vmem>>, vector<1x128xf32>
    %369 = vector.broadcast %368 : vector<1x128xf32> to vector<64x128xf32>
    %370 = arith.addf %367, %369 : vector<64x128xf32>
    %371 = vector.shape_cast %370 : vector<64x128xf32> to vector<8x8x128xf32>
    %c0_154 = arith.constant 0 : index
    %c0_155 = arith.constant 0 : index
    %c0_156 = arith.constant 0 : index
    %372 = vector.load %arg11[%c0_154, %c0_155, %c0_156] : memref<8x8x128xf32, #tpu.memory_space<vmem>>, vector<8x8x128xf32>
    tpu.vector_store %arg11[%c0_154, %c0_155, %c0_156], %371 {strides = array<i32>} : memref<8x8x128xf32, #tpu.memory_space<vmem>>, vector<8x8x128xf32>,
    %c0_i32_157 = arith.constant 0 : i32
    %373 = arith.cmpi eq, %arg0, %c0_i32_157 : i32
    %374 = arith.extui %373 : i1 to i32
    %c0_i32_158 = arith.constant 0 : i32
    %375 = arith.cmpi ne, %374, %c0_i32_158 : i32
    scf.if %375 {
      %c0_159 = arith.constant 0 : index
      %c0_160 = arith.constant 0 : index
      %376 = vector.load %arg13[%c0_159, %c0_160] : memref<8x128xf32, #tpu.memory_space<vmem>>, vector<8x128xf32>
      %c0_161 = arith.constant 0 : index
      %c0_162 = arith.constant 0 : index
      %377 = vector.load %arg12[%c0_161, %c0_162] : memref<8x128xf32, #tpu.memory_space<vmem>>, vector<8x128xf32>
      tpu.vector_store %arg12[%c0_161, %c0_162], %376 {strides = array<i32>} : memref<8x128xf32, #tpu.memory_space<vmem>>, vector<8x128xf32>,
    } else {
    }
    return
  }
  func.func @transform_0(%arg0: i32) -> (i32, i32, i32) {
    %c0_i32 = arith.constant 0 : i32
    %c0_i32_0 = arith.constant 0 : i32
    %c0_i32_1 = arith.constant 0 : i32
    return %arg0, %c0_i32, %c0_i32_0 : i32, i32, i32
  }
  func.func @transform_1(%arg0: i32) -> (i32, i32) {
    %c0_i32 = arith.constant 0 : i32
    %c0_i32_0 = arith.constant 0 : i32
    %c0_i32_1 = arith.constant 0 : i32
    return %c0_i32, %c0_i32_0 : i32, i32
  }
  func.func @transform_2(%arg0: i32) -> (i32, i32) {
    %c0_i32 = arith.constant 0 : i32
    %c0_i32_0 = arith.constant 0 : i32
    %c0_i32_1 = arith.constant 0 : i32
    return %c0_i32, %c0_i32_0 : i32, i32
  }
  func.func @transform_3(%arg0: i32) -> (i32, i32) {
    %c0_i32 = arith.constant 0 : i32
    %c0_i32_0 = arith.constant 0 : i32
    %c0_i32_1 = arith.constant 0 : i32
    return %c0_i32, %c0_i32_0 : i32, i32
  }
  func.func @transform_4(%arg0: i32) -> (i32, i32) {
    %c0_i32 = arith.constant 0 : i32
    %c0_i32_0 = arith.constant 0 : i32
    %c0_i32_1 = arith.constant 0 : i32
    return %c0_i32, %c0_i32_0 : i32, i32
  }
  func.func @transform_5(%arg0: i32) -> (i32, i32) {
    %c0_i32 = arith.constant 0 : i32
    %c0_i32_0 = arith.constant 0 : i32
    %c0_i32_1 = arith.constant 0 : i32
    return %c0_i32, %c0_i32_0 : i32, i32
  }
  func.func @transform_6(%arg0: i32) -> (i32, i32) {
    %c0_i32 = arith.constant 0 : i32
    %c0_i32_0 = arith.constant 0 : i32
    %c0_i32_1 = arith.constant 0 : i32
    return %c0_i32, %c0_i32_0 : i32, i32
  }
  func.func @transform_7(%arg0: i32) -> (i32, i32) {
    %c0_i32 = arith.constant 0 : i32
    %c0_i32_0 = arith.constant 0 : i32
    %c0_i32_1 = arith.constant 0 : i32
    return %c0_i32, %c0_i32_0 : i32, i32
  }
  func.func @transform_8(%arg0: i32) -> (i32, i32) {
    %c0_i32 = arith.constant 0 : i32
    %c0_i32_0 = arith.constant 0 : i32
    %c0_i32_1 = arith.constant 0 : i32
    return %c0_i32, %c0_i32_0 : i32, i32
  }
  func.func @transform_9(%arg0: i32) -> (i32, i32) {
    %c0_i32 = arith.constant 0 : i32
    %c0_i32_0 = arith.constant 0 : i32
    %c0_i32_1 = arith.constant 0 : i32
    return %c0_i32, %c0_i32_0 : i32, i32
  }
  func.func @transform_10(%arg0: i32) -> (i32, i32, i32) {
    %c0_i32 = arith.constant 0 : i32
    %c0_i32_0 = arith.constant 0 : i32
    %c0_i32_1 = arith.constant 0 : i32
    return %arg0, %c0_i32, %c0_i32_0 : i32, i32, i32
  }
  func.func @transform_11(%arg0: i32) -> (i32, i32) {
    %c0_i32 = arith.constant 0 : i32
    %c0_i32_0 = arith.constant 0 : i32
    %c0_i32_1 = arith.constant 0 : i32
    return %c0_i32, %c0_i32_0 : i32, i32
  }
}

</mosaic_0001>

<llo_original>
// kernel: tpu_custom_call.1
$region0: #{tpu_custom_call.1}
  #allocation0 [shape = 'u32[]', space=smem, size = 0x4, offset = 0x4, fixed_abs, tag = 'smem constant byte address 0x4 - core index']
  #allocation1 [shape = 'u32[144,128]{1,0:T(1,128)}', space=vmem, size = 0x12000, scoped, tag = 'internal scratch']
  #allocation2 [shape = 'f32[8,128]{1,0:T(8,128)}', space=vmem, size = 0x1000, scoped, tag = 'scratch operand']
  #allocation3 [shape = 'f32[8,8,384]{2,1,0:T(8,128)}', space=vmem, size = 0x18000, scoped, tag = 'scratch operand']
  #allocation4 [shape = 'f32[8,8,128]{2,1,0:T(8,128)}', space=vmem, size = 0x8000, scoped, tag = 'scratch operand']
  %s0 = inlined_call_operand.hbm [shape: f32[8,8,128], index: 0, kind: input, shape index: {}]
  %s1 = inlined_call_operand.hbm [shape: f32[8,128], index: 1, kind: input, shape index: {}]
  %s2 = inlined_call_operand.hbm [shape: f32[128,128], index: 2, kind: input, shape index: {}]
  %s3 = inlined_call_operand.vmem [shape: f32[1,128], index: 3, kind: input, shape index: {}]
  %s4 = inlined_call_operand.hbm [shape: f32[128,384], index: 4, kind: input, shape index: {}]
  %s5 = inlined_call_operand.vmem [shape: f32[1,384], index: 5, kind: input, shape index: {}]
  %s6 = inlined_call_operand.hbm [shape: f32[128,384], index: 6, kind: input, shape index: {}]
  %s7 = inlined_call_operand.vmem [shape: f32[1,128], index: 7, kind: input, shape index: {}]
  %s8 = inlined_call_operand.hbm [shape: f32[128,128], index: 8, kind: input, shape index: {}]
  %s9 = inlined_call_operand.vmem [shape: f32[1,128], index: 9, kind: input, shape index: {}]
  %s10 = inlined_call_operand.hbm [shape: f32[8,8,128], index: 10, kind: output, shape index: {0}]
  %s11 = inlined_call_operand.hbm [shape: f32[8,128], index: 11, kind: output, shape index: {1}]
  %12 = xla_tuple %s10, %s11
  %s13 = sld [smem:[#allocation0]]
  $region122: #{tpu_custom_call.1} parent=0
    _
  %s15 = ssub.s32 1, %s13
  %s16 = scalar_select 0, %s15, %s13
  $region1: #{tpu_custom_call.1} parent=0
    #allocation5 [shape = 'u8[32768]{0}', space=vmem, size = 0x8000, scoped, tag = 'input window, operand 0, single buffered']
    #allocation6 [shape = 's32[1]{0}', space=sflag, size = 0x4, scoped, tag = 'scoped memory for tpu_custom_call.1']
    #allocation7 [shape = 's32[1]{0}', space=sflag, size = 0x4, scoped, tag = 'scoped memory for tpu_custom_call.1']
    #allocation8 [shape = 'u8[4096]{0}', space=vmem, size = 0x1000, scoped, tag = 'input window, operand 1, single buffered']
    #allocation9 [shape = 's32[1]{0}', space=sflag, size = 0x4, scoped, tag = 'scoped memory for tpu_custom_call.1']
    #allocation10 [shape = 'u8[65536]{0}', space=vmem, size = 0x10000, scoped, tag = 'input window, operand 2, single buffered']
    #allocation11 [shape = 'u8[196608]{0}', space=vmem, size = 0x30000, scoped, tag = 'input window, operand 4, single buffered']
    #allocation12 [shape = 's32[1]{0}', space=sflag, size = 0x4, scoped, tag = 'scoped memory for tpu_custom_call.1']
    #allocation13 [shape = 'u8[196608]{0}', space=vmem, size = 0x30000, scoped, tag = 'input window, operand 6, single buffered']
    #allocation14 [shape = 'u8[65536]{0}', space=vmem, size = 0x10000, scoped, tag = 'input window, operand 8, single buffered']
    #allocation15 [shape = 's32[1]{0}', space=sflag, size = 0x4, scoped, tag = 'scoped memory for tpu_custom_call.1']
    #allocation16 [shape = 'u8[32768]{0}', space=vmem, size = 0x8000, scoped, tag = 'output window, operand 0, single buffered']
    #allocation17 [shape = 'u8[4096]{0}', space=vmem, size = 0x1000, scoped, tag = 'output window, operand 1, single buffered']
    #allocation18 [shape = 's32[1]{0}', space=sflag, size = 0x4, scoped, tag = 'scoped memory for tpu_custom_call.1']
    %17 = vsyncpa [#allocation6], 0
    %18 = vsyncpa [#allocation9], 0
    %19 = vsyncpa [#allocation12], 0
    %20 = vsyncpa [#allocation15], 0
    %21 = vsyncpa [#allocation7], 0
    %22 = vsyncpa [#allocation18], 0
    // Predicated region
    $region2: #{tpu_custom_call.1} parent=1 // pred_check
      _
    $region3: #{tpu_custom_call.1} parent=1 // pred_check_branch
      %24 = sbr.rel (0) target = $region5
    $region4: #{tpu_custom_call.1} parent=1 // pred_region
      %s26 = ssub.s32 1024, 1024
      %27 = vsyncadd [#allocation6], %s26
      %s28 = sshll.u32 [#allocation5], 4
      %s29 = int_to_ptr.vmem [resolvable:$true] %s28
      %34 = dma.hbm_to_vmem [thread:$0]  %s0, 1024, %s29, [#allocation6], 128, 128, 8
    $region5: #{tpu_custom_call.1} parent=1 // pred_fallthru
      _
    // Predicated region
    $region6: #{tpu_custom_call.1} parent=1 // pred_check
      _
    $region7: #{tpu_custom_call.1} parent=1 // pred_check_branch
      %36 = sbr.rel (0) target = $region9
    $region8: #{tpu_custom_call.1} parent=1 // pred_region
      %s38 = ssub.s32 128, 128
      %39 = vsyncadd [#allocation9], %s38
      %s41 = sshll.u32 [#allocation8], 4
      %s42 = int_to_ptr.vmem [resolvable:$true] %s41
      %44 = dma.hbm_to_vmem [thread:$0]  %s1, 128, %s42, [#allocation9]
    $region9: #{tpu_custom_call.1} parent=1 // pred_fallthru
      _
    // Predicated region
    $region10: #{tpu_custom_call.1} parent=1 // pred_check
      _
    $region11: #{tpu_custom_call.1} parent=1 // pred_check_branch
      %46 = sbr.rel (0) target = $region13
    $region12: #{tpu_custom_call.1} parent=1 // pred_region
      %s48 = ssub.s32 2048, 2048
      %49 = vsyncadd [#allocation9], %s48
      %s50 = sshll.u32 [#allocation10], 4
      %s51 = int_to_ptr.vmem [resolvable:$true] %s50
      %56 = dma.hbm_to_vmem [thread:$0]  %s2, 2048, %s51, [#allocation9], 128, 128, 8
    $region13: #{tpu_custom_call.1} parent=1 // pred_fallthru
      _
    // Predicated region
    $region14: #{tpu_custom_call.1} parent=1 // pred_check
      _
    $region15: #{tpu_custom_call.1} parent=1 // pred_check_branch
      %58 = sbr.rel (0) target = $region17
    $region16: #{tpu_custom_call.1} parent=1 // pred_region
      _
    $region17: #{tpu_custom_call.1} parent=1 // pred_fallthru
      _
    // Predicated region
    $region18: #{tpu_custom_call.1} parent=1 // pred_check
      _
    $region19: #{tpu_custom_call.1} parent=1 // pred_check_branch
      %60 = sbr.rel (0) target = $region21
    $region20: #{tpu_custom_call.1} parent=1 // pred_region
      %s62 = ssub.s32 6144, 6144
      %63 = vsyncadd [#allocation12], %s62
      %s64 = sshll.u32 [#allocation11], 4
      %s65 = int_to_ptr.vmem [resolvable:$true] %s64
      %70 = dma.hbm_to_vmem [thread:$0]  %s4, 6144, %s65, [#allocation12], 384, 384, 24
    $region21: #{tpu_custom_call.1} parent=1 // pred_fallthru
      _
    // Predicated region
    $region22: #{tpu_custom_call.1} parent=1 // pred_check
      _
    $region23: #{tpu_custom_call.1} parent=1 // pred_check_branch
      %72 = sbr.rel (0) target = $region25
    $region24: #{tpu_custom_call.1} parent=1 // pred_region
      _
    $region25: #{tpu_custom_call.1} parent=1 // pred_fallthru
      _
    // Predicated region
    $region26: #{tpu_custom_call.1} parent=1 // pred_check
      _
    $region27: #{tpu_custom_call.1} parent=1 // pred_check_branch
      %74 = sbr.rel (0) target = $region29
    $region28: #{tpu_custom_call.1} parent=1 // pred_region
      %s76 = ssub.s32 6144, 6144
      %77 = vsyncadd [#allocation12], %s76
      %s78 = sshll.u32 [#allocation13], 4
      %s79 = int_to_ptr.vmem [resolvable:$true] %s78
      %84 = dma.hbm_to_vmem [thread:$0]  %s6, 6144, %s79, [#allocation12], 384, 384, 24
    $region29: #{tpu_custom_call.1} parent=1 // pred_fallthru
      _
    // Predicated region
    $region30: #{tpu_custom_call.1} parent=1 // pred_check
      _
    $region31: #{tpu_custom_call.1} parent=1 // pred_check_branch
      %86 = sbr.rel (0) target = $region33
    $region32: #{tpu_custom_call.1} parent=1 // pred_region
      _
    $region33: #{tpu_custom_call.1} parent=1 // pred_fallthru
      _
    // Predicated region
    $region34: #{tpu_custom_call.1} parent=1 // pred_check
      _
    $region35: #{tpu_custom_call.1} parent=1 // pred_check_branch
      %88 = sbr.rel (0) target = $region37
    $region36: #{tpu_custom_call.1} parent=1 // pred_region
      %s90 = ssub.s32 2048, 2048
      %91 = vsyncadd [#allocation15], %s90
      %s92 = sshll.u32 [#allocation14], 4
      %s93 = int_to_ptr.vmem [resolvable:$true] %s92
      %98 = dma.hbm_to_vmem [thread:$0]  %s8, 2048, %s93, [#allocation15], 128, 128, 8
    $region37: #{tpu_custom_call.1} parent=1 // pred_fallthru
      _
    // Predicated region
    $region38: #{tpu_custom_call.1} parent=1 // pred_check
      _
    $region39: #{tpu_custom_call.1} parent=1 // pred_check_branch
      %100 = sbr.rel (0) target = $region41
    $region40: #{tpu_custom_call.1} parent=1 // pred_region
      _
    $region41: #{tpu_custom_call.1} parent=1 // pred_fallthru
      _
    // Predicated region
    $region42: #{tpu_custom_call.1} parent=1 // pred_check
      _
    $region43: #{tpu_custom_call.1} parent=1 // pred_check_branch
      %102 = sbr.rel (0) target = $region45
    $region44: #{tpu_custom_call.1} parent=1 // pred_region
      %103 = dma.done [#allocation6], 1024
    $region45: #{tpu_custom_call.1} parent=1 // pred_fallthru
      _
    // Predicated region
    $region46: #{tpu_custom_call.1} parent=1 // pred_check
      _
    $region47: #{tpu_custom_call.1} parent=1 // pred_check_branch
      %105 = sbr.rel (0) target = $region49
    $region48: #{tpu_custom_call.1} parent=1 // pred_region
      %106 = dma.done [#allocation9], 128
    $region49: #{tpu_custom_call.1} parent=1 // pred_fallthru
      _
    // Predicated region
    $region50: #{tpu_custom_call.1} parent=1 // pred_check
      _
    $region51: #{tpu_custom_call.1} parent=1 // pred_check_branch
      %108 = sbr.rel (0) target = $region53
    $region52: #{tpu_custom_call.1} parent=1 // pred_region
      %109 = dma.done [#allocation9], 2048
    $region53: #{tpu_custom_call.1} parent=1 // pred_fallthru
      _
    // Predicated region
    $region54: #{tpu_custom_call.1} parent=1 // pred_check
      _
    $region55: #{tpu_custom_call.1} parent=1 // pred_check_branch
      %111 = sbr.rel (0) target = $region57
    $region56: #{tpu_custom_call.1} parent=1 // pred_region
      %112 = dma.done [#allocation12], 6144
    $region57: #{tpu_custom_call.1} parent=1 // pred_fallthru
      _
    // Predicated region
    $region58: #{tpu_custom_call.1} parent=1 // pred_check
      _
    $region59: #{tpu_custom_call.1} parent=1 // pred_check_branch
      %114 = sbr.rel (0) target = $region61
    $region60: #{tpu_custom_call.1} parent=1 // pred_region
      %115 = dma.done [#allocation12], 6144
    $region61: #{tpu_custom_call.1} parent=1 // pred_fallthru
      _
    // Predicated region
    $region62: #{tpu_custom_call.1} parent=1 // pred_check
      _
    $region63: #{tpu_custom_call.1} parent=1 // pred_check_branch
      %117 = sbr.rel (0) target = $region65
    $region64: #{tpu_custom_call.1} parent=1 // pred_region
      %118 = dma.done [#allocation15], 2048
    $region65: #{tpu_custom_call.1} parent=1 // pred_fallthru
      _
    %p119 = scmp.eq.s32.totalorder 0, 0
    // Predicated region
    $region66: #{tpu_custom_call.1} parent=1 // pred_check
      %p120 = pneg %p119
    $region67: #{tpu_custom_call.1} parent=1 // pred_check_branch
      %122 = sbr.rel (%p120) target = $region69
    $region68: #{tpu_custom_call.1} parent=1 // pred_region
      %v123 = vld [vmem:[#allocation8] sm:$0xff]
      %124 = vst [vmem:[#allocation2] sm:$0xff] %v123
    $region69: #{tpu_custom_call.1} parent=1 // pred_fallthru
      _
    %v125 = vld [vmem:[#allocation5] sm:$0xff]
    %v126 = vld [vmem:[#allocation5 + $0x8] sm:$0xff]
    %v127 = vld [vmem:[#allocation5 + $0x10] sm:$0xff]
    %v128 = vld [vmem:[#allocation5 + $0x18] sm:$0xff]
    %v129 = vld [vmem:[#allocation5 + $0x20] sm:$0xff]
    %v130 = vld [vmem:[#allocation5 + $0x28] sm:$0xff]
    %v131 = vld [vmem:[#allocation5 + $0x30] sm:$0xff]
    %v132 = vld [vmem:[#allocation5 + $0x38] sm:$0xff]
    %v133 = vld [vmem:[#allocation10] sm:$0xff]
    %v134 = vld [vmem:[#allocation10 + $0x8] sm:$0xff]
    %v135 = vld [vmem:[#allocation10 + $0x10] sm:$0xff]
    %v136 = vld [vmem:[#allocation10 + $0x18] sm:$0xff]
    %v137 = vld [vmem:[#allocation10 + $0x20] sm:$0xff]
    %v138 = vld [vmem:[#allocation10 + $0x28] sm:$0xff]
    %v139 = vld [vmem:[#allocation10 + $0x30] sm:$0xff]
    %v140 = vld [vmem:[#allocation10 + $0x38] sm:$0xff]
    %v141 = vld [vmem:[#allocation10 + $0x40] sm:$0xff]
    %v142 = vld [vmem:[#allocation10 + $0x48] sm:$0xff]
    %v143 = vld [vmem:[#allocation10 + $0x50] sm:$0xff]
    %v144 = vld [vmem:[#allocation10 + $0x58] sm:$0xff]
    %v145 = vld [vmem:[#allocation10 + $0x60] sm:$0xff]
    %v146 = vld [vmem:[#allocation10 + $0x68] sm:$0xff]
    %v147 = vld [vmem:[#allocation10 + $0x70] sm:$0xff]
    %v148 = vld [vmem:[#allocation10 + $0x78] sm:$0xff]
    %v149 = vld [vmem:[%s3] sm:$0x1]
    %v151 = vlaneseq
    %v152 = vshrl.u32 %v151, 7
    %v153 = vsub.s32 0, %v152
    %v154 = vrot.slane %v149, %v153
    %156 = vmatprep.subr.mxu0 0.0
    %157 = vmatpush1.msra.mxu0 %v133
    %158 = vmatprep.subr.mxu0 0.0
    %159 = vmatpush1.msra.mxu0 %v134
    %160 = vmatprep.subr.mxu0 0.0
    %161 = vmatpush1.msra.mxu0 %v135
    %162 = vmatprep.subr.mxu0 0.0
    %163 = vmatpush1.msra.mxu0 %v136
    %164 = vmatprep.subr.mxu0 0.0
    %165 = vmatpush1.msra.mxu0 %v137
    %166 = vmatprep.subr.mxu0 0.0
    %167 = vmatpush1.msra.mxu0 %v138
    %168 = vmatprep.subr.mxu0 0.0
    %169 = vmatpush1.msra.mxu0 %v139
    %170 = vmatprep.subr.mxu0 0.0
    %171 = vmatpush1.msra.mxu0 %v140
    %172 = vmatprep.subr.mxu0 0.0
    %173 = vmatpush1.msra.mxu0 %v141
    %174 = vmatprep.subr.mxu0 0.0
    %175 = vmatpush1.msra.mxu0 %v142
    %176 = vmatprep.subr.mxu0 0.0
    %177 = vmatpush1.msra.mxu0 %v143
    %178 = vmatprep.subr.mxu0 0.0
    %179 = vmatpush1.msra.mxu0 %v144
    %180 = vmatprep.subr.mxu0 0.0
    %181 = vmatpush1.msra.mxu0 %v145
    %182 = vmatprep.subr.mxu0 0.0
    %183 = vmatpush1.msra.mxu0 %v146
    %184 = vmatprep.subr.mxu0 0.0
    %185 = vmatpush1.msra.mxu0 %v147
    %186 = vmatprep.subr.mxu0 0.0
    %187 = vmatpush1.msra.mxu0 %v148
    %188 = vmatprep.subr.mxu0 0.0
    %189 = vmatpush1.msra.mxu0 0.0
    %190 = vmatprep.subr.mxu0 0.0
    %191 = vmatpush1.msra.mxu0 0.0
    %192 = vmatprep.subr.mxu0 0.0
    %193 = vmatpush1.msra.mxu0 0.0
    %194 = vmatprep.subr.mxu0 0.0
    %195 = vmatpush1.msra.mxu0 0.0
    %196 = vmatprep.subr.mxu0 0.0
    %197 = vmatpush1.msra.mxu0 0.0
    %198 = vmatprep.subr.mxu0 0.0
    %199 = vmatpush1.msra.mxu0 0.0
    %200 = vmatprep.subr.mxu0 0.0
    %201 = vmatpush1.msra.mxu0 0.0
    %202 = vmatprep.subr.mxu0 0.0
    %203 = vmatpush1.msra.mxu0 0.0
    %204 = vmatprep.subr.mxu0 0.0
    %205 = vmatpush1.msra.mxu0 0.0
    %206 = vmatprep.subr.mxu0 0.0
    %207 = vmatpush1.msra.mxu0 0.0
    %208 = vmatprep.subr.mxu0 0.0
    %209 = vmatpush1.msra.mxu0 0.0
    %210 = vmatprep.subr.mxu0 0.0
    %211 = vmatpush1.msra.mxu0 0.0
    %212 = vmatprep.subr.mxu0 0.0
    %213 = vmatpush1.msra.mxu0 0.0
    %214 = vmatprep.subr.mxu0 0.0
    %215 = vmatpush1.msra.mxu0 0.0
    %216 = vmatprep.subr.mxu0 0.0
    %217 = vmatpush1.msra.mxu0 0.0
    %218 = vmatprep.subr.mxu0 0.0
    %219 = vmatpush1.msra.mxu0 0.0
    %220 = vmatprep.mubr.f32.mxu0 0.0
    %221 = vmatmul.mubr.f32.gmra.mrb[0].mxu0 %v125
    %v222 = vpop.f32.mrb[0].mxu0
    %v223 = vadd.f32 %v154, %v222
    %v224 = vpop.f32.mrb[0].mxu0
    %225 = vmatprep.mubr.f32.mxu0 0.0
    %226 = vmatmul.mubr.f32.gmra.mrb[0].mxu0 %v126
    %v227 = vpop.f32.mrb[0].mxu0
    %v228 = vadd.f32 %v154, %v227
    %v229 = vpop.f32.mrb[0].mxu0
    %230 = vmatprep.mubr.f32.mxu0 0.0
    %231 = vmatmul.mubr.f32.gmra.mrb[0].mxu0 %v127
    %v232 = vpop.f32.mrb[0].mxu0
    %v233 = vadd.f32 %v154, %v232
    %v234 = vpop.f32.mrb[0].mxu0
    %235 = vmatprep.mubr.f32.mxu0 0.0
    %236 = vmatmul.mubr.f32.gmra.mrb[0].mxu0 %v128
    %v237 = vpop.f32.mrb[0].mxu0
    %v238 = vadd.f32 %v154, %v237
    %v239 = vpop.f32.mrb[0].mxu0
    %240 = vmatprep.mubr.f32.mxu0 0.0
    %241 = vmatmul.mubr.f32.gmra.mrb[0].mxu0 %v129
    %v242 = vpop.f32.mrb[0].mxu0
    %v243 = vadd.f32 %v154, %v242
    %v244 = vpop.f32.mrb[0].mxu0
    %245 = vmatprep.mubr.f32.mxu0 0.0
    %246 = vmatmul.mubr.f32.gmra.mrb[0].mxu0 %v130
    %v247 = vpop.f32.mrb[0].mxu0
    %v248 = vadd.f32 %v154, %v247
    %v249 = vpop.f32.mrb[0].mxu0
    %250 = vmatprep.mubr.f32.mxu0 0.0
    %251 = vmatmul.mubr.f32.gmra.mrb[0].mxu0 %v131
    %v252 = vpop.f32.mrb[0].mxu0
    %v253 = vadd.f32 %v154, %v252
    %v254 = vpop.f32.mrb[0].mxu0
    %255 = vmatprep.mubr.f32.mxu0 0.0
    %256 = vmatmul.mubr.f32.gmra.mrb[0].mxu0 %v132
    %v257 = vpop.f32.mrb[0].mxu0
    %v258 = vadd.f32 %v154, %v257
    %v259 = vpop.f32.mrb[0].mxu0
    %260 = vdwg.mxu0
    %v261 = vmax.f32 %v223, 0.0
    %v262 = vmax.f32 %v228, 0.0
    %v263 = vmax.f32 %v233, 0.0
    %v264 = vmax.f32 %v238, 0.0
    %v265 = vmax.f32 %v243, 0.0
    %v266 = vmax.f32 %v248, 0.0
    %v267 = vmax.f32 %v253, 0.0
    %v268 = vmax.f32 %v258, 0.0
    %v269 = vld [vmem:[#allocation11] sm:$0xff]
    %v270 = vld [vmem:[#allocation11 + $0x8] sm:$0xff]
    %v271 = vld [vmem:[#allocation11 + $0x10] sm:$0xff]
    %v272 = vld [vmem:[#allocation11 + $0x18] sm:$0xff]
    %v273 = vld [vmem:[#allocation11 + $0x20] sm:$0xff]
    %v274 = vld [vmem:[#allocation11 + $0x28] sm:$0xff]
    %v275 = vld [vmem:[#allocation11 + $0x30] sm:$0xff]
    %v276 = vld [vmem:[#allocation11 + $0x38] sm:$0xff]
    %v277 = vld [vmem:[#allocation11 + $0x40] sm:$0xff]
    %v278 = vld [vmem:[#allocation11 + $0x48] sm:$0xff]
    %v279 = vld [vmem:[#allocation11 + $0x50] sm:$0xff]
    %v280 = vld [vmem:[#allocation11 + $0x58] sm:$0xff]
    %v281 = vld [vmem:[#allocation11 + $0x60] sm:$0xff]
    %v282 = vld [vmem:[#allocation11 + $0x68] sm:$0xff]
    %v283 = vld [vmem:[#allocation11 + $0x70] sm:$0xff]
    %v284 = vld [vmem:[#allocation11 + $0x78] sm:$0xff]
    %v285 = vld [vmem:[#allocation11 + $0x80] sm:$0xff]
    %v286 = vld [vmem:[#allocation11 + $0x88] sm:$0xff]
    %v287 = vld [vmem:[#allocation11 + $0x90] sm:$0xff]
    %v288 = vld [vmem:[#allocation11 + $0x98] sm:$0xff]
    %v289 = vld [vmem:[#allocation11 + $0xa0] sm:$0xff]
    %v290 = vld [vmem:[#allocation11 + $0xa8] sm:$0xff]
    %v291 = vld [vmem:[#allocation11 + $0xb0] sm:$0xff]
    %v292 = vld [vmem:[#allocation11 + $0xb8] sm:$0xff]
    %v293 = vld [vmem:[#allocation11 + $0xc0] sm:$0xff]
    %v294 = vld [vmem:[#allocation11 + $0xc8] sm:$0xff]
    %v295 = vld [vmem:[#allocation11 + $0xd0] sm:$0xff]
    %v296 = vld [vmem:[#allocation11 + $0xd8] sm:$0xff]
    %v297 = vld [vmem:[#allocation11 + $0xe0] sm:$0xff]
    %v298 = vld [vmem:[#allocation11 + $0xe8] sm:$0xff]
    %v299 = vld [vmem:[#allocation11 + $0xf0] sm:$0xff]
    %v300 = vld [vmem:[#allocation11 + $0xf8] sm:$0xff]
    %v301 = vld [vmem:[#allocation11 + $0x100] sm:$0xff]
    %v302 = vld [vmem:[#allocation11 + $0x108] sm:$0xff]
    %v303 = vld [vmem:[#allocation11 + $0x110] sm:$0xff]
    %v304 = vld [vmem:[#allocation11 + $0x118] sm:$0xff]
    %v305 = vld [vmem:[#allocation11 + $0x120] sm:$0xff]
    %v306 = vld [vmem:[#allocation11 + $0x128] sm:$0xff]
    %v307 = vld [vmem:[#allocation11 + $0x130] sm:$0xff]
    %v308 = vld [vmem:[#allocation11 + $0x138] sm:$0xff]
    %v309 = vld [vmem:[#allocation11 + $0x140] sm:$0xff]
    %v310 = vld [vmem:[#allocation11 + $0x148] sm:$0xff]
    %v311 = vld [vmem:[#allocation11 + $0x150] sm:$0xff]
    %v312 = vld [vmem:[#allocation11 + $0x158] sm:$0xff]
    %v313 = vld [vmem:[#allocation11 + $0x160] sm:$0xff]
    %v314 = vld [vmem:[#allocation11 + $0x168] sm:$0xff]
    %v315 = vld [vmem:[#allocation11 + $0x170] sm:$0xff]
    %v316 = vld [vmem:[#allocation11 + $0x178] sm:$0xff]
    %v317 = vld [vmem:[%s5] sm:$0x7]
    %v319 = vlaneseq
    %v320 = vshrl.u32 %v319, 7
    %v321 = vsub.s32 0, %v320
    %v322 = vrot.slane %v317, %v321
    %v323 = vlaneseq
    %v324 = vshrl.u32 %v323, 7
    %v325 = vsub.s32 1, %v324
    %v326 = vrot.slane %v317, %v325
    %v327 = vlaneseq
    %v328 = vshrl.u32 %v327, 7
    %v329 = vsub.s32 2, %v328
    %v330 = vrot.slane %v317, %v329
    %334 = vmatprep.subr.mxu0 %v270
    %335 = vmatpush1.msra.mxu0 %v269
    %336 = vmatprep.subr.mxu0 %v273
    %337 = vmatpush1.msra.mxu0 %v272
    %338 = vmatprep.subr.mxu0 %v276
    %339 = vmatpush1.msra.mxu0 %v275
    %340 = vmatprep.subr.mxu0 %v279
    %341 = vmatpush1.msra.mxu0 %v278
    %342 = vmatprep.subr.mxu0 %v282
    %343 = vmatpush1.msra.mxu0 %v281
    %344 = vmatprep.subr.mxu0 %v285
    %345 = vmatpush1.msra.mxu0 %v284
    %346 = vmatprep.subr.mxu0 %v288
    %347 = vmatpush1.msra.mxu0 %v287
    %348 = vmatprep.subr.mxu0 %v291
    %349 = vmatpush1.msra.mxu0 %v290
    %350 = vmatprep.subr.mxu0 %v294
    %351 = vmatpush1.msra.mxu0 %v293
    %352 = vmatprep.subr.mxu0 %v297
    %353 = vmatpush1.msra.mxu0 %v296
    %354 = vmatprep.subr.mxu0 %v300
    %355 = vmatpush1.msra.mxu0 %v299
    %356 = vmatprep.subr.mxu0 %v303
    %357 = vmatpush1.msra.mxu0 %v302
    %358 = vmatprep.subr.mxu0 %v306
    %359 = vmatpush1.msra.mxu0 %v305
    %360 = vmatprep.subr.mxu0 %v309
    %361 = vmatpush1.msra.mxu0 %v308
    %362 = vmatprep.subr.mxu0 %v312
    %363 = vmatpush1.msra.mxu0 %v311
    %364 = vmatprep.subr.mxu0 %v315
    %365 = vmatpush1.msra.mxu0 %v314
    %366 = vmatprep.subr.mxu0 0.0
    %367 = vmatpush1.msra.mxu0 0.0
    %368 = vmatprep.subr.mxu0 0.0
    %369 = vmatpush1.msra.mxu0 0.0
    %370 = vmatprep.subr.mxu0 0.0
    %371 = vmatpush1.msra.mxu0 0.0
    %372 = vmatprep.subr.mxu0 0.0
    %373 = vmatpush1.msra.mxu0 0.0
    %374 = vmatprep.subr.mxu0 0.0
    %375 = vmatpush1.msra.mxu0 0.0
    %376 = vmatprep.subr.mxu0 0.0
    %377 = vmatpush1.msra.mxu0 0.0
    %378 = vmatprep.subr.mxu0 0.0
    %379 = vmatpush1.msra.mxu0 0.0
    %380 = vmatprep.subr.mxu0 0.0
    %381 = vmatpush1.msra.mxu0 0.0
    %382 = vmatprep.subr.mxu0 0.0
    %383 = vmatpush1.msra.mxu0 0.0
    %384 = vmatprep.subr.mxu0 0.0
    %385 = vmatpush1.msra.mxu0 0.0
    %386 = vmatprep.subr.mxu0 0.0
    %387 = vmatpush1.msra.mxu0 0.0
    %388 = vmatprep.subr.mxu0 0.0
    %389 = vmatpush1.msra.mxu0 0.0
    %390 = vmatprep.subr.mxu0 0.0
    %391 = vmatpush1.msra.mxu0 0.0
    %392 = vmatprep.subr.mxu0 0.0
    %393 = vmatpush1.msra.mxu0 0.0
    %394 = vmatprep.subr.mxu0 0.0
    %395 = vmatpush1.msra.mxu0 0.0
    %396 = vmatprep.subr.mxu0 0.0
    %397 = vmatpush1.msra.mxu0 0.0
    %398 = vmatprep.mubr.f32.mxu0 0.0
    %399 = vmatmul.mubr.f32.gmra.mrb[0].mxu0 %v261
    %v400 = vpop.f32.mrb[0].mxu0
    %v401 = vadd.f32 %v322, %v400
    %v402 = vpop.f32.mrb[0].mxu0
    %v403 = vadd.f32 %v326, %v402
    %404 = vmatprep.mubr.f32.mxu0 0.0
    %405 = vmatmul.mubr.f32.gmra.mrb[0].mxu0 %v262
    %v406 = vpop.f32.mrb[0].mxu0
    %v407 = vadd.f32 %v322, %v406
    %v408 = vpop.f32.mrb[0].mxu0
    %v409 = vadd.f32 %v326, %v408
    %410 = vmatprep.mubr.f32.mxu0 0.0
    %411 = vmatmul.mubr.f32.gmra.mrb[0].mxu0 %v263
    %v412 = vpop.f32.mrb[0].mxu0
    %v413 = vadd.f32 %v322, %v412
    %v414 = vpop.f32.mrb[0].mxu0
    %v415 = vadd.f32 %v326, %v414
    %416 = vmatprep.mubr.f32.mxu0 0.0
    %417 = vmatmul.mubr.f32.gmra.mrb[0].mxu0 %v264
    %v418 = vpop.f32.mrb[0].mxu0
    %v419 = vadd.f32 %v322, %v418
    %v420 = vpop.f32.mrb[0].mxu0
    %v421 = vadd.f32 %v326, %v420
    %422 = vmatprep.mubr.f32.mxu0 0.0
    %423 = vmatmul.mubr.f32.gmra.mrb[0].mxu0 %v265
    %v424 = vpop.f32.mrb[0].mxu0
    %v425 = vadd.f32 %v322, %v424
    %v426 = vpop.f32.mrb[0].mxu0
    %v427 = vadd.f32 %v326, %v426
    %428 = vmatprep.mubr.f32.mxu0 0.0
    %429 = vmatmul.mubr.f32.gmra.mrb[0].mxu0 %v266
    %v430 = vpop.f32.mrb[0].mxu0
    %v431 = vadd.f32 %v322, %v430
    %v432 = vpop.f32.mrb[0].mxu0
    %v433 = vadd.f32 %v326, %v432
    %434 = vmatprep.mubr.f32.mxu0 0.0
    %435 = vmatmul.mubr.f32.gmra.mrb[0].mxu0 %v267
    %v436 = vpop.f32.mrb[0].mxu0
    %v437 = vadd.f32 %v322, %v436
    %v438 = vpop.f32.mrb[0].mxu0
    %v439 = vadd.f32 %v326, %v438
    %440 = vmatprep.mubr.f32.mxu0 0.0
    %441 = vmatmul.mubr.f32.gmra.mrb[0].mxu0 %v268
    %v442 = vpop.f32.mrb[0].mxu0
    %v443 = vadd.f32 %v322, %v442
    %v444 = vpop.f32.mrb[0].mxu0
    %v445 = vadd.f32 %v326, %v444
    %446 = vdwg.mxu0
    %447 = vmatprep.subr.mxu0 0.0
    %448 = vmatpush1.msra.mxu0 %v271
    %449 = vmatprep.subr.mxu0 0.0
    %450 = vmatpush1.msra.mxu0 %v274
    %451 = vmatprep.subr.mxu0 0.0
    %452 = vmatpush1.msra.mxu0 %v277
    %453 = vmatprep.subr.mxu0 0.0
    %454 = vmatpush1.msra.mxu0 %v280
    %455 = vmatprep.subr.mxu0 0.0
    %456 = vmatpush1.msra.mxu0 %v283
    %457 = vmatprep.subr.mxu0 0.0
    %458 = vmatpush1.msra.mxu0 %v286
    %459 = vmatprep.subr.mxu0 0.0
    %460 = vmatpush1.msra.mxu0 %v289
    %461 = vmatprep.subr.mxu0 0.0
    %462 = vmatpush1.msra.mxu0 %v292
    %463 = vmatprep.subr.mxu0 0.0
    %464 = vmatpush1.msra.mxu0 %v295
    %465 = vmatprep.subr.mxu0 0.0
    %466 = vmatpush1.msra.mxu0 %v298
    %467 = vmatprep.subr.mxu0 0.0
    %468 = vmatpush1.msra.mxu0 %v301
    %469 = vmatprep.subr.mxu0 0.0
    %470 = vmatpush1.msra.mxu0 %v304
    %471 = vmatprep.subr.mxu0 0.0
    %472 = vmatpush1.msra.mxu0 %v307
    %473 = vmatprep.subr.mxu0 0.0
    %474 = vmatpush1.msra.mxu0 %v310
    %475 = vmatprep.subr.mxu0 0.0
    %476 = vmatpush1.msra.mxu0 %v313
    %477 = vmatprep.subr.mxu0 0.0
    %478 = vmatpush1.msra.mxu0 %v316
    %479 = vmatprep.subr.mxu0 0.0
    %480 = vmatpush1.msra.mxu0 0.0
    %481 = vmatprep.subr.mxu0 0.0
    %482 = vmatpush1.msra.mxu0 0.0
    %483 = vmatprep.subr.mxu0 0.0
    %484 = vmatpush1.msra.mxu0 0.0
    %485 = vmatprep.subr.mxu0 0.0
    %486 = vmatpush1.msra.mxu0 0.0
    %487 = vmatprep.subr.mxu0 0.0
    %488 = vmatpush1.msra.mxu0 0.0
    %489 = vmatprep.subr.mxu0 0.0
    %490 = vmatpush1.msra.mxu0 0.0
    %491 = vmatprep.subr.mxu0 0.0
    %492 = vmatpush1.msra.mxu0 0.0
    %493 = vmatprep.subr.mxu0 0.0
    %494 = vmatpush1.msra.mxu0 0.0
    %495 = vmatprep.subr.mxu0 0.0
    %496 = vmatpush1.msra.mxu0 0.0
    %497 = vmatprep.subr.mxu0 0.0
    %498 = vmatpush1.msra.mxu0 0.0
    %499 = vmatprep.subr.mxu0 0.0
    %500 = vmatpush1.msra.mxu0 0.0
    %501 = vmatprep.subr.mxu0 0.0
    %502 = vmatpush1.msra.mxu0 0.0
    %503 = vmatprep.subr.mxu0 0.0
    %504 = vmatpush1.msra.mxu0 0.0
    %505 = vmatprep.subr.mxu0 0.0
    %506 = vmatpush1.msra.mxu0 0.0
    %507 = vmatprep.subr.mxu0 0.0
    %508 = vmatpush1.msra.mxu0 0.0
    %509 = vmatprep.subr.mxu0 0.0
    %510 = vmatpush1.msra.mxu0 0.0
    %511 = vmatprep.mubr.f32.mxu0 0.0
    %512 = vmatmul.mubr.f32.gmra.mrb[0].mxu0 %v261
    %v513 = vpop.f32.mrb[0].mxu0
    %v514 = vadd.f32 %v330, %v513
    %v515 = vpop.f32.mrb[0].mxu0
    %516 = vmatprep.mubr.f32.mxu0 0.0
    %517 = vmatmul.mubr.f32.gmra.mrb[0].mxu0 %v262
    %v518 = vpop.f32.mrb[0].mxu0
    %v519 = vadd.f32 %v330, %v518
    %v520 = vpop.f32.mrb[0].mxu0
    %521 = vmatprep.mubr.f32.mxu0 0.0
    %522 = vmatmul.mubr.f32.gmra.mrb[0].mxu0 %v263
    %v523 = vpop.f32.mrb[0].mxu0
    %v524 = vadd.f32 %v330, %v523
    %v525 = vpop.f32.mrb[0].mxu0
    %526 = vmatprep.mubr.f32.mxu0 0.0
    %527 = vmatmul.mubr.f32.gmra.mrb[0].mxu0 %v264
    %v528 = vpop.f32.mrb[0].mxu0
    %v529 = vadd.f32 %v330, %v528
    %v530 = vpop.f32.mrb[0].mxu0
    %531 = vmatprep.mubr.f32.mxu0 0.0
    %532 = vmatmul.mubr.f32.gmra.mrb[0].mxu0 %v265
    %v533 = vpop.f32.mrb[0].mxu0
    %v534 = vadd.f32 %v330, %v533
    %v535 = vpop.f32.mrb[0].mxu0
    %536 = vmatprep.mubr.f32.mxu0 0.0
    %537 = vmatmul.mubr.f32.gmra.mrb[0].mxu0 %v266
    %v538 = vpop.f32.mrb[0].mxu0
    %v539 = vadd.f32 %v330, %v538
    %v540 = vpop.f32.mrb[0].mxu0
    %541 = vmatprep.mubr.f32.mxu0 0.0
    %542 = vmatmul.mubr.f32.gmra.mrb[0].mxu0 %v267
    %v543 = vpop.f32.mrb[0].mxu0
    %v544 = vadd.f32 %v330, %v543
    %v545 = vpop.f32.mrb[0].mxu0
    %546 = vmatprep.mubr.f32.mxu0 0.0
    %547 = vmatmul.mubr.f32.gmra.mrb[0].mxu0 %v268
    %v548 = vpop.f32.mrb[0].mxu0
    %v549 = vadd.f32 %v330, %v548
    %v550 = vpop.f32.mrb[0].mxu0
    %551 = vdwg.mxu0
    %552 = vst [vmem:[#allocation3] sm:$0xff] %v401
    %553 = vst [vmem:[#allocation3 + $0x8] sm:$0xff] %v403
    %554 = vst [vmem:[#allocation3 + $0x10] sm:$0xff] %v514
    %555 = vst [vmem:[#allocation3 + $0x18] sm:$0xff] %v407
    %556 = vst [vmem:[#allocation3 + $0x20] sm:$0xff] %v409
    %557 = vst [vmem:[#allocation3 + $0x28] sm:$0xff] %v519
    %558 = vst [vmem:[#allocation3 + $0x30] sm:$0xff] %v413
    %559 = vst [vmem:[#allocation3 + $0x38] sm:$0xff] %v415
    %560 = vst [vmem:[#allocation3 + $0x40] sm:$0xff] %v524
    %561 = vst [vmem:[#allocation3 + $0x48] sm:$0xff] %v419
    %562 = vst [vmem:[#allocation3 + $0x50] sm:$0xff] %v421
    %563 = vst [vmem:[#allocation3 + $0x58] sm:$0xff] %v529
    %564 = vst [vmem:[#allocation3 + $0x60] sm:$0xff] %v425
    %565 = vst [vmem:[#allocation3 + $0x68] sm:$0xff] %v427
    %566 = vst [vmem:[#allocation3 + $0x70] sm:$0xff] %v534
    %567 = vst [vmem:[#allocation3 + $0x78] sm:$0xff] %v431
    %568 = vst [vmem:[#allocation3 + $0x80] sm:$0xff] %v433
    %569 = vst [vmem:[#allocation3 + $0x88] sm:$0xff] %v539
    %570 = vst [vmem:[#allocation3 + $0x90] sm:$0xff] %v437
    %571 = vst [vmem:[#allocation3 + $0x98] sm:$0xff] %v439
    %572 = vst [vmem:[#allocation3 + $0xa0] sm:$0xff] %v544
    %573 = vst [vmem:[#allocation3 + $0xa8] sm:$0xff] %v443
    %574 = vst [vmem:[#allocation3 + $0xb0] sm:$0xff] %v445
    %575 = vst [vmem:[#allocation3 + $0xb8] sm:$0xff] %v549
    %s576 = smul.u32 0, 8
    %v577 = vld [vmem:[#allocation2] sm:$0xff]
    %v578 = vld [vmem:[#allocation3] sm:$0xff]
    %v579 = vld [vmem:[#allocation3 + $0x8] sm:$0xff]
    %v580 = vld [vmem:[#allocation3 + $0x10] sm:$0xff]
    %v581 = vld [vmem:[#allocation13] sm:$0xff]
    %v582 = vld [vmem:[#allocation13 + $0x8] sm:$0xff]
    %v583 = vld [vmem:[#allocation13 + $0x10] sm:$0xff]
    %v584 = vld [vmem:[#allocation13 + $0x18] sm:$0xff]
    %v585 = vld [vmem:[#allocation13 + $0x20] sm:$0xff]
    %v586 = vld [vmem:[#allocation13 + $0x28] sm:$0xff]
    %v587 = vld [vmem:[#allocation13 + $0x30] sm:$0xff]
    %v588 = vld [vmem:[#allocation13 + $0x38] sm:$0xff]
    %v589 = vld [vmem:[#allocation13 + $0x40] sm:$0xff]
    %v590 = vld [vmem:[#allocation13 + $0x48] sm:$0xff]
    %v591 = vld [vmem:[#allocation13 + $0x50] sm:$0xff]
    %v592 = vld [vmem:[#allocation13 + $0x58] sm:$0xff]
    %v593 = vld [vmem:[#allocation13 + $0x60] sm:$0xff]
    %v594 = vld [vmem:[#allocation13 + $0x68] sm:$0xff]
    %v595 = vld [vmem:[#allocation13 + $0x70] sm:$0xff]
    %v596 = vld [vmem:[#allocation13 + $0x78] sm:$0xff]
    %v597 = vld [vmem:[#allocation13 + $0x80] sm:$0xff]
    %v598 = vld [vmem:[#allocation13 + $0x88] sm:$0xff]
    %v599 = vld [vmem:[#allocation13 + $0x90] sm:$0xff]
    %v600 = vld [vmem:[#allocation13 + $0x98] sm:$0xff]
    %v601 = vld [vmem:[#allocation13 + $0xa0] sm:$0xff]
    %v602 = vld [vmem:[#allocation13 + $0xa8] sm:$0xff]
    %v603 = vld [vmem:[#allocation13 + $0xb0] sm:$0xff]
    %v604 = vld [vmem:[#allocation13 + $0xb8] sm:$0xff]
    %v605 = vld [vmem:[#allocation13 + $0xc0] sm:$0xff]
    %v606 = vld [vmem:[#allocation13 + $0xc8] sm:$0xff]
    %v607 = vld [vmem:[#allocation13 + $0xd0] sm:$0xff]
    %v608 = vld [vmem:[#allocation13 + $0xd8] sm:$0xff]
    %v609 = vld [vmem:[#allocation13 + $0xe0] sm:$0xff]
    %v610 = vld [vmem:[#allocation13 + $0xe8] sm:$0xff]
    %v611 = vld [vmem:[#allocation13 + $0xf0] sm:$0xff]
    %v612 = vld [vmem:[#allocation13 + $0xf8] sm:$0xff]
    %v613 = vld [vmem:[#allocation13 + $0x100] sm:$0xff]
    %v614 = vld [vmem:[#allocation13 + $0x108] sm:$0xff]
    %v615 = vld [vmem:[#allocation13 + $0x110] sm:$0xff]
    %v616 = vld [vmem:[#allocation13 + $0x118] sm:$0xff]
    %v617 = vld [vmem:[#allocation13 + $0x120] sm:$0xff]
    %v618 = vld [vmem:[#allocation13 + $0x128] sm:$0xff]
    %v619 = vld [vmem:[#allocation13 + $0x130] sm:$0xff]
    %v620 = vld [vmem:[#allocation13 + $0x138] sm:$0xff]
    %v621 = vld [vmem:[#allocation13 + $0x140] sm:$0xff]
    %v622 = vld [vmem:[#allocation13 + $0x148] sm:$0xff]
    %v623 = vld [vmem:[#allocation13 + $0x150] sm:$0xff]
    %v624 = vld [vmem:[#allocation13 + $0x158] sm:$0xff]
    %v625 = vld [vmem:[#allocation13 + $0x160] sm:$0xff]
    %v626 = vld [vmem:[#allocation13 + $0x168] sm:$0xff]
    %v627 = vld [vmem:[#allocation13 + $0x170] sm:$0xff]
    %v628 = vld [vmem:[#allocation13 + $0x178] sm:$0xff]
    %629 = vmatprep.subr.mxu0 %v582
    %630 = vmatpush1.msra.mxu0 %v581
    %631 = vmatprep.subr.mxu0 %v585
    %632 = vmatpush1.msra.mxu0 %v584
    %633 = vmatprep.subr.mxu0 %v588
    %634 = vmatpush1.msra.mxu0 %v587
    %635 = vmatprep.subr.mxu0 %v591
    %636 = vmatpush1.msra.mxu0 %v590
    %637 = vmatprep.subr.mxu0 %v594
    %638 = vmatpush1.msra.mxu0 %v593
    %639 = vmatprep.subr.mxu0 %v597
    %640 = vmatpush1.msra.mxu0 %v596
    %641 = vmatprep.subr.mxu0 %v600
    %642 = vmatpush1.msra.mxu0 %v599
    %643 = vmatprep.subr.mxu0 %v603
    %644 = vmatpush1.msra.mxu0 %v602
    %645 = vmatprep.subr.mxu0 %v606
    %646 = vmatpush1.msra.mxu0 %v605
    %647 = vmatprep.subr.mxu0 %v609
    %648 = vmatpush1.msra.mxu0 %v608
    %649 = vmatprep.subr.mxu0 %v612
    %650 = vmatpush1.msra.mxu0 %v611
    %651 = vmatprep.subr.mxu0 %v615
    %652 = vmatpush1.msra.mxu0 %v614
    %653 = vmatprep.subr.mxu0 %v618
    %654 = vmatpush1.msra.mxu0 %v617
    %655 = vmatprep.subr.mxu0 %v621
    %656 = vmatpush1.msra.mxu0 %v620
    %657 = vmatprep.subr.mxu0 %v624
    %658 = vmatpush1.msra.mxu0 %v623
    %659 = vmatprep.subr.mxu0 %v627
    %660 = vmatpush1.msra.mxu0 %v626
    %661 = vmatprep.subr.mxu0 0.0
    %662 = vmatpush1.msra.mxu0 0.0
    %663 = vmatprep.subr.mxu0 0.0
    %664 = vmatpush1.msra.mxu0 0.0
    %665 = vmatprep.subr.mxu0 0.0
    %666 = vmatpush1.msra.mxu0 0.0
    %667 = vmatprep.subr.mxu0 0.0
    %668 = vmatpush1.msra.mxu0 0.0
    %669 = vmatprep.subr.mxu0 0.0
    %670 = vmatpush1.msra.mxu0 0.0
    %671 = vmatprep.subr.mxu0 0.0
    %672 = vmatpush1.msra.mxu0 0.0
    %673 = vmatprep.subr.mxu0 0.0
    %674 = vmatpush1.msra.mxu0 0.0
    %675 = vmatprep.subr.mxu0 0.0
    %676 = vmatpush1.msra.mxu0 0.0
    %677 = vmatprep.subr.mxu0 0.0
    %678 = vmatpush1.msra.mxu0 0.0
    %679 = vmatprep.subr.mxu0 0.0
    %680 = vmatpush1.msra.mxu0 0.0
    %681 = vmatprep.subr.mxu0 0.0
    %682 = vmatpush1.msra.mxu0 0.0
    %683 = vmatprep.subr.mxu0 0.0
    %684 = vmatpush1.msra.mxu0 0.0
    %685 = vmatprep.subr.mxu0 0.0
    %686 = vmatpush1.msra.mxu0 0.0
    %687 = vmatprep.subr.mxu0 0.0
    %688 = vmatpush1.msra.mxu0 0.0
    %689 = vmatprep.subr.mxu0 0.0
    %690 = vmatpush1.msra.mxu0 0.0
    %691 = vmatprep.subr.mxu0 0.0
    %692 = vmatpush1.msra.mxu0 0.0
    %693 = vmatprep.mubr.f32.mxu0 0.0
    %694 = vmatmul.mubr.f32.gmra.mrb[0].mxu0 %v577
    %v695 = vpop.f32.mrb[0].mxu0
    %v696 = vadd.f32 0.0, %v695
    %v697 = vpop.f32.mrb[0].mxu0
    %v698 = vadd.f32 0.0, %v697
    %699 = vdwg.mxu0
    %700 = vmatprep.subr.mxu0 0.0
    %701 = vmatpush1.msra.mxu0 %v583
    %702 = vmatprep.subr.mxu0 0.0
    %703 = vmatpush1.msra.mxu0 %v586
    %704 = vmatprep.subr.mxu0 0.0
    %705 = vmatpush1.msra.mxu0 %v589
    %706 = vmatprep.subr.mxu0 0.0
    %707 = vmatpush1.msra.mxu0 %v592
    %708 = vmatprep.subr.mxu0 0.0
    %709 = vmatpush1.msra.mxu0 %v595
    %710 = vmatprep.subr.mxu0 0.0
    %711 = vmatpush1.msra.mxu0 %v598
    %712 = vmatprep.subr.mxu0 0.0
    %713 = vmatpush1.msra.mxu0 %v601
    %714 = vmatprep.subr.mxu0 0.0
    %715 = vmatpush1.msra.mxu0 %v604
    %716 = vmatprep.subr.mxu0 0.0
    %717 = vmatpush1.msra.mxu0 %v607
    %718 = vmatprep.subr.mxu0 0.0
    %719 = vmatpush1.msra.mxu0 %v610
    %720 = vmatprep.subr.mxu0 0.0
    %721 = vmatpush1.msra.mxu0 %v613
    %722 = vmatprep.subr.mxu0 0.0
    %723 = vmatpush1.msra.mxu0 %v616
    %724 = vmatprep.subr.mxu0 0.0
    %725 = vmatpush1.msra.mxu0 %v619
    %726 = vmatprep.subr.mxu0 0.0
    %727 = vmatpush1.msra.mxu0 %v622
    %728 = vmatprep.subr.mxu0 0.0
    %729 = vmatpush1.msra.mxu0 %v625
    %730 = vmatprep.subr.mxu0 0.0
    %731 = vmatpush1.msra.mxu0 %v628
    %732 = vmatprep.subr.mxu0 0.0
    %733 = vmatpush1.msra.mxu0 0.0
    %734 = vmatprep.subr.mxu0 0.0
    %735 = vmatpush1.msra.mxu0 0.0
    %736 = vmatprep.subr.mxu0 0.0
    %737 = vmatpush1.msra.mxu0 0.0
    %738 = vmatprep.subr.mxu0 0.0
    %739 = vmatpush1.msra.mxu0 0.0
    %740 = vmatprep.subr.mxu0 0.0
    %741 = vmatpush1.msra.mxu0 0.0
    %742 = vmatprep.subr.mxu0 0.0
    %743 = vmatpush1.msra.mxu0 0.0
    %744 = vmatprep.subr.mxu0 0.0
    %745 = vmatpush1.msra.mxu0 0.0
    %746 = vmatprep.subr.mxu0 0.0
    %747 = vmatpush1.msra.mxu0 0.0
    %748 = vmatprep.subr.mxu0 0.0
    %749 = vmatpush1.msra.mxu0 0.0
    %750 = vmatprep.subr.mxu0 0.0
    %751 = vmatpush1.msra.mxu0 0.0
    %752 = vmatprep.subr.mxu0 0.0
    %753 = vmatpush1.msra.mxu0 0.0
    %754 = vmatprep.subr.mxu0 0.0
    %755 = vmatpush1.msra.mxu0 0.0
    %756 = vmatprep.subr.mxu0 0.0
    %757 = vmatpush1.msra.mxu0 0.0
    %758 = vmatprep.subr.mxu0 0.0
    %759 = vmatpush1.msra.mxu0 0.0
    %760 = vmatprep.subr.mxu0 0.0
    %761 = vmatpush1.msra.mxu0 0.0
    %762 = vmatprep.subr.mxu0 0.0
    %763 = vmatpush1.msra.mxu0 0.0
    %764 = vmatprep.mubr.f32.mxu0 0.0
    %765 = vmatmul.mubr.f32.gmra.mrb[0].mxu0 %v577
    %v766 = vpop.f32.mrb[0].mxu0
    %v767 = vadd.f32 0.0, %v766
    %v768 = vpop.f32.mrb[0].mxu0
    %769 = vdwg.mxu0
    %v770 = vadd.f32 %v578, %v696
    %v771 = vxor.u32 %v770, 2147483648
    %v772 = vmul.f32 %v771, 1.442695
    %v773 = vpow.pop %v772
    %v774 = vadd.f32 %v773, 1.0
    %v775 = vrcp.pop %v774
    %v776 = vmul.f32 1.0, %v775
    %v777 = vadd.f32 %v579, %v698
    %v778 = vxor.u32 %v777, 2147483648
    %v779 = vmul.f32 %v778, 1.442695
    %v780 = vpow.pop %v779
    %v781 = vadd.f32 %v780, 1.0
    %v782 = vrcp.pop %v781
    %v783 = vmul.f32 1.0, %v782
    %v784 = vld [vmem:[%s7] sm:$0x1]
    %v786 = vlaneseq
    %v787 = vshrl.u32 %v786, 7
    %v788 = vsub.s32 0, %v787
    %v789 = vrot.slane %v784, %v788
    %v791 = vadd.f32 %v767, %v789
    %v792 = vmul.f32 %v776, %v791
    %v793 = vadd.f32 %v580, %v792
    %v794 = vtanh.pop %v793
    %v795 = vsub.f32 1.0, %v783
    %v796 = vmul.f32 %v795, %v794
    %v797 = vmul.f32 %v783, %v577
    %v798 = vadd.f32 %v796, %v797
    %799 = vst [vmem:[#allocation4] sm:$0xff] %v798
    %p800 = scmp.lt.s32.totalorder %s576, 8
    // Predicated region
    $region70: #{tpu_custom_call.1} parent=1 // pred_check
      %p801 = pneg %p800
    $region71: #{tpu_custom_call.1} parent=1 // pred_check_branch
      %803 = sbr.rel (%p801) target = $region73
    $region72: #{tpu_custom_call.1} parent=1 // pred_region
      %804 = vst [vmem:[#allocation2] sm:$0xff] %v798
    $region73: #{tpu_custom_call.1} parent=1 // pred_fallthru
      _
    %v805 = vld [vmem:[#allocation2] sm:$0xff]
    %s806 = scalar_lea.vmem [#allocation3], 24
    %v807 = vld [vmem:[%s806] sm:$0xff]
    %v808 = vld [vmem:[%s806 + $0x8] sm:$0xff]
    %v809 = vld [vmem:[%s806 + $0x10] sm:$0xff]
    %v810 = vld [vmem:[#allocation13] sm:$0xff]
    %v811 = vld [vmem:[#allocation13 + $0x8] sm:$0xff]
    %v812 = vld [vmem:[#allocation13 + $0x10] sm:$0xff]
    %v813 = vld [vmem:[#allocation13 + $0x18] sm:$0xff]
    %v814 = vld [vmem:[#allocation13 + $0x20] sm:$0xff]
    %v815 = vld [vmem:[#allocation13 + $0x28] sm:$0xff]
    %v816 = vld [vmem:[#allocation13 + $0x30] sm:$0xff]
    %v817 = vld [vmem:[#allocation13 + $0x38] sm:$0xff]
    %v818 = vld [vmem:[#allocation13 + $0x40] sm:$0xff]
    %v819 = vld [vmem:[#allocation13 + $0x48] sm:$0xff]
    %v820 = vld [vmem:[#allocation13 + $0x50] sm:$0xff]
    %v821 = vld [vmem:[#allocation13 + $0x58] sm:$0xff]
    %v822 = vld [vmem:[#allocation13 + $0x60] sm:$0xff]
    %v823 = vld [vmem:[#allocation13 + $0x68] sm:$0xff]
    %v824 = vld [vmem:[#allocation13 + $0x70] sm:$0xff]
    %v825 = vld [vmem:[#allocation13 + $0x78] sm:$0xff]
    %v826 = vld [vmem:[#allocation13 + $0x80] sm:$0xff]
    %v827 = vld [vmem:[#allocation13 + $0x88] sm:$0xff]
    %v828 = vld [vmem:[#allocation13 + $0x90] sm:$0xff]
    %v829 = vld [vmem:[#allocation13 + $0x98] sm:$0xff]
    %v830 = vld [vmem:[#allocation13 + $0xa0] sm:$0xff]
    %v831 = vld [vmem:[#allocation13 + $0xa8] sm:$0xff]
    %v832 = vld [vmem:[#allocation13 + $0xb0] sm:$0xff]
    %v833 = vld [vmem:[#allocation13 + $0xb8] sm:$0xff]
    %v834 = vld [vmem:[#allocation13 + $0xc0] sm:$0xff]
    %v835 = vld [vmem:[#allocation13 + $0xc8] sm:$0xff]
    %v836 = vld [vmem:[#allocation13 + $0xd0] sm:$0xff]
    %v837 = vld [vmem:[#allocation13 + $0xd8] sm:$0xff]
    %v838 = vld [vmem:[#allocation13 + $0xe0] sm:$0xff]
    %v839 = vld [vmem:[#allocation13 + $0xe8] sm:$0xff]
    %v840 = vld [vmem:[#allocation13 + $0xf0] sm:$0xff]
    %v841 = vld [vmem:[#allocation13 + $0xf8] sm:$0xff]
    %v842 = vld [vmem:[#allocation13 + $0x100] sm:$0xff]
    %v843 = vld [vmem:[#allocation13 + $0x108] sm:$0xff]
    %v844 = vld [vmem:[#allocation13 + $0x110] sm:$0xff]
    %v845 = vld [vmem:[#allocation13 + $0x118] sm:$0xff]
    %v846 = vld [vmem:[#allocation13 + $0x120] sm:$0xff]
    %v847 = vld [vmem:[#allocation13 + $0x128] sm:$0xff]
    %v848 = vld [vmem:[#allocation13 + $0x130] sm:$0xff]
    %v849 = vld [vmem:[#allocation13 + $0x138] sm:$0xff]
    %v850 = vld [vmem:[#allocation13 + $0x140] sm:$0xff]
    %v851 = vld [vmem:[#allocation13 + $0x148] sm:$0xff]
    %v852 = vld [vmem:[#allocation13 + $0x150] sm:$0xff]
    %v853 = vld [vmem:[#allocation13 + $0x158] sm:$0xff]
    %v854 = vld [vmem:[#allocation13 + $0x160] sm:$0xff]
    %v855 = vld [vmem:[#allocation13 + $0x168] sm:$0xff]
    %v856 = vld [vmem:[#allocation13 + $0x170] sm:$0xff]
    %v857 = vld [vmem:[#allocation13 + $0x178] sm:$0xff]
    %858 = vmatprep.subr.mxu0 %v811
    %859 = vmatpush1.msra.mxu0 %v810
    %860 = vmatprep.subr.mxu0 %v814
    %861 = vmatpush1.msra.mxu0 %v813
    %862 = vmatprep.subr.mxu0 %v817
    %863 = vmatpush1.msra.mxu0 %v816
    %864 = vmatprep.subr.mxu0 %v820
    %865 = vmatpush1.msra.mxu0 %v819
    %866 = vmatprep.subr.mxu0 %v823
    %867 = vmatpush1.msra.mxu0 %v822
    %868 = vmatprep.subr.mxu0 %v826
    %869 = vmatpush1.msra.mxu0 %v825
    %870 = vmatprep.subr.mxu0 %v829
    %871 = vmatpush1.msra.mxu0 %v828
    %872 = vmatprep.subr.mxu0 %v832
    %873 = vmatpush1.msra.mxu0 %v831
    %874 = vmatprep.subr.mxu0 %v835
    %875 = vmatpush1.msra.mxu0 %v834
    %876 = vmatprep.subr.mxu0 %v838
    %877 = vmatpush1.msra.mxu0 %v837
    %878 = vmatprep.subr.mxu0 %v841
    %879 = vmatpush1.msra.mxu0 %v840
    %880 = vmatprep.subr.mxu0 %v844
    %881 = vmatpush1.msra.mxu0 %v843
    %882 = vmatprep.subr.mxu0 %v847
    %883 = vmatpush1.msra.mxu0 %v846
    %884 = vmatprep.subr.mxu0 %v850
    %885 = vmatpush1.msra.mxu0 %v849
    %886 = vmatprep.subr.mxu0 %v853
    %887 = vmatpush1.msra.mxu0 %v852
    %888 = vmatprep.subr.mxu0 %v856
    %889 = vmatpush1.msra.mxu0 %v855
    %890 = vmatprep.subr.mxu0 0.0
    %891 = vmatpush1.msra.mxu0 0.0
    %892 = vmatprep.subr.mxu0 0.0
    %893 = vmatpush1.msra.mxu0 0.0
    %894 = vmatprep.subr.mxu0 0.0
    %895 = vmatpush1.msra.mxu0 0.0
    %896 = vmatprep.subr.mxu0 0.0
    %897 = vmatpush1.msra.mxu0 0.0
    %898 = vmatprep.subr.mxu0 0.0
    %899 = vmatpush1.msra.mxu0 0.0
    %900 = vmatprep.subr.mxu0 0.0
    %901 = vmatpush1.msra.mxu0 0.0
    %902 = vmatprep.subr.mxu0 0.0
    %903 = vmatpush1.msra.mxu0 0.0
    %904 = vmatprep.subr.mxu0 0.0
    %905 = vmatpush1.msra.mxu0 0.0
    %906 = vmatprep.subr.mxu0 0.0
    %907 = vmatpush1.msra.mxu0 0.0
    %908 = vmatprep.subr.mxu0 0.0
    %909 = vmatpush1.msra.mxu0 0.0
    %910 = vmatprep.subr.mxu0 0.0
    %911 = vmatpush1.msra.mxu0 0.0
    %912 = vmatprep.subr.mxu0 0.0
    %913 = vmatpush1.msra.mxu0 0.0
    %914 = vmatprep.subr.mxu0 0.0
    %915 = vmatpush1.msra.mxu0 0.0
    %916 = vmatprep.subr.mxu0 0.0
    %917 = vmatpush1.msra.mxu0 0.0
    %918 = vmatprep.subr.mxu0 0.0
    %919 = vmatpush1.msra.mxu0 0.0
    %920 = vmatprep.subr.mxu0 0.0
    %921 = vmatpush1.msra.mxu0 0.0
    %922 = vmatprep.mubr.f32.mxu0 0.0
    %923 = vmatmul.mubr.f32.gmra.mrb[0].mxu0 %v805
    %v924 = vpop.f32.mrb[0].mxu0
    %v925 = vadd.f32 0.0, %v924
    %v926 = vpop.f32.mrb[0].mxu0
    %v927 = vadd.f32 0.0, %v926
    %928 = vdwg.mxu0
    %929 = vmatprep.subr.mxu0 0.0
    %930 = vmatpush1.msra.mxu0 %v812
    %931 = vmatprep.subr.mxu0 0.0
    %932 = vmatpush1.msra.mxu0 %v815
    %933 = vmatprep.subr.mxu0 0.0
    %934 = vmatpush1.msra.mxu0 %v818
    %935 = vmatprep.subr.mxu0 0.0
    %936 = vmatpush1.msra.mxu0 %v821
    %937 = vmatprep.subr.mxu0 0.0
    %938 = vmatpush1.msra.mxu0 %v824
    %939 = vmatprep.subr.mxu0 0.0
    %940 = vmatpush1.msra.mxu0 %v827
    %941 = vmatprep.subr.mxu0 0.0
    %942 = vmatpush1.msra.mxu0 %v830
    %943 = vmatprep.subr.mxu0 0.0
    %944 = vmatpush1.msra.mxu0 %v833
    %945 = vmatprep.subr.mxu0 0.0
    %946 = vmatpush1.msra.mxu0 %v836
    %947 = vmatprep.subr.mxu0 0.0
    %948 = vmatpush1.msra.mxu0 %v839
    %949 = vmatprep.subr.mxu0 0.0
    %950 = vmatpush1.msra.mxu0 %v842
    %951 = vmatprep.subr.mxu0 0.0
    %952 = vmatpush1.msra.mxu0 %v845
    %953 = vmatprep.subr.mxu0 0.0
    %954 = vmatpush1.msra.mxu0 %v848
    %955 = vmatprep.subr.mxu0 0.0
    %956 = vmatpush1.msra.mxu0 %v851
    %957 = vmatprep.subr.mxu0 0.0
    %958 = vmatpush1.msra.mxu0 %v854
    %959 = vmatprep.subr.mxu0 0.0
    %960 = vmatpush1.msra.mxu0 %v857
    %961 = vmatprep.subr.mxu0 0.0
    %962 = vmatpush1.msra.mxu0 0.0
    %963 = vmatprep.subr.mxu0 0.0
    %964 = vmatpush1.msra.mxu0 0.0
    %965 = vmatprep.subr.mxu0 0.0
    %966 = vmatpush1.msra.mxu0 0.0
    %967 = vmatprep.subr.mxu0 0.0
    %968 = vmatpush1.msra.mxu0 0.0
    %969 = vmatprep.subr.mxu0 0.0
    %970 = vmatpush1.msra.mxu0 0.0
    %971 = vmatprep.subr.mxu0 0.0
    %972 = vmatpush1.msra.mxu0 0.0
    %973 = vmatprep.subr.mxu0 0.0
    %974 = vmatpush1.msra.mxu0 0.0
    %975 = vmatprep.subr.mxu0 0.0
    %976 = vmatpush1.msra.mxu0 0.0
    %977 = vmatprep.subr.mxu0 0.0
    %978 = vmatpush1.msra.mxu0 0.0
    %979 = vmatprep.subr.mxu0 0.0
    %980 = vmatpush1.msra.mxu0 0.0
    %981 = vmatprep.subr.mxu0 0.0
    %982 = vmatpush1.msra.mxu0 0.0
    %983 = vmatprep.subr.mxu0 0.0
    %984 = vmatpush1.msra.mxu0 0.0
    %985 = vmatprep.subr.mxu0 0.0
    %986 = vmatpush1.msra.mxu0 0.0
    %987 = vmatprep.subr.mxu0 0.0
    %988 = vmatpush1.msra.mxu0 0.0
    %989 = vmatprep.subr.mxu0 0.0
    %990 = vmatpush1.msra.mxu0 0.0
    %991 = vmatprep.subr.mxu0 0.0
    %992 = vmatpush1.msra.mxu0 0.0
    %993 = vmatprep.mubr.f32.mxu0 0.0
    %994 = vmatmul.mubr.f32.gmra.mrb[0].mxu0 %v805
    %v995 = vpop.f32.mrb[0].mxu0
    %v996 = vadd.f32 0.0, %v995
    %v997 = vpop.f32.mrb[0].mxu0
    %998 = vdwg.mxu0
    %v999 = vadd.f32 %v807, %v925
    %v1000 = vxor.u32 %v999, 2147483648
    %v1001 = vmul.f32 %v1000, 1.442695
    %v1002 = vpow.pop %v1001
    %v1003 = vadd.f32 %v1002, 1.0
    %v1004 = vrcp.pop %v1003
    %v1005 = vmul.f32 1.0, %v1004
    %v1006 = vadd.f32 %v808, %v927
    %v1007 = vxor.u32 %v1006, 2147483648
    %v1008 = vmul.f32 %v1007, 1.442695
    %v1009 = vpow.pop %v1008
    %v1010 = vadd.f32 %v1009, 1.0
    %v1011 = vrcp.pop %v1010
    %v1012 = vmul.f32 1.0, %v1011
    %v1013 = vld [vmem:[%s7] sm:$0x1]
    %v1015 = vlaneseq
    %v1016 = vshrl.u32 %v1015, 7
    %v1017 = vsub.s32 0, %v1016
    %v1018 = vrot.slane %v1013, %v1017
    %v1020 = vadd.f32 %v996, %v1018
    %v1021 = vmul.f32 %v1005, %v1020
    %v1022 = vadd.f32 %v809, %v1021
    %v1023 = vtanh.pop %v1022
    %v1024 = vsub.f32 1.0, %v1012
    %v1025 = vmul.f32 %v1024, %v1023
    %v1026 = vmul.f32 %v1012, %v805
    %v1027 = vadd.f32 %v1025, %v1026
    %s1028 = scalar_lea.vmem [#allocation4], 8
    %1029 = vst [vmem:[%s1028] sm:$0xff] %v1027
    %s1030 = sadd.s32 %s576, 1
    %p1031 = scmp.lt.s32.totalorder %s1030, 8
    // Predicated region
    $region74: #{tpu_custom_call.1} parent=1 // pred_check
      %p1032 = pneg %p1031
    $region75: #{tpu_custom_call.1} parent=1 // pred_check_branch
      %1034 = sbr.rel (%p1032) target = $region77
    $region76: #{tpu_custom_call.1} parent=1 // pred_region
      %1035 = vst [vmem:[#allocation2] sm:$0xff] %v1027
    $region77: #{tpu_custom_call.1} parent=1 // pred_fallthru
      _
    %v1036 = vld [vmem:[#allocation2] sm:$0xff]
    %s1037 = scalar_lea.vmem [#allocation3], 48
    %v1038 = vld [vmem:[%s1037] sm:$0xff]
    %v1039 = vld [vmem:[%s1037 + $0x8] sm:$0xff]
    %v1040 = vld [vmem:[%s1037 + $0x10] sm:$0xff]
    %v1041 = vld [vmem:[#allocation13] sm:$0xff]
    %v1042 = vld [vmem:[#allocation13 + $0x8] sm:$0xff]
    %v1043 = vld [vmem:[#allocation13 + $0x10] sm:$0xff]
    %v1044 = vld [vmem:[#allocation13 + $0x18] sm:$0xff]
    %v1045 = vld [vmem:[#allocation13 + $0x20] sm:$0xff]
    %v1046 = vld [vmem:[#allocation13 + $0x28] sm:$0xff]
    %v1047 = vld [vmem:[#allocation13 + $0x30] sm:$0xff]
    %v1048 = vld [vmem:[#allocation13 + $0x38] sm:$0xff]
    %v1049 = vld [vmem:[#allocation13 + $0x40] sm:$0xff]
    %v1050 = vld [vmem:[#allocation13 + $0x48] sm:$0xff]
    %v1051 = vld [vmem:[#allocation13 + $0x50] sm:$0xff]
    %v1052 = vld [vmem:[#allocation13 + $0x58] sm:$0xff]
    %v1053 = vld [vmem:[#allocation13 + $0x60] sm:$0xff]
    %v1054 = vld [vmem:[#allocation13 + $0x68] sm:$0xff]
    %v1055 = vld [vmem:[#allocation13 + $0x70] sm:$0xff]
    %v1056 = vld [vmem:[#allocation13 + $0x78] sm:$0xff]
    %v1057 = vld [vmem:[#allocation13 + $0x80] sm:$0xff]
    %v1058 = vld [vmem:[#allocation13 + $0x88] sm:$0xff]
    %v1059 = vld [vmem:[#allocation13 + $0x90] sm:$0xff]
    %v1060 = vld [vmem:[#allocation13 + $0x98] sm:$0xff]
    %v1061 = vld [vmem:[#allocation13 + $0xa0] sm:$0xff]
    %v1062 = vld [vmem:[#allocation13 + $0xa8] sm:$0xff]
    %v1063 = vld [vmem:[#allocation13 + $0xb0] sm:$0xff]
    %v1064 = vld [vmem:[#allocation13 + $0xb8] sm:$0xff]
    %v1065 = vld [vmem:[#allocation13 + $0xc0] sm:$0xff]
    %v1066 = vld [vmem:[#allocation13 + $0xc8] sm:$0xff]
    %v1067 = vld [vmem:[#allocation13 + $0xd0] sm:$0xff]
    %v1068 = vld [vmem:[#allocation13 + $0xd8] sm:$0xff]
    %v1069 = vld [vmem:[#allocation13 + $0xe0] sm:$0xff]
    %v1070 = vld [vmem:[#allocation13 + $0xe8] sm:$0xff]
    %v1071 = vld [vmem:[#allocation13 + $0xf0] sm:$0xff]
    %v1072 = vld [vmem:[#allocation13 + $0xf8] sm:$0xff]
    %v1073 = vld [vmem:[#allocation13 + $0x100] sm:$0xff]
    %v1074 = vld [vmem:[#allocation13 + $0x108] sm:$0xff]
    %v1075 = vld [vmem:[#allocation13 + $0x110] sm:$0xff]
    %v1076 = vld [vmem:[#allocation13 + $0x118] sm:$0xff]
    %v1077 = vld [vmem:[#allocation13 + $0x120] sm:$0xff]
    %v1078 = vld [vmem:[#allocation13 + $0x128] sm:$0xff]
    %v1079 = vld [vmem:[#allocation13 + $0x130] sm:$0xff]
    %v1080 = vld [vmem:[#allocation13 + $0x138] sm:$0xff]
    %v1081 = vld [vmem:[#allocation13 + $0x140] sm:$0xff]
    %v1082 = vld [vmem:[#allocation13 + $0x148] sm:$0xff]
    %v1083 = vld [vmem:[#allocation13 + $0x150] sm:$0xff]
    %v1084 = vld [vmem:[#allocation13 + $0x158] sm:$0xff]
    %v1085 = vld [vmem:[#allocation13 + $0x160] sm:$0xff]
    %v1086 = vld [vmem:[#allocation13 + $0x168] sm:$0xff]
    %v1087 = vld [vmem:[#allocation13 + $0x170] sm:$0xff]
    %v1088 = vld [vmem:[#allocation13 + $0x178] sm:$0xff]
    %1089 = vmatprep.subr.mxu0 %v1042
    %1090 = vmatpush1.msra.mxu0 %v1041
    %1091 = vmatprep.subr.mxu0 %v1045
    %1092 = vmatpush1.msra.mxu0 %v1044
    %1093 = vmatprep.subr.mxu0 %v1048
    %1094 = vmatpush1.msra.mxu0 %v1047
    %1095 = vmatprep.subr.mxu0 %v1051
    %1096 = vmatpush1.msra.mxu0 %v1050
    %1097 = vmatprep.subr.mxu0 %v1054
    %1098 = vmatpush1.msra.mxu0 %v1053
    %1099 = vmatprep.subr.mxu0 %v1057
    %1100 = vmatpush1.msra.mxu0 %v1056
    %1101 = vmatprep.subr.mxu0 %v1060
    %1102 = vmatpush1.msra.mxu0 %v1059
    %1103 = vmatprep.subr.mxu0 %v1063
    %1104 = vmatpush1.msra.mxu0 %v1062
    %1105 = vmatprep.subr.mxu0 %v1066
    %1106 = vmatpush1.msra.mxu0 %v1065
    %1107 = vmatprep.subr.mxu0 %v1069
    %1108 = vmatpush1.msra.mxu0 %v1068
    %1109 = vmatprep.subr.mxu0 %v1072
    %1110 = vmatpush1.msra.mxu0 %v1071
    %1111 = vmatprep.subr.mxu0 %v1075
    %1112 = vmatpush1.msra.mxu0 %v1074
    %1113 = vmatprep.subr.mxu0 %v1078
    %1114 = vmatpush1.msra.mxu0 %v1077
    %1115 = vmatprep.subr.mxu0 %v1081
    %1116 = vmatpush1.msra.mxu0 %v1080
    %1117 = vmatprep.subr.mxu0 %v1084
    %1118 = vmatpush1.msra.mxu0 %v1083
    %1119 = vmatprep.subr.mxu0 %v1087
    %1120 = vmatpush1.msra.mxu0 %v1086
    %1121 = vmatprep.subr.mxu0 0.0
    %1122 = vmatpush1.msra.mxu0 0.0
    %1123 = vmatprep.subr.mxu0 0.0
    %1124 = vmatpush1.msra.mxu0 0.0
    %1125 = vmatprep.subr.mxu0 0.0
    %1126 = vmatpush1.msra.mxu0 0.0
    %1127 = vmatprep.subr.mxu0 0.0
    %1128 = vmatpush1.msra.mxu0 0.0
    %1129 = vmatprep.subr.mxu0 0.0
    %1130 = vmatpush1.msra.mxu0 0.0
    %1131 = vmatprep.subr.mxu0 0.0
    %1132 = vmatpush1.msra.mxu0 0.0
    %1133 = vmatprep.subr.mxu0 0.0
    %1134 = vmatpush1.msra.mxu0 0.0
    %1135 = vmatprep.subr.mxu0 0.0
    %1136 = vmatpush1.msra.mxu0 0.0
    %1137 = vmatprep.subr.mxu0 0.0
    %1138 = vmatpush1.msra.mxu0 0.0
    %1139 = vmatprep.subr.mxu0 0.0
    %1140 = vmatpush1.msra.mxu0 0.0
    %1141 = vmatprep.subr.mxu0 0.0
    %1142 = vmatpush1.msra.mxu0 0.0
    %1143 = vmatprep.subr.mxu0 0.0
    %1144 = vmatpush1.msra.mxu0 0.0
    %1145 = vmatprep.subr.mxu0 0.0
    %1146 = vmatpush1.msra.mxu0 0.0
    %1147 = vmatprep.subr.mxu0 0.0
    %1148 = vmatpush1.msra.mxu0 0.0
    %1149 = vmatprep.subr.mxu0 0.0
    %1150 = vmatpush1.msra.mxu0 0.0
    %1151 = vmatprep.subr.mxu0 0.0
    %1152 = vmatpush1.msra.mxu0 0.0
    %1153 = vmatprep.mubr.f32.mxu0 0.0
    %1154 = vmatmul.mubr.f32.gmra.mrb[0].mxu0 %v1036
    %v1155 = vpop.f32.mrb[0].mxu0
    %v1156 = vadd.f32 0.0, %v1155
    %v1157 = vpop.f32.mrb[0].mxu0
    %v1158 = vadd.f32 0.0, %v1157
    %1159 = vdwg.mxu0
    %1160 = vmatprep.subr.mxu0 0.0
    %1161 = vmatpush1.msra.mxu0 %v1043
    %1162 = vmatprep.subr.mxu0 0.0
    %1163 = vmatpush1.msra.mxu0 %v1046
    %1164 = vmatprep.subr.mxu0 0.0
    %1165 = vmatpush1.msra.mxu0 %v1049
    %1166 = vmatprep.subr.mxu0 0.0
    %1167 = vmatpush1.msra.mxu0 %v1052
    %1168 = vmatprep.subr.mxu0 0.0
    %1169 = vmatpush1.msra.mxu0 %v1055
    %1170 = vmatprep.subr.mxu0 0.0
    %1171 = vmatpush1.msra.mxu0 %v1058
    %1172 = vmatprep.subr.mxu0 0.0
    %1173 = vmatpush1.msra.mxu0 %v1061
    %1174 = vmatprep.subr.mxu0 0.0
    %1175 = vmatpush1.msra.mxu0 %v1064
    %1176 = vmatprep.subr.mxu0 0.0
    %1177 = vmatpush1.msra.mxu0 %v1067
    %1178 = vmatprep.subr.mxu0 0.0
    %1179 = vmatpush1.msra.mxu0 %v1070
    %1180 = vmatprep.subr.mxu0 0.0
    %1181 = vmatpush1.msra.mxu0 %v1073
    %1182 = vmatprep.subr.mxu0 0.0
    %1183 = vmatpush1.msra.mxu0 %v1076
    %1184 = vmatprep.subr.mxu0 0.0
    %1185 = vmatpush1.msra.mxu0 %v1079
    %1186 = vmatprep.subr.mxu0 0.0
    %1187 = vmatpush1.msra.mxu0 %v1082
    %1188 = vmatprep.subr.mxu0 0.0
    %1189 = vmatpush1.msra.mxu0 %v1085
    %1190 = vmatprep.subr.mxu0 0.0
    %1191 = vmatpush1.msra.mxu0 %v1088
    %1192 = vmatprep.subr.mxu0 0.0
    %1193 = vmatpush1.msra.mxu0 0.0
    %1194 = vmatprep.subr.mxu0 0.0
    %1195 = vmatpush1.msra.mxu0 0.0
    %1196 = vmatprep.subr.mxu0 0.0
    %1197 = vmatpush1.msra.mxu0 0.0
    %1198 = vmatprep.subr.mxu0 0.0
    %1199 = vmatpush1.msra.mxu0 0.0
    %1200 = vmatprep.subr.mxu0 0.0
    %1201 = vmatpush1.msra.mxu0 0.0
    %1202 = vmatprep.subr.mxu0 0.0
    %1203 = vmatpush1.msra.mxu0 0.0
    %1204 = vmatprep.subr.mxu0 0.0
    %1205 = vmatpush1.msra.mxu0 0.0
    %1206 = vmatprep.subr.mxu0 0.0
    %1207 = vmatpush1.msra.mxu0 0.0
    %1208 = vmatprep.subr.mxu0 0.0
    %1209 = vmatpush1.msra.mxu0 0.0
    %1210 = vmatprep.subr.mxu0 0.0
    %1211 = vmatpush1.msra.mxu0 0.0
    %1212 = vmatprep.subr.mxu0 0.0
    %1213 = vmatpush1.msra.mxu0 0.0
    %1214 = vmatprep.subr.mxu0 0.0
    %1215 = vmatpush1.msra.mxu0 0.0
    %1216 = vmatprep.subr.mxu0 0.0
    %1217 = vmatpush1.msra.mxu0 0.0
    %1218 = vmatprep.subr.mxu0 0.0
    %1219 = vmatpush1.msra.mxu0 0.0
    %1220 = vmatprep.subr.mxu0 0.0
    %1221 = vmatpush1.msra.mxu0 0.0
    %1222 = vmatprep.subr.mxu0 0.0
    %1223 = vmatpush1.msra.mxu0 0.0
    %1224 = vmatprep.mubr.f32.mxu0 0.0
    %1225 = vmatmul.mubr.f32.gmra.mrb[0].mxu0 %v1036
    %v1226 = vpop.f32.mrb[0].mxu0
    %v1227 = vadd.f32 0.0, %v1226
    %v1228 = vpop.f32.mrb[0].mxu0
    %1229 = vdwg.mxu0
    %v1230 = vadd.f32 %v1038, %v1156
    %v1231 = vxor.u32 %v1230, 2147483648
    %v1232 = vmul.f32 %v1231, 1.442695
    %v1233 = vpow.pop %v1232
    %v1234 = vadd.f32 %v1233, 1.0
    %v1235 = vrcp.pop %v1234
    %v1236 = vmul.f32 1.0, %v1235
    %v1237 = vadd.f32 %v1039, %v1158
    %v1238 = vxor.u32 %v1237, 2147483648
    %v1239 = vmul.f32 %v1238, 1.442695
    %v1240 = vpow.pop %v1239
    %v1241 = vadd.f32 %v1240, 1.0
    %v1242 = vrcp.pop %v1241
    %v1243 = vmul.f32 1.0, %v1242
    %v1244 = vld [vmem:[%s7] sm:$0x1]
    %v1246 = vlaneseq
    %v1247 = vshrl.u32 %v1246, 7
    %v1248 = vsub.s32 0, %v1247
    %v1249 = vrot.slane %v1244, %v1248
    %v1251 = vadd.f32 %v1227, %v1249
    %v1252 = vmul.f32 %v1236, %v1251
    %v1253 = vadd.f32 %v1040, %v1252
    %v1254 = vtanh.pop %v1253
    %v1255 = vsub.f32 1.0, %v1243
    %v1256 = vmul.f32 %v1255, %v1254
    %v1257 = vmul.f32 %v1243, %v1036
    %v1258 = vadd.f32 %v1256, %v1257
    %s1259 = scalar_lea.vmem [#allocation4], 16
    %1260 = vst [vmem:[%s1259] sm:$0xff] %v1258
    %s1261 = sadd.s32 %s576, 2
    %p1262 = scmp.lt.s32.totalorder %s1261, 8
    // Predicated region
    $region78: #{tpu_custom_call.1} parent=1 // pred_check
      %p1263 = pneg %p1262
    $region79: #{tpu_custom_call.1} parent=1 // pred_check_branch
      %1265 = sbr.rel (%p1263) target = $region81
    $region80: #{tpu_custom_call.1} parent=1 // pred_region
      %1266 = vst [vmem:[#allocation2] sm:$0xff] %v1258
    $region81: #{tpu_custom_call.1} parent=1 // pred_fallthru
      _
    %v1267 = vld [vmem:[#allocation2] sm:$0xff]
    %s1268 = scalar_lea.vmem [#allocation3], 72
    %v1269 = vld [vmem:[%s1268] sm:$0xff]
    %v1270 = vld [vmem:[%s1268 + $0x8] sm:$0xff]
    %v1271 = vld [vmem:[%s1268 + $0x10] sm:$0xff]
    %v1272 = vld [vmem:[#allocation13] sm:$0xff]
    %v1273 = vld [vmem:[#allocation13 + $0x8] sm:$0xff]
    %v1274 = vld [vmem:[#allocation13 + $0x10] sm:$0xff]
    %v1275 = vld [vmem:[#allocation13 + $0x18] sm:$0xff]
    %v1276 = vld [vmem:[#allocation13 + $0x20] sm:$0xff]
    %v1277 = vld [vmem:[#allocation13 + $0x28] sm:$0xff]
    %v1278 = vld [vmem:[#allocation13 + $0x30] sm:$0xff]
    %v1279 = vld [vmem:[#allocation13 + $0x38] sm:$0xff]
    %v1280 = vld [vmem:[#allocation13 + $0x40] sm:$0xff]
    %v1281 = vld [vmem:[#allocation13 + $0x48] sm:$0xff]
    %v1282 = vld [vmem:[#allocation13 + $0x50] sm:$0xff]
    %v1283 = vld [vmem:[#allocation13 + $0x58] sm:$0xff]
    %v1284 = vld [vmem:[#allocation13 + $0x60] sm:$0xff]
    %v1285 = vld [vmem:[#allocation13 + $0x68] sm:$0xff]
    %v1286 = vld [vmem:[#allocation13 + $0x70] sm:$0xff]
    %v1287 = vld [vmem:[#allocation13 + $0x78] sm:$0xff]
    %v1288 = vld [vmem:[#allocation13 + $0x80] sm:$0xff]
    %v1289 = vld [vmem:[#allocation13 + $0x88] sm:$0xff]
    %v1290 = vld [vmem:[#allocation13 + $0x90] sm:$0xff]
    %v1291 = vld [vmem:[#allocation13 + $0x98] sm:$0xff]
    %v1292 = vld [vmem:[#allocation13 + $0xa0] sm:$0xff]
    %v1293 = vld [vmem:[#allocation13 + $0xa8] sm:$0xff]
    %v1294 = vld [vmem:[#allocation13 + $0xb0] sm:$0xff]
    %v1295 = vld [vmem:[#allocation13 + $0xb8] sm:$0xff]
    %v1296 = vld [vmem:[#allocation13 + $0xc0] sm:$0xff]
    %v1297 = vld [vmem:[#allocation13 + $0xc8] sm:$0xff]
    %v1298 = vld [vmem:[#allocation13 + $0xd0] sm:$0xff]
    %v1299 = vld [vmem:[#allocation13 + $0xd8] sm:$0xff]
    %v1300 = vld [vmem:[#allocation13 + $0xe0] sm:$0xff]
    %v1301 = vld [vmem:[#allocation13 + $0xe8] sm:$0xff]
    %v1302 = vld [vmem:[#allocation13 + $0xf0] sm:$0xff]
    %v1303 = vld [vmem:[#allocation13 + $0xf8] sm:$0xff]
    %v1304 = vld [vmem:[#allocation13 + $0x100] sm:$0xff]
    %v1305 = vld [vmem:[#allocation13 + $0x108] sm:$0xff]
    %v1306 = vld [vmem:[#allocation13 + $0x110] sm:$0xff]
    %v1307 = vld [vmem:[#allocation13 + $0x118] sm:$0xff]
    %v1308 = vld [vmem:[#allocation13 + $0x120] sm:$0xff]
    %v1309 = vld [vmem:[#allocation13 + $0x128] sm:$0xff]
    %v1310 = vld [vmem:[#allocation13 + $0x130] sm:$0xff]
    %v1311 = vld [vmem:[#allocation13 + $0x138] sm:$0xff]
    %v1312 = vld [vmem:[#allocation13 + $0x140] sm:$0xff]
    %v1313 = vld [vmem:[#allocation13 + $0x148] sm:$0xff]
    %v1314 = vld [vmem:[#allocation13 + $0x150] sm:$0xff]
    %v1315 = vld [vmem:[#allocation13 + $0x158] sm:$0xff]
    %v1316 = vld [vmem:[#allocation13 + $0x160] sm:$0xff]
    %v1317 = vld [vmem:[#allocation13 + $0x168] sm:$0xff]
    %v1318 = vld [vmem:[#allocation13 + $0x170] sm:$0xff]
    %v1319 = vld [vmem:[#allocation13 + $0x178] sm:$0xff]
    %1320 = vmatprep.subr.mxu0 %v1273
    %1321 = vmatpush1.msra.mxu0 %v1272
    %1322 = vmatprep.subr.mxu0 %v1276
    %1323 = vmatpush1.msra.mxu0 %v1275
    %1324 = vmatprep.subr.mxu0 %v1279
    %1325 = vmatpush1.msra.mxu0 %v1278
    %1326 = vmatprep.subr.mxu0 %v1282
    %1327 = vmatpush1.msra.mxu0 %v1281
    %1328 = vmatprep.subr.mxu0 %v1285
    %1329 = vmatpush1.msra.mxu0 %v1284
    %1330 = vmatprep.subr.mxu0 %v1288
    %1331 = vmatpush1.msra.mxu0 %v1287
    %1332 = vmatprep.subr.mxu0 %v1291
    %1333 = vmatpush1.msra.mxu0 %v1290
    %1334 = vmatprep.subr.mxu0 %v1294
    %1335 = vmatpush1.msra.mxu0 %v1293
    %1336 = vmatprep.subr.mxu0 %v1297
    %1337 = vmatpush1.msra.mxu0 %v1296
    %1338 = vmatprep.subr.mxu0 %v1300
    %1339 = vmatpush1.msra.mxu0 %v1299
    %1340 = vmatprep.subr.mxu0 %v1303
    %1341 = vmatpush1.msra.mxu0 %v1302
    %1342 = vmatprep.subr.mxu0 %v1306
    %1343 = vmatpush1.msra.mxu0 %v1305
    %1344 = vmatprep.subr.mxu0 %v1309
    %1345 = vmatpush1.msra.mxu0 %v1308
    %1346 = vmatprep.subr.mxu0 %v1312
    %1347 = vmatpush1.msra.mxu0 %v1311
    %1348 = vmatprep.subr.mxu0 %v1315
    %1349 = vmatpush1.msra.mxu0 %v1314
    %1350 = vmatprep.subr.mxu0 %v1318
    %1351 = vmatpush1.msra.mxu0 %v1317
    %1352 = vmatprep.subr.mxu0 0.0
    %1353 = vmatpush1.msra.mxu0 0.0
    %1354 = vmatprep.subr.mxu0 0.0
    %1355 = vmatpush1.msra.mxu0 0.0
    %1356 = vmatprep.subr.mxu0 0.0
    %1357 = vmatpush1.msra.mxu0 0.0
    %1358 = vmatprep.subr.mxu0 0.0
    %1359 = vmatpush1.msra.mxu0 0.0
    %1360 = vmatprep.subr.mxu0 0.0
    %1361 = vmatpush1.msra.mxu0 0.0
    %1362 = vmatprep.subr.mxu0 0.0
    %1363 = vmatpush1.msra.mxu0 0.0
    %1364 = vmatprep.subr.mxu0 0.0
    %1365 = vmatpush1.msra.mxu0 0.0
    %1366 = vmatprep.subr.mxu0 0.0
    %1367 = vmatpush1.msra.mxu0 0.0
    %1368 = vmatprep.subr.mxu0 0.0
    %1369 = vmatpush1.msra.mxu0 0.0
    %1370 = vmatprep.subr.mxu0 0.0
    %1371 = vmatpush1.msra.mxu0 0.0
    %1372 = vmatprep.subr.mxu0 0.0
    %1373 = vmatpush1.msra.mxu0 0.0
    %1374 = vmatprep.subr.mxu0 0.0
    %1375 = vmatpush1.msra.mxu0 0.0
    %1376 = vmatprep.subr.mxu0 0.0
    %1377 = vmatpush1.msra.mxu0 0.0
    %1378 = vmatprep.subr.mxu0 0.0
    %1379 = vmatpush1.msra.mxu0 0.0
    %1380 = vmatprep.subr.mxu0 0.0
    %1381 = vmatpush1.msra.mxu0 0.0
    %1382 = vmatprep.subr.mxu0 0.0
    %1383 = vmatpush1.msra.mxu0 0.0
    %1384 = vmatprep.mubr.f32.mxu0 0.0
    %1385 = vmatmul.mubr.f32.gmra.mrb[0].mxu0 %v1267
    %v1386 = vpop.f32.mrb[0].mxu0
    %v1387 = vadd.f32 0.0, %v1386
    %v1388 = vpop.f32.mrb[0].mxu0
    %v1389 = vadd.f32 0.0, %v1388
    %1390 = vdwg.mxu0
    %1391 = vmatprep.subr.mxu0 0.0
    %1392 = vmatpush1.msra.mxu0 %v1274
    %1393 = vmatprep.subr.mxu0 0.0
    %1394 = vmatpush1.msra.mxu0 %v1277
    %1395 = vmatprep.subr.mxu0 0.0
    %1396 = vmatpush1.msra.mxu0 %v1280
    %1397 = vmatprep.subr.mxu0 0.0
    %1398 = vmatpush1.msra.mxu0 %v1283
    %1399 = vmatprep.subr.mxu0 0.0
    %1400 = vmatpush1.msra.mxu0 %v1286
    %1401 = vmatprep.subr.mxu0 0.0
    %1402 = vmatpush1.msra.mxu0 %v1289
    %1403 = vmatprep.subr.mxu0 0.0
    %1404 = vmatpush1.msra.mxu0 %v1292
    %1405 = vmatprep.subr.mxu0 0.0
    %1406 = vmatpush1.msra.mxu0 %v1295
    %1407 = vmatprep.subr.mxu0 0.0
    %1408 = vmatpush1.msra.mxu0 %v1298
    %1409 = vmatprep.subr.mxu0 0.0
    %1410 = vmatpush1.msra.mxu0 %v1301
    %1411 = vmatprep.subr.mxu0 0.0
    %1412 = vmatpush1.msra.mxu0 %v1304
    %1413 = vmatprep.subr.mxu0 0.0
    %1414 = vmatpush1.msra.mxu0 %v1307
    %1415 = vmatprep.subr.mxu0 0.0
    %1416 = vmatpush1.msra.mxu0 %v1310
    %1417 = vmatprep.subr.mxu0 0.0
    %1418 = vmatpush1.msra.mxu0 %v1313
    %1419 = vmatprep.subr.mxu0 0.0
    %1420 = vmatpush1.msra.mxu0 %v1316
    %1421 = vmatprep.subr.mxu0 0.0
    %1422 = vmatpush1.msra.mxu0 %v1319
    %1423 = vmatprep.subr.mxu0 0.0
    %1424 = vmatpush1.msra.mxu0 0.0
    %1425 = vmatprep.subr.mxu0 0.0
    %1426 = vmatpush1.msra.mxu0 0.0
    %1427 = vmatprep.subr.mxu0 0.0
    %1428 = vmatpush1.msra.mxu0 0.0
    %1429 = vmatprep.subr.mxu0 0.0
    %1430 = vmatpush1.msra.mxu0 0.0
    %1431 = vmatprep.subr.mxu0 0.0
    %1432 = vmatpush1.msra.mxu0 0.0
    %1433 = vmatprep.subr.mxu0 0.0
    %1434 = vmatpush1.msra.mxu0 0.0
    %1435 = vmatprep.subr.mxu0 0.0
    %1436 = vmatpush1.msra.mxu0 0.0
    %1437 = vmatprep.subr.mxu0 0.0
    %1438 = vmatpush1.msra.mxu0 0.0
    %1439 = vmatprep.subr.mxu0 0.0
    %1440 = vmatpush1.msra.mxu0 0.0
    %1441 = vmatprep.subr.mxu0 0.0
    %1442 = vmatpush1.msra.mxu0 0.0
    %1443 = vmatprep.subr.mxu0 0.0
    %1444 = vmatpush1.msra.mxu0 0.0
    %1445 = vmatprep.subr.mxu0 0.0
    %1446 = vmatpush1.msra.mxu0 0.0
    %1447 = vmatprep.subr.mxu0 0.0
    %1448 = vmatpush1.msra.mxu0 0.0
    %1449 = vmatprep.subr.mxu0 0.0
    %1450 = vmatpush1.msra.mxu0 0.0
    %1451 = vmatprep.subr.mxu0 0.0
    %1452 = vmatpush1.msra.mxu0 0.0
    %1453 = vmatprep.subr.mxu0 0.0
    %1454 = vmatpush1.msra.mxu0 0.0
    %1455 = vmatprep.mubr.f32.mxu0 0.0
    %1456 = vmatmul.mubr.f32.gmra.mrb[0].mxu0 %v1267
    %v1457 = vpop.f32.mrb[0].mxu0
    %v1458 = vadd.f32 0.0, %v1457
    %v1459 = vpop.f32.mrb[0].mxu0
    %1460 = vdwg.mxu0
    %v1461 = vadd.f32 %v1269, %v1387
    %v1462 = vxor.u32 %v1461, 2147483648
    %v1463 = vmul.f32 %v1462, 1.442695
    %v1464 = vpow.pop %v1463
    %v1465 = vadd.f32 %v1464, 1.0
    %v1466 = vrcp.pop %v1465
    %v1467 = vmul.f32 1.0, %v1466
    %v1468 = vadd.f32 %v1270, %v1389
    %v1469 = vxor.u32 %v1468, 2147483648
    %v1470 = vmul.f32 %v1469, 1.442695
    %v1471 = vpow.pop %v1470
    %v1472 = vadd.f32 %v1471, 1.0
    %v1473 = vrcp.pop %v1472
    %v1474 = vmul.f32 1.0, %v1473
    %v1475 = vld [vmem:[%s7] sm:$0x1]
    %v1477 = vlaneseq
    %v1478 = vshrl.u32 %v1477, 7
    %v1479 = vsub.s32 0, %v1478
    %v1480 = vrot.slane %v1475, %v1479
    %v1482 = vadd.f32 %v1458, %v1480
    %v1483 = vmul.f32 %v1467, %v1482
    %v1484 = vadd.f32 %v1271, %v1483
    %v1485 = vtanh.pop %v1484
    %v1486 = vsub.f32 1.0, %v1474
    %v1487 = vmul.f32 %v1486, %v1485
    %v1488 = vmul.f32 %v1474, %v1267
    %v1489 = vadd.f32 %v1487, %v1488
    %s1490 = scalar_lea.vmem [#allocation4], 24
    %1491 = vst [vmem:[%s1490] sm:$0xff] %v1489
    %s1492 = sadd.s32 %s576, 3
    %p1493 = scmp.lt.s32.totalorder %s1492, 8
    // Predicated region
    $region82: #{tpu_custom_call.1} parent=1 // pred_check
      %p1494 = pneg %p1493
    $region83: #{tpu_custom_call.1} parent=1 // pred_check_branch
      %1496 = sbr.rel (%p1494) target = $region85
    $region84: #{tpu_custom_call.1} parent=1 // pred_region
      %1497 = vst [vmem:[#allocation2] sm:$0xff] %v1489
    $region85: #{tpu_custom_call.1} parent=1 // pred_fallthru
      _
    %v1498 = vld [vmem:[#allocation2] sm:$0xff]
    %s1499 = scalar_lea.vmem [#allocation3], 96
    %v1500 = vld [vmem:[%s1499] sm:$0xff]
    %v1501 = vld [vmem:[%s1499 + $0x8] sm:$0xff]
    %v1502 = vld [vmem:[%s1499 + $0x10] sm:$0xff]
    %v1503 = vld [vmem:[#allocation13] sm:$0xff]
    %v1504 = vld [vmem:[#allocation13 + $0x8] sm:$0xff]
    %v1505 = vld [vmem:[#allocation13 + $0x10] sm:$0xff]
    %v1506 = vld [vmem:[#allocation13 + $0x18] sm:$0xff]
    %v1507 = vld [vmem:[#allocation13 + $0x20] sm:$0xff]
    %v1508 = vld [vmem:[#allocation13 + $0x28] sm:$0xff]
    %v1509 = vld [vmem:[#allocation13 + $0x30] sm:$0xff]
    %v1510 = vld [vmem:[#allocation13 + $0x38] sm:$0xff]
    %v1511 = vld [vmem:[#allocation13 + $0x40] sm:$0xff]
    %v1512 = vld [vmem:[#allocation13 + $0x48] sm:$0xff]
    %v1513 = vld [vmem:[#allocation13 + $0x50] sm:$0xff]
    %v1514 = vld [vmem:[#allocation13 + $0x58] sm:$0xff]
    %v1515 = vld [vmem:[#allocation13 + $0x60] sm:$0xff]
    %v1516 = vld [vmem:[#allocation13 + $0x68] sm:$0xff]
    %v1517 = vld [vmem:[#allocation13 + $0x70] sm:$0xff]
    %v1518 = vld [vmem:[#allocation13 + $0x78] sm:$0xff]
    %v1519 = vld [vmem:[#allocation13 + $0x80] sm:$0xff]
    %v1520 = vld [vmem:[#allocation13 + $0x88] sm:$0xff]
    %v1521 = vld [vmem:[#allocation13 + $0x90] sm:$0xff]
    %v1522 = vld [vmem:[#allocation13 + $0x98] sm:$0xff]
    %v1523 = vld [vmem:[#allocation13 + $0xa0] sm:$0xff]
    %v1524 = vld [vmem:[#allocation13 + $0xa8] sm:$0xff]
    %v1525 = vld [vmem:[#allocation13 + $0xb0] sm:$0xff]
    %v1526 = vld [vmem:[#allocation13 + $0xb8] sm:$0xff]
    %v1527 = vld [vmem:[#allocation13 + $0xc0] sm:$0xff]
    %v1528 = vld [vmem:[#allocation13 + $0xc8] sm:$0xff]
    %v1529 = vld [vmem:[#allocation13 + $0xd0] sm:$0xff]
    %v1530 = vld [vmem:[#allocation13 + $0xd8] sm:$0xff]
    %v1531 = vld [vmem:[#allocation13 + $0xe0] sm:$0xff]
    %v1532 = vld [vmem:[#allocation13 + $0xe8] sm:$0xff]
    %v1533 = vld [vmem:[#allocation13 + $0xf0] sm:$0xff]
    %v1534 = vld [vmem:[#allocation13 + $0xf8] sm:$0xff]
    %v1535 = vld [vmem:[#allocation13 + $0x100] sm:$0xff]
    %v1536 = vld [vmem:[#allocation13 + $0x108] sm:$0xff]
    %v1537 = vld [vmem:[#allocation13 + $0x110] sm:$0xff]
    %v1538 = vld [vmem:[#allocation13 + $0x118] sm:$0xff]
    %v1539 = vld [vmem:[#allocation13 + $0x120] sm:$0xff]
    %v1540 = vld [vmem:[#allocation13 + $0x128] sm:$0xff]
    %v1541 = vld [vmem:[#allocation13 + $0x130] sm:$0xff]
    %v1542 = vld [vmem:[#allocation13 + $0x138] sm:$0xff]
    %v1543 = vld [vmem:[#allocation13 + $0x140] sm:$0xff]
    %v1544 = vld [vmem:[#allocation13 + $0x148] sm:$0xff]
    %v1545 = vld [vmem:[#allocation13 + $0x150] sm:$0xff]
    %v1546 = vld [vmem:[#allocation13 + $0x158] sm:$0xff]
    %v1547 = vld [vmem:[#allocation13 + $0x160] sm:$0xff]
    %v1548 = vld [vmem:[#allocation13 + $0x168] sm:$0xff]
    %v1549 = vld [vmem:[#allocation13 + $0x170] sm:$0xff]
    %v1550 = vld [vmem:[#allocation13 + $0x178] sm:$0xff]
    %1551 = vmatprep.subr.mxu0 %v1504
    %1552 = vmatpush1.msra.mxu0 %v1503
    %1553 = vmatprep.subr.mxu0 %v1507
    %1554 = vmatpush1.msra.mxu0 %v1506
    %1555 = vmatprep.subr.mxu0 %v1510
    %1556 = vmatpush1.msra.mxu0 %v1509
    %1557 = vmatprep.subr.mxu0 %v1513
    %1558 = vmatpush1.msra.mxu0 %v1512
    %1559 = vmatprep.subr.mxu0 %v1516
    %1560 = vmatpush1.msra.mxu0 %v1515
    %1561 = vmatprep.subr.mxu0 %v1519
    %1562 = vmatpush1.msra.mxu0 %v1518
    %1563 = vmatprep.subr.mxu0 %v1522
    %1564 = vmatpush1.msra.mxu0 %v1521
    %1565 = vmatprep.subr.mxu0 %v1525
    %1566 = vmatpush1.msra.mxu0 %v1524
    %1567 = vmatprep.subr.mxu0 %v1528
    %1568 = vmatpush1.msra.mxu0 %v1527
    %1569 = vmatprep.subr.mxu0 %v1531
    %1570 = vmatpush1.msra.mxu0 %v1530
    %1571 = vmatprep.subr.mxu0 %v1534
    %1572 = vmatpush1.msra.mxu0 %v1533
    %1573 = vmatprep.subr.mxu0 %v1537
    %1574 = vmatpush1.msra.mxu0 %v1536
    %1575 = vmatprep.subr.mxu0 %v1540
    %1576 = vmatpush1.msra.mxu0 %v1539
    %1577 = vmatprep.subr.mxu0 %v1543
    %1578 = vmatpush1.msra.mxu0 %v1542
    %1579 = vmatprep.subr.mxu0 %v1546
    %1580 = vmatpush1.msra.mxu0 %v1545
    %1581 = vmatprep.subr.mxu0 %v1549
    %1582 = vmatpush1.msra.mxu0 %v1548
    %1583 = vmatprep.subr.mxu0 0.0
    %1584 = vmatpush1.msra.mxu0 0.0
    %1585 = vmatprep.subr.mxu0 0.0
    %1586 = vmatpush1.msra.mxu0 0.0
    %1587 = vmatprep.subr.mxu0 0.0
    %1588 = vmatpush1.msra.mxu0 0.0
    %1589 = vmatprep.subr.mxu0 0.0
    %1590 = vmatpush1.msra.mxu0 0.0
    %1591 = vmatprep.subr.mxu0 0.0
    %1592 = vmatpush1.msra.mxu0 0.0
    %1593 = vmatprep.subr.mxu0 0.0
    %1594 = vmatpush1.msra.mxu0 0.0
    %1595 = vmatprep.subr.mxu0 0.0
    %1596 = vmatpush1.msra.mxu0 0.0
    %1597 = vmatprep.subr.mxu0 0.0
    %1598 = vmatpush1.msra.mxu0 0.0
    %1599 = vmatprep.subr.mxu0 0.0
    %1600 = vmatpush1.msra.mxu0 0.0
    %1601 = vmatprep.subr.mxu0 0.0
    %1602 = vmatpush1.msra.mxu0 0.0
    %1603 = vmatprep.subr.mxu0 0.0
    %1604 = vmatpush1.msra.mxu0 0.0
    %1605 = vmatprep.subr.mxu0 0.0
    %1606 = vmatpush1.msra.mxu0 0.0
    %1607 = vmatprep.subr.mxu0 0.0
    %1608 = vmatpush1.msra.mxu0 0.0
    %1609 = vmatprep.subr.mxu0 0.0
    %1610 = vmatpush1.msra.mxu0 0.0
    %1611 = vmatprep.subr.mxu0 0.0
    %1612 = vmatpush1.msra.mxu0 0.0
    %1613 = vmatprep.subr.mxu0 0.0
    %1614 = vmatpush1.msra.mxu0 0.0
    %1615 = vmatprep.mubr.f32.mxu0 0.0
    %1616 = vmatmul.mubr.f32.gmra.mrb[0].mxu0 %v1498
    %v1617 = vpop.f32.mrb[0].mxu0
    %v1618 = vadd.f32 0.0, %v1617
    %v1619 = vpop.f32.mrb[0].mxu0
    %v1620 = vadd.f32 0.0, %v1619
    %1621 = vdwg.mxu0
    %1622 = vmatprep.subr.mxu0 0.0
    %1623 = vmatpush1.msra.mxu0 %v1505
    %1624 = vmatprep.subr.mxu0 0.0
    %1625 = vmatpush1.msra.mxu0 %v1508
    %1626 = vmatprep.subr.mxu0 0.0
    %1627 = vmatpush1.msra.mxu0 %v1511
    %1628 = vmatprep.subr.mxu0 0.0
    %1629 = vmatpush1.msra.mxu0 %v1514
    %1630 = vmatprep.subr.mxu0 0.0
    %1631 = vmatpush1.msra.mxu0 %v1517
    %1632 = vmatprep.subr.mxu0 0.0
    %1633 = vmatpush1.msra.mxu0 %v1520
    %1634 = vmatprep.subr.mxu0 0.0
    %1635 = vmatpush1.msra.mxu0 %v1523
    %1636 = vmatprep.subr.mxu0 0.0
    %1637 = vmatpush1.msra.mxu0 %v1526
    %1638 = vmatprep.subr.mxu0 0.0
    %1639 = vmatpush1.msra.mxu0 %v1529
    %1640 = vmatprep.subr.mxu0 0.0
    %1641 = vmatpush1.msra.mxu0 %v1532
    %1642 = vmatprep.subr.mxu0 0.0
    %1643 = vmatpush1.msra.mxu0 %v1535
    %1644 = vmatprep.subr.mxu0 0.0
    %1645 = vmatpush1.msra.mxu0 %v1538
    %1646 = vmatprep.subr.mxu0 0.0
    %1647 = vmatpush1.msra.mxu0 %v1541
    %1648 = vmatprep.subr.mxu0 0.0
    %1649 = vmatpush1.msra.mxu0 %v1544
    %1650 = vmatprep.subr.mxu0 0.0
    %1651 = vmatpush1.msra.mxu0 %v1547
    %1652 = vmatprep.subr.mxu0 0.0
    %1653 = vmatpush1.msra.mxu0 %v1550
    %1654 = vmatprep.subr.mxu0 0.0
    %1655 = vmatpush1.msra.mxu0 0.0
    %1656 = vmatprep.subr.mxu0 0.0
    %1657 = vmatpush1.msra.mxu0 0.0
    %1658 = vmatprep.subr.mxu0 0.0
    %1659 = vmatpush1.msra.mxu0 0.0
    %1660 = vmatprep.subr.mxu0 0.0
    %1661 = vmatpush1.msra.mxu0 0.0
    %1662 = vmatprep.subr.mxu0 0.0
    %1663 = vmatpush1.msra.mxu0 0.0
    %1664 = vmatprep.subr.mxu0 0.0
    %1665 = vmatpush1.msra.mxu0 0.0
    %1666 = vmatprep.subr.mxu0 0.0
    %1667 = vmatpush1.msra.mxu0 0.0
    %1668 = vmatprep.subr.mxu0 0.0
    %1669 = vmatpush1.msra.mxu0 0.0
    %1670 = vmatprep.subr.mxu0 0.0
    %1671 = vmatpush1.msra.mxu0 0.0
    %1672 = vmatprep.subr.mxu0 0.0
    %1673 = vmatpush1.msra.mxu0 0.0
    %1674 = vmatprep.subr.mxu0 0.0
    %1675 = vmatpush1.msra.mxu0 0.0
    %1676 = vmatprep.subr.mxu0 0.0
    %1677 = vmatpush1.msra.mxu0 0.0
    %1678 = vmatprep.subr.mxu0 0.0
    %1679 = vmatpush1.msra.mxu0 0.0
    %1680 = vmatprep.subr.mxu0 0.0
    %1681 = vmatpush1.msra.mxu0 0.0
    %1682 = vmatprep.subr.mxu0 0.0
    %1683 = vmatpush1.msra.mxu0 0.0
    %1684 = vmatprep.subr.mxu0 0.0
    %1685 = vmatpush1.msra.mxu0 0.0
    %1686 = vmatprep.mubr.f32.mxu0 0.0
    %1687 = vmatmul.mubr.f32.gmra.mrb[0].mxu0 %v1498
    %v1688 = vpop.f32.mrb[0].mxu0
    %v1689 = vadd.f32 0.0, %v1688
    %v1690 = vpop.f32.mrb[0].mxu0
    %1691 = vdwg.mxu0
    %v1692 = vadd.f32 %v1500, %v1618
    %v1693 = vxor.u32 %v1692, 2147483648
    %v1694 = vmul.f32 %v1693, 1.442695
    %v1695 = vpow.pop %v1694
    %v1696 = vadd.f32 %v1695, 1.0
    %v1697 = vrcp.pop %v1696
    %v1698 = vmul.f32 1.0, %v1697
    %v1699 = vadd.f32 %v1501, %v1620
    %v1700 = vxor.u32 %v1699, 2147483648
    %v1701 = vmul.f32 %v1700, 1.442695
    %v1702 = vpow.pop %v1701
    %v1703 = vadd.f32 %v1702, 1.0
    %v1704 = vrcp.pop %v1703
    %v1705 = vmul.f32 1.0, %v1704
    %v1706 = vld [vmem:[%s7] sm:$0x1]
    %v1708 = vlaneseq
    %v1709 = vshrl.u32 %v1708, 7
    %v1710 = vsub.s32 0, %v1709
    %v1711 = vrot.slane %v1706, %v1710
    %v1713 = vadd.f32 %v1689, %v1711
    %v1714 = vmul.f32 %v1698, %v1713
    %v1715 = vadd.f32 %v1502, %v1714
    %v1716 = vtanh.pop %v1715
    %v1717 = vsub.f32 1.0, %v1705
    %v1718 = vmul.f32 %v1717, %v1716
    %v1719 = vmul.f32 %v1705, %v1498
    %v1720 = vadd.f32 %v1718, %v1719
    %s1721 = scalar_lea.vmem [#allocation4], 32
    %1722 = vst [vmem:[%s1721] sm:$0xff] %v1720
    %s1723 = sadd.s32 %s576, 4
    %p1724 = scmp.lt.s32.totalorder %s1723, 8
    // Predicated region
    $region86: #{tpu_custom_call.1} parent=1 // pred_check
      %p1725 = pneg %p1724
    $region87: #{tpu_custom_call.1} parent=1 // pred_check_branch
      %1727 = sbr.rel (%p1725) target = $region89
    $region88: #{tpu_custom_call.1} parent=1 // pred_region
      %1728 = vst [vmem:[#allocation2] sm:$0xff] %v1720
    $region89: #{tpu_custom_call.1} parent=1 // pred_fallthru
      _
    %v1729 = vld [vmem:[#allocation2] sm:$0xff]
    %s1730 = scalar_lea.vmem [#allocation3], 120
    %v1731 = vld [vmem:[%s1730] sm:$0xff]
    %v1732 = vld [vmem:[%s1730 + $0x8] sm:$0xff]
    %v1733 = vld [vmem:[%s1730 + $0x10] sm:$0xff]
    %v1734 = vld [vmem:[#allocation13] sm:$0xff]
    %v1735 = vld [vmem:[#allocation13 + $0x8] sm:$0xff]
    %v1736 = vld [vmem:[#allocation13 + $0x10] sm:$0xff]
    %v1737 = vld [vmem:[#allocation13 + $0x18] sm:$0xff]
    %v1738 = vld [vmem:[#allocation13 + $0x20] sm:$0xff]
    %v1739 = vld [vmem:[#allocation13 + $0x28] sm:$0xff]
    %v1740 = vld [vmem:[#allocation13 + $0x30] sm:$0xff]
    %v1741 = vld [vmem:[#allocation13 + $0x38] sm:$0xff]
    %v1742 = vld [vmem:[#allocation13 + $0x40] sm:$0xff]
    %v1743 = vld [vmem:[#allocation13 + $0x48] sm:$0xff]
    %v1744 = vld [vmem:[#allocation13 + $0x50] sm:$0xff]
    %v1745 = vld [vmem:[#allocation13 + $0x58] sm:$0xff]
    %v1746 = vld [vmem:[#allocation13 + $0x60] sm:$0xff]
    %v1747 = vld [vmem:[#allocation13 + $0x68] sm:$0xff]
    %v1748 = vld [vmem:[#allocation13 + $0x70] sm:$0xff]
    %v1749 = vld [vmem:[#allocation13 + $0x78] sm:$0xff]
    %v1750 = vld [vmem:[#allocation13 + $0x80] sm:$0xff]
    %v1751 = vld [vmem:[#allocation13 + $0x88] sm:$0xff]
    %v1752 = vld [vmem:[#allocation13 + $0x90] sm:$0xff]
    %v1753 = vld [vmem:[#allocation13 + $0x98] sm:$0xff]
    %v1754 = vld [vmem:[#allocation13 + $0xa0] sm:$0xff]
    %v1755 = vld [vmem:[#allocation13 + $0xa8] sm:$0xff]
    %v1756 = vld [vmem:[#allocation13 + $0xb0] sm:$0xff]
    %v1757 = vld [vmem:[#allocation13 + $0xb8] sm:$0xff]
    %v1758 = vld [vmem:[#allocation13 + $0xc0] sm:$0xff]
    %v1759 = vld [vmem:[#allocation13 + $0xc8] sm:$0xff]
    %v1760 = vld [vmem:[#allocation13 + $0xd0] sm:$0xff]
    %v1761 = vld [vmem:[#allocation13 + $0xd8] sm:$0xff]
    %v1762 = vld [vmem:[#allocation13 + $0xe0] sm:$0xff]
    %v1763 = vld [vmem:[#allocation13 + $0xe8] sm:$0xff]
    %v1764 = vld [vmem:[#allocation13 + $0xf0] sm:$0xff]
    %v1765 = vld [vmem:[#allocation13 + $0xf8] sm:$0xff]
    %v1766 = vld [vmem:[#allocation13 + $0x100] sm:$0xff]
    %v1767 = vld [vmem:[#allocation13 + $0x108] sm:$0xff]
    %v1768 = vld [vmem:[#allocation13 + $0x110] sm:$0xff]
    %v1769 = vld [vmem:[#allocation13 + $0x118] sm:$0xff]
    %v1770 = vld [vmem:[#allocation13 + $0x120] sm:$0xff]
    %v1771 = vld [vmem:[#allocation13 + $0x128] sm:$0xff]
    %v1772 = vld [vmem:[#allocation13 + $0x130] sm:$0xff]
    %v1773 = vld [vmem:[#allocation13 + $0x138] sm:$0xff]
    %v1774 = vld [vmem:[#allocation13 + $0x140] sm:$0xff]
    %v1775 = vld [vmem:[#allocation13 + $0x148] sm:$0xff]
    %v1776 = vld [vmem:[#allocation13 + $0x150] sm:$0xff]
    %v1777 = vld [vmem:[#allocation13 + $0x158] sm:$0xff]
    %v1778 = vld [vmem:[#allocation13 + $0x160] sm:$0xff]
    %v1779 = vld [vmem:[#allocation13 + $0x168] sm:$0xff]
    %v1780 = vld [vmem:[#allocation13 + $0x170] sm:$0xff]
    %v1781 = vld [vmem:[#allocation13 + $0x178] sm:$0xff]
    %1782 = vmatprep.subr.mxu0 %v1735
    %1783 = vmatpush1.msra.mxu0 %v1734
    %1784 = vmatprep.subr.mxu0 %v1738
    %1785 = vmatpush1.msra.mxu0 %v1737
    %1786 = vmatprep.subr.mxu0 %v1741
    %1787 = vmatpush1.msra.mxu0 %v1740
    %1788 = vmatprep.subr.mxu0 %v1744
    %1789 = vmatpush1.msra.mxu0 %v1743
    %1790 = vmatprep.subr.mxu0 %v1747
    %1791 = vmatpush1.msra.mxu0 %v1746
    %1792 = vmatprep.subr.mxu0 %v1750
    %1793 = vmatpush1.msra.mxu0 %v1749
    %1794 = vmatprep.subr.mxu0 %v1753
    %1795 = vmatpush1.msra.mxu0 %v1752
    %1796 = vmatprep.subr.mxu0 %v1756
    %1797 = vmatpush1.msra.mxu0 %v1755
    %1798 = vmatprep.subr.mxu0 %v1759
    %1799 = vmatpush1.msra.mxu0 %v1758
    %1800 = vmatprep.subr.mxu0 %v1762
    %1801 = vmatpush1.msra.mxu0 %v1761
    %1802 = vmatprep.subr.mxu0 %v1765
    %1803 = vmatpush1.msra.mxu0 %v1764
    %1804 = vmatprep.subr.mxu0 %v1768
    %1805 = vmatpush1.msra.mxu0 %v1767
    %1806 = vmatprep.subr.mxu0 %v1771
    %1807 = vmatpush1.msra.mxu0 %v1770
    %1808 = vmatprep.subr.mxu0 %v1774
    %1809 = vmatpush1.msra.mxu0 %v1773
    %1810 = vmatprep.subr.mxu0 %v1777
    %1811 = vmatpush1.msra.mxu0 %v1776
    %1812 = vmatprep.subr.mxu0 %v1780
    %1813 = vmatpush1.msra.mxu0 %v1779
    %1814 = vmatprep.subr.mxu0 0.0
    %1815 = vmatpush1.msra.mxu0 0.0
    %1816 = vmatprep.subr.mxu0 0.0
    %1817 = vmatpush1.msra.mxu0 0.0
    %1818 = vmatprep.subr.mxu0 0.0
    %1819 = vmatpush1.msra.mxu0 0.0
    %1820 = vmatprep.subr.mxu0 0.0
    %1821 = vmatpush1.msra.mxu0 0.0
    %1822 = vmatprep.subr.mxu0 0.0
    %1823 = vmatpush1.msra.mxu0 0.0
    %1824 = vmatprep.subr.mxu0 0.0
    %1825 = vmatpush1.msra.mxu0 0.0
    %1826 = vmatprep.subr.mxu0 0.0
    %1827 = vmatpush1.msra.mxu0 0.0
    %1828 = vmatprep.subr.mxu0 0.0
    %1829 = vmatpush1.msra.mxu0 0.0
    %1830 = vmatprep.subr.mxu0 0.0
    %1831 = vmatpush1.msra.mxu0 0.0
    %1832 = vmatprep.subr.mxu0 0.0
    %1833 = vmatpush1.msra.mxu0 0.0
    %1834 = vmatprep.subr.mxu0 0.0
    %1835 = vmatpush1.msra.mxu0 0.0
    %1836 = vmatprep.subr.mxu0 0.0
    %1837 = vmatpush1.msra.mxu0 0.0
    %1838 = vmatprep.subr.mxu0 0.0
    %1839 = vmatpush1.msra.mxu0 0.0
    %1840 = vmatprep.subr.mxu0 0.0
    %1841 = vmatpush1.msra.mxu0 0.0
    %1842 = vmatprep.subr.mxu0 0.0
    %1843 = vmatpush1.msra.mxu0 0.0
    %1844 = vmatprep.subr.mxu0 0.0
    %1845 = vmatpush1.msra.mxu0 0.0
    %1846 = vmatprep.mubr.f32.mxu0 0.0
    %1847 = vmatmul.mubr.f32.gmra.mrb[0].mxu0 %v1729
    %v1848 = vpop.f32.mrb[0].mxu0
    %v1849 = vadd.f32 0.0, %v1848
    %v1850 = vpop.f32.mrb[0].mxu0
    %v1851 = vadd.f32 0.0, %v1850
    %1852 = vdwg.mxu0
    %1853 = vmatprep.subr.mxu0 0.0
    %1854 = vmatpush1.msra.mxu0 %v1736
    %1855 = vmatprep.subr.mxu0 0.0
    %1856 = vmatpush1.msra.mxu0 %v1739
    %1857 = vmatprep.subr.mxu0 0.0
    %1858 = vmatpush1.msra.mxu0 %v1742
    %1859 = vmatprep.subr.mxu0 0.0
    %1860 = vmatpush1.msra.mxu0 %v1745
    %1861 = vmatprep.subr.mxu0 0.0
    %1862 = vmatpush1.msra.mxu0 %v1748
    %1863 = vmatprep.subr.mxu0 0.0
    %1864 = vmatpush1.msra.mxu0 %v1751
    %1865 = vmatprep.subr.mxu0 0.0
    %1866 = vmatpush1.msra.mxu0 %v1754
    %1867 = vmatprep.subr.mxu0 0.0
    %1868 = vmatpush1.msra.mxu0 %v1757
    %1869 = vmatprep.subr.mxu0 0.0
    %1870 = vmatpush1.msra.mxu0 %v1760
    %1871 = vmatprep.subr.mxu0 0.0
    %1872 = vmatpush1.msra.mxu0 %v1763
    %1873 = vmatprep.subr.mxu0 0.0
    %1874 = vmatpush1.msra.mxu0 %v1766
    %1875 = vmatprep.subr.mxu0 0.0
    %1876 = vmatpush1.msra.mxu0 %v1769
    %1877 = vmatprep.subr.mxu0 0.0
    %1878 = vmatpush1.msra.mxu0 %v1772
    %1879 = vmatprep.subr.mxu0 0.0
    %1880 = vmatpush1.msra.mxu0 %v1775
    %1881 = vmatprep.subr.mxu0 0.0
    %1882 = vmatpush1.msra.mxu0 %v1778
    %1883 = vmatprep.subr.mxu0 0.0
    %1884 = vmatpush1.msra.mxu0 %v1781
    %1885 = vmatprep.subr.mxu0 0.0
    %1886 = vmatpush1.msra.mxu0 0.0
    %1887 = vmatprep.subr.mxu0 0.0
    %1888 = vmatpush1.msra.mxu0 0.0
    %1889 = vmatprep.subr.mxu0 0.0
    %1890 = vmatpush1.msra.mxu0 0.0
    %1891 = vmatprep.subr.mxu0 0.0
    %1892 = vmatpush1.msra.mxu0 0.0
    %1893 = vmatprep.subr.mxu0 0.0
    %1894 = vmatpush1.msra.mxu0 0.0
    %1895 = vmatprep.subr.mxu0 0.0
    %1896 = vmatpush1.msra.mxu0 0.0
    %1897 = vmatprep.subr.mxu0 0.0
    %1898 = vmatpush1.msra.mxu0 0.0
    %1899 = vmatprep.subr.mxu0 0.0
    %1900 = vmatpush1.msra.mxu0 0.0
    %1901 = vmatprep.subr.mxu0 0.0
    %1902 = vmatpush1.msra.mxu0 0.0
    %1903 = vmatprep.subr.mxu0 0.0
    %1904 = vmatpush1.msra.mxu0 0.0
    %1905 = vmatprep.subr.mxu0 0.0
    %1906 = vmatpush1.msra.mxu0 0.0
    %1907 = vmatprep.subr.mxu0 0.0
    %1908 = vmatpush1.msra.mxu0 0.0
    %1909 = vmatprep.subr.mxu0 0.0
    %1910 = vmatpush1.msra.mxu0 0.0
    %1911 = vmatprep.subr.mxu0 0.0
    %1912 = vmatpush1.msra.mxu0 0.0
    %1913 = vmatprep.subr.mxu0 0.0
    %1914 = vmatpush1.msra.mxu0 0.0
    %1915 = vmatprep.subr.mxu0 0.0
    %1916 = vmatpush1.msra.mxu0 0.0
    %1917 = vmatprep.mubr.f32.mxu0 0.0
    %1918 = vmatmul.mubr.f32.gmra.mrb[0].mxu0 %v1729
    %v1919 = vpop.f32.mrb[0].mxu0
    %v1920 = vadd.f32 0.0, %v1919
    %v1921 = vpop.f32.mrb[0].mxu0
    %1922 = vdwg.mxu0
    %v1923 = vadd.f32 %v1731, %v1849
    %v1924 = vxor.u32 %v1923, 2147483648
    %v1925 = vmul.f32 %v1924, 1.442695
    %v1926 = vpow.pop %v1925
    %v1927 = vadd.f32 %v1926, 1.0
    %v1928 = vrcp.pop %v1927
    %v1929 = vmul.f32 1.0, %v1928
    %v1930 = vadd.f32 %v1732, %v1851
    %v1931 = vxor.u32 %v1930, 2147483648
    %v1932 = vmul.f32 %v1931, 1.442695
    %v1933 = vpow.pop %v1932
    %v1934 = vadd.f32 %v1933, 1.0
    %v1935 = vrcp.pop %v1934
    %v1936 = vmul.f32 1.0, %v1935
    %v1937 = vld [vmem:[%s7] sm:$0x1]
    %v1939 = vlaneseq
    %v1940 = vshrl.u32 %v1939, 7
    %v1941 = vsub.s32 0, %v1940
    %v1942 = vrot.slane %v1937, %v1941
    %v1944 = vadd.f32 %v1920, %v1942
    %v1945 = vmul.f32 %v1929, %v1944
    %v1946 = vadd.f32 %v1733, %v1945
    %v1947 = vtanh.pop %v1946
    %v1948 = vsub.f32 1.0, %v1936
    %v1949 = vmul.f32 %v1948, %v1947
    %v1950 = vmul.f32 %v1936, %v1729
    %v1951 = vadd.f32 %v1949, %v1950
    %s1952 = scalar_lea.vmem [#allocation4], 40
    %1953 = vst [vmem:[%s1952] sm:$0xff] %v1951
    %s1954 = sadd.s32 %s576, 5
    %p1955 = scmp.lt.s32.totalorder %s1954, 8
    // Predicated region
    $region90: #{tpu_custom_call.1} parent=1 // pred_check
      %p1956 = pneg %p1955
    $region91: #{tpu_custom_call.1} parent=1 // pred_check_branch
      %1958 = sbr.rel (%p1956) target = $region93
    $region92: #{tpu_custom_call.1} parent=1 // pred_region
      %1959 = vst [vmem:[#allocation2] sm:$0xff] %v1951
    $region93: #{tpu_custom_call.1} parent=1 // pred_fallthru
      _
    %v1960 = vld [vmem:[#allocation2] sm:$0xff]
    %s1961 = scalar_lea.vmem [#allocation3], 144
    %v1962 = vld [vmem:[%s1961] sm:$0xff]
    %v1963 = vld [vmem:[%s1961 + $0x8] sm:$0xff]
    %v1964 = vld [vmem:[%s1961 + $0x10] sm:$0xff]
    %v1965 = vld [vmem:[#allocation13] sm:$0xff]
    %v1966 = vld [vmem:[#allocation13 + $0x8] sm:$0xff]
    %v1967 = vld [vmem:[#allocation13 + $0x10] sm:$0xff]
    %v1968 = vld [vmem:[#allocation13 + $0x18] sm:$0xff]
    %v1969 = vld [vmem:[#allocation13 + $0x20] sm:$0xff]
    %v1970 = vld [vmem:[#allocation13 + $0x28] sm:$0xff]
    %v1971 = vld [vmem:[#allocation13 + $0x30] sm:$0xff]
    %v1972 = vld [vmem:[#allocation13 + $0x38] sm:$0xff]
    %v1973 = vld [vmem:[#allocation13 + $0x40] sm:$0xff]
    %v1974 = vld [vmem:[#allocation13 + $0x48] sm:$0xff]
    %v1975 = vld [vmem:[#allocation13 + $0x50] sm:$0xff]
    %v1976 = vld [vmem:[#allocation13 + $0x58] sm:$0xff]
    %v1977 = vld [vmem:[#allocation13 + $0x60] sm:$0xff]
    %v1978 = vld [vmem:[#allocation13 + $0x68] sm:$0xff]
    %v1979 = vld [vmem:[#allocation13 + $0x70] sm:$0xff]
    %v1980 = vld [vmem:[#allocation13 + $0x78] sm:$0xff]
    %v1981 = vld [vmem:[#allocation13 + $0x80] sm:$0xff]
    %v1982 = vld [vmem:[#allocation13 + $0x88] sm:$0xff]
    %v1983 = vld [vmem:[#allocation13 + $0x90] sm:$0xff]
    %v1984 = vld [vmem:[#allocation13 + $0x98] sm:$0xff]
    %v1985 = vld [vmem:[#allocation13 + $0xa0] sm:$0xff]
    %v1986 = vld [vmem:[#allocation13 + $0xa8] sm:$0xff]
    %v1987 = vld [vmem:[#allocation13 + $0xb0] sm:$0xff]
    %v1988 = vld [vmem:[#allocation13 + $0xb8] sm:$0xff]
    %v1989 = vld [vmem:[#allocation13 + $0xc0] sm:$0xff]
    %v1990 = vld [vmem:[#allocation13 + $0xc8] sm:$0xff]
    %v1991 = vld [vmem:[#allocation13 + $0xd0] sm:$0xff]
    %v1992 = vld [vmem:[#allocation13 + $0xd8] sm:$0xff]
    %v1993 = vld [vmem:[#allocation13 + $0xe0] sm:$0xff]
    %v1994 = vld [vmem:[#allocation13 + $0xe8] sm:$0xff]
    %v1995 = vld [vmem:[#allocation13 + $0xf0] sm:$0xff]
    %v1996 = vld [vmem:[#allocation13 + $0xf8] sm:$0xff]
    %v1997 = vld [vmem:[#allocation13 + $0x100] sm:$0xff]
    %v1998 = vld [vmem:[#allocation13 + $0x108] sm:$0xff]
    %v1999 = vld [vmem:[#allocation13 + $0x110] sm:$0xff]
    %v2000 = vld [vmem:[#allocation13 + $0x118] sm:$0xff]
    %v2001 = vld [vmem:[#allocation13 + $0x120] sm:$0xff]
    %v2002 = vld [vmem:[#allocation13 + $0x128] sm:$0xff]
    %v2003 = vld [vmem:[#allocation13 + $0x130] sm:$0xff]
    %v2004 = vld [vmem:[#allocation13 + $0x138] sm:$0xff]
    %v2005 = vld [vmem:[#allocation13 + $0x140] sm:$0xff]
    %v2006 = vld [vmem:[#allocation13 + $0x148] sm:$0xff]
    %v2007 = vld [vmem:[#allocation13 + $0x150] sm:$0xff]
    %v2008 = vld [vmem:[#allocation13 + $0x158] sm:$0xff]
    %v2009 = vld [vmem:[#allocation13 + $0x160] sm:$0xff]
    %v2010 = vld [vmem:[#allocation13 + $0x168] sm:$0xff]
    %v2011 = vld [vmem:[#allocation13 + $0x170] sm:$0xff]
    %v2012 = vld [vmem:[#allocation13 + $0x178] sm:$0xff]
    %2013 = vmatprep.subr.mxu0 %v1966
    %2014 = vmatpush1.msra.mxu0 %v1965
    %2015 = vmatprep.subr.mxu0 %v1969
    %2016 = vmatpush1.msra.mxu0 %v1968
    %2017 = vmatprep.subr.mxu0 %v1972
    %2018 = vmatpush1.msra.mxu0 %v1971
    %2019 = vmatprep.subr.mxu0 %v1975
    %2020 = vmatpush1.msra.mxu0 %v1974
    %2021 = vmatprep.subr.mxu0 %v1978
    %2022 = vmatpush1.msra.mxu0 %v1977
    %2023 = vmatprep.subr.mxu0 %v1981
    %2024 = vmatpush1.msra.mxu0 %v1980
    %2025 = vmatprep.subr.mxu0 %v1984
    %2026 = vmatpush1.msra.mxu0 %v1983
    %2027 = vmatprep.subr.mxu0 %v1987
    %2028 = vmatpush1.msra.mxu0 %v1986
    %2029 = vmatprep.subr.mxu0 %v1990
    %2030 = vmatpush1.msra.mxu0 %v1989
    %2031 = vmatprep.subr.mxu0 %v1993
    %2032 = vmatpush1.msra.mxu0 %v1992
    %2033 = vmatprep.subr.mxu0 %v1996
    %2034 = vmatpush1.msra.mxu0 %v1995
    %2035 = vmatprep.subr.mxu0 %v1999
    %2036 = vmatpush1.msra.mxu0 %v1998
    %2037 = vmatprep.subr.mxu0 %v2002
    %2038 = vmatpush1.msra.mxu0 %v2001
    %2039 = vmatprep.subr.mxu0 %v2005
    %2040 = vmatpush1.msra.mxu0 %v2004
    %2041 = vmatprep.subr.mxu0 %v2008
    %2042 = vmatpush1.msra.mxu0 %v2007
    %2043 = vmatprep.subr.mxu0 %v2011
    %2044 = vmatpush1.msra.mxu0 %v2010
    %2045 = vmatprep.subr.mxu0 0.0
    %2046 = vmatpush1.msra.mxu0 0.0
    %2047 = vmatprep.subr.mxu0 0.0
    %2048 = vmatpush1.msra.mxu0 0.0
    %2049 = vmatprep.subr.mxu0 0.0
    %2050 = vmatpush1.msra.mxu0 0.0
    %2051 = vmatprep.subr.mxu0 0.0
    %2052 = vmatpush1.msra.mxu0 0.0
    %2053 = vmatprep.subr.mxu0 0.0
    %2054 = vmatpush1.msra.mxu0 0.0
    %2055 = vmatprep.subr.mxu0 0.0
    %2056 = vmatpush1.msra.mxu0 0.0
    %2057 = vmatprep.subr.mxu0 0.0
    %2058 = vmatpush1.msra.mxu0 0.0
    %2059 = vmatprep.subr.mxu0 0.0
    %2060 = vmatpush1.msra.mxu0 0.0
    %2061 = vmatprep.subr.mxu0 0.0
    %2062 = vmatpush1.msra.mxu0 0.0
    %2063 = vmatprep.subr.mxu0 0.0
    %2064 = vmatpush1.msra.mxu0 0.0
    %2065 = vmatprep.subr.mxu0 0.0
    %2066 = vmatpush1.msra.mxu0 0.0
    %2067 = vmatprep.subr.mxu0 0.0
    %2068 = vmatpush1.msra.mxu0 0.0
    %2069 = vmatprep.subr.mxu0 0.0
    %2070 = vmatpush1.msra.mxu0 0.0
    %2071 = vmatprep.subr.mxu0 0.0
    %2072 = vmatpush1.msra.mxu0 0.0
    %2073 = vmatprep.subr.mxu0 0.0
    %2074 = vmatpush1.msra.mxu0 0.0
    %2075 = vmatprep.subr.mxu0 0.0
    %2076 = vmatpush1.msra.mxu0 0.0
    %2077 = vmatprep.mubr.f32.mxu0 0.0
    %2078 = vmatmul.mubr.f32.gmra.mrb[0].mxu0 %v1960
    %v2079 = vpop.f32.mrb[0].mxu0
    %v2080 = vadd.f32 0.0, %v2079
    %v2081 = vpop.f32.mrb[0].mxu0
    %v2082 = vadd.f32 0.0, %v2081
    %2083 = vdwg.mxu0
    %2084 = vmatprep.subr.mxu0 0.0
    %2085 = vmatpush1.msra.mxu0 %v1967
    %2086 = vmatprep.subr.mxu0 0.0
    %2087 = vmatpush1.msra.mxu0 %v1970
    %2088 = vmatprep.subr.mxu0 0.0
    %2089 = vmatpush1.msra.mxu0 %v1973
    %2090 = vmatprep.subr.mxu0 0.0
    %2091 = vmatpush1.msra.mxu0 %v1976
    %2092 = vmatprep.subr.mxu0 0.0
    %2093 = vmatpush1.msra.mxu0 %v1979
    %2094 = vmatprep.subr.mxu0 0.0
    %2095 = vmatpush1.msra.mxu0 %v1982
    %2096 = vmatprep.subr.mxu0 0.0
    %2097 = vmatpush1.msra.mxu0 %v1985
    %2098 = vmatprep.subr.mxu0 0.0
    %2099 = vmatpush1.msra.mxu0 %v1988
    %2100 = vmatprep.subr.mxu0 0.0
    %2101 = vmatpush1.msra.mxu0 %v1991
    %2102 = vmatprep.subr.mxu0 0.0
    %2103 = vmatpush1.msra.mxu0 %v1994
    %2104 = vmatprep.subr.mxu0 0.0
    %2105 = vmatpush1.msra.mxu0 %v1997
    %2106 = vmatprep.subr.mxu0 0.0
    %2107 = vmatpush1.msra.mxu0 %v2000
    %2108 = vmatprep.subr.mxu0 0.0
    %2109 = vmatpush1.msra.mxu0 %v2003
    %2110 = vmatprep.subr.mxu0 0.0
    %2111 = vmatpush1.msra.mxu0 %v2006
    %2112 = vmatprep.subr.mxu0 0.0
    %2113 = vmatpush1.msra.mxu0 %v2009
    %2114 = vmatprep.subr.mxu0 0.0
    %2115 = vmatpush1.msra.mxu0 %v2012
    %2116 = vmatprep.subr.mxu0 0.0
    %2117 = vmatpush1.msra.mxu0 0.0
    %2118 = vmatprep.subr.mxu0 0.0
    %2119 = vmatpush1.msra.mxu0 0.0
    %2120 = vmatprep.subr.mxu0 0.0
    %2121 = vmatpush1.msra.mxu0 0.0
    %2122 = vmatprep.subr.mxu0 0.0
    %2123 = vmatpush1.msra.mxu0 0.0
    %2124 = vmatprep.subr.mxu0 0.0
    %2125 = vmatpush1.msra.mxu0 0.0
    %2126 = vmatprep.subr.mxu0 0.0
    %2127 = vmatpush1.msra.mxu0 0.0
    %2128 = vmatprep.subr.mxu0 0.0
    %2129 = vmatpush1.msra.mxu0 0.0
    %2130 = vmatprep.subr.mxu0 0.0
    %2131 = vmatpush1.msra.mxu0 0.0
    %2132 = vmatprep.subr.mxu0 0.0
    %2133 = vmatpush1.msra.mxu0 0.0
    %2134 = vmatprep.subr.mxu0 0.0
    %2135 = vmatpush1.msra.mxu0 0.0
    %2136 = vmatprep.subr.mxu0 0.0
    %2137 = vmatpush1.msra.mxu0 0.0
    %2138 = vmatprep.subr.mxu0 0.0
    %2139 = vmatpush1.msra.mxu0 0.0
    %2140 = vmatprep.subr.mxu0 0.0
    %2141 = vmatpush1.msra.mxu0 0.0
    %2142 = vmatprep.subr.mxu0 0.0
    %2143 = vmatpush1.msra.mxu0 0.0
    %2144 = vmatprep.subr.mxu0 0.0
    %2145 = vmatpush1.msra.mxu0 0.0
    %2146 = vmatprep.subr.mxu0 0.0
    %2147 = vmatpush1.msra.mxu0 0.0
    %2148 = vmatprep.mubr.f32.mxu0 0.0
    %2149 = vmatmul.mubr.f32.gmra.mrb[0].mxu0 %v1960
    %v2150 = vpop.f32.mrb[0].mxu0
    %v2151 = vadd.f32 0.0, %v2150
    %v2152 = vpop.f32.mrb[0].mxu0
    %2153 = vdwg.mxu0
    %v2154 = vadd.f32 %v1962, %v2080
    %v2155 = vxor.u32 %v2154, 2147483648
    %v2156 = vmul.f32 %v2155, 1.442695
    %v2157 = vpow.pop %v2156
    %v2158 = vadd.f32 %v2157, 1.0
    %v2159 = vrcp.pop %v2158
    %v2160 = vmul.f32 1.0, %v2159
    %v2161 = vadd.f32 %v1963, %v2082
    %v2162 = vxor.u32 %v2161, 2147483648
    %v2163 = vmul.f32 %v2162, 1.442695
    %v2164 = vpow.pop %v2163
    %v2165 = vadd.f32 %v2164, 1.0
    %v2166 = vrcp.pop %v2165
    %v2167 = vmul.f32 1.0, %v2166
    %v2168 = vld [vmem:[%s7] sm:$0x1]
    %v2170 = vlaneseq
    %v2171 = vshrl.u32 %v2170, 7
    %v2172 = vsub.s32 0, %v2171
    %v2173 = vrot.slane %v2168, %v2172
    %v2175 = vadd.f32 %v2151, %v2173
    %v2176 = vmul.f32 %v2160, %v2175
    %v2177 = vadd.f32 %v1964, %v2176
    %v2178 = vtanh.pop %v2177
    %v2179 = vsub.f32 1.0, %v2167
    %v2180 = vmul.f32 %v2179, %v2178
    %v2181 = vmul.f32 %v2167, %v1960
    %v2182 = vadd.f32 %v2180, %v2181
    %s2183 = scalar_lea.vmem [#allocation4], 48
    %2184 = vst [vmem:[%s2183] sm:$0xff] %v2182
    %s2185 = sadd.s32 %s576, 6
    %p2186 = scmp.lt.s32.totalorder %s2185, 8
    // Predicated region
    $region94: #{tpu_custom_call.1} parent=1 // pred_check
      %p2187 = pneg %p2186
    $region95: #{tpu_custom_call.1} parent=1 // pred_check_branch
      %2189 = sbr.rel (%p2187) target = $region97
    $region96: #{tpu_custom_call.1} parent=1 // pred_region
      %2190 = vst [vmem:[#allocation2] sm:$0xff] %v2182
    $region97: #{tpu_custom_call.1} parent=1 // pred_fallthru
      _
    %v2191 = vld [vmem:[#allocation2] sm:$0xff]
    %s2192 = scalar_lea.vmem [#allocation3], 168
    %v2193 = vld [vmem:[%s2192] sm:$0xff]
    %v2194 = vld [vmem:[%s2192 + $0x8] sm:$0xff]
    %v2195 = vld [vmem:[%s2192 + $0x10] sm:$0xff]
    %v2196 = vld [vmem:[#allocation13] sm:$0xff]
    %v2197 = vld [vmem:[#allocation13 + $0x8] sm:$0xff]
    %v2198 = vld [vmem:[#allocation13 + $0x10] sm:$0xff]
    %v2199 = vld [vmem:[#allocation13 + $0x18] sm:$0xff]
    %v2200 = vld [vmem:[#allocation13 + $0x20] sm:$0xff]
    %v2201 = vld [vmem:[#allocation13 + $0x28] sm:$0xff]
    %v2202 = vld [vmem:[#allocation13 + $0x30] sm:$0xff]
    %v2203 = vld [vmem:[#allocation13 + $0x38] sm:$0xff]
    %v2204 = vld [vmem:[#allocation13 + $0x40] sm:$0xff]
    %v2205 = vld [vmem:[#allocation13 + $0x48] sm:$0xff]
    %v2206 = vld [vmem:[#allocation13 + $0x50] sm:$0xff]
    %v2207 = vld [vmem:[#allocation13 + $0x58] sm:$0xff]
    %v2208 = vld [vmem:[#allocation13 + $0x60] sm:$0xff]
    %v2209 = vld [vmem:[#allocation13 + $0x68] sm:$0xff]
    %v2210 = vld [vmem:[#allocation13 + $0x70] sm:$0xff]
    %v2211 = vld [vmem:[#allocation13 + $0x78] sm:$0xff]
    %v2212 = vld [vmem:[#allocation13 + $0x80] sm:$0xff]
    %v2213 = vld [vmem:[#allocation13 + $0x88] sm:$0xff]
    %v2214 = vld [vmem:[#allocation13 + $0x90] sm:$0xff]
    %v2215 = vld [vmem:[#allocation13 + $0x98] sm:$0xff]
    %v2216 = vld [vmem:[#allocation13 + $0xa0] sm:$0xff]
    %v2217 = vld [vmem:[#allocation13 + $0xa8] sm:$0xff]
    %v2218 = vld [vmem:[#allocation13 + $0xb0] sm:$0xff]
    %v2219 = vld [vmem:[#allocation13 + $0xb8] sm:$0xff]
    %v2220 = vld [vmem:[#allocation13 + $0xc0] sm:$0xff]
    %v2221 = vld [vmem:[#allocation13 + $0xc8] sm:$0xff]
    %v2222 = vld [vmem:[#allocation13 + $0xd0] sm:$0xff]
    %v2223 = vld [vmem:[#allocation13 + $0xd8] sm:$0xff]
    %v2224 = vld [vmem:[#allocation13 + $0xe0] sm:$0xff]
    %v2225 = vld [vmem:[#allocation13 + $0xe8] sm:$0xff]
    %v2226 = vld [vmem:[#allocation13 + $0xf0] sm:$0xff]
    %v2227 = vld [vmem:[#allocation13 + $0xf8] sm:$0xff]
    %v2228 = vld [vmem:[#allocation13 + $0x100] sm:$0xff]
    %v2229 = vld [vmem:[#allocation13 + $0x108] sm:$0xff]
    %v2230 = vld [vmem:[#allocation13 + $0x110] sm:$0xff]
    %v2231 = vld [vmem:[#allocation13 + $0x118] sm:$0xff]
    %v2232 = vld [vmem:[#allocation13 + $0x120] sm:$0xff]
    %v2233 = vld [vmem:[#allocation13 + $0x128] sm:$0xff]
    %v2234 = vld [vmem:[#allocation13 + $0x130] sm:$0xff]
    %v2235 = vld [vmem:[#allocation13 + $0x138] sm:$0xff]
    %v2236 = vld [vmem:[#allocation13 + $0x140] sm:$0xff]
    %v2237 = vld [vmem:[#allocation13 + $0x148] sm:$0xff]
    %v2238 = vld [vmem:[#allocation13 + $0x150] sm:$0xff]
    %v2239 = vld [vmem:[#allocation13 + $0x158] sm:$0xff]
    %v2240 = vld [vmem:[#allocation13 + $0x160] sm:$0xff]
    %v2241 = vld [vmem:[#allocation13 + $0x168] sm:$0xff]
    %v2242 = vld [vmem:[#allocation13 + $0x170] sm:$0xff]
    %v2243 = vld [vmem:[#allocation13 + $0x178] sm:$0xff]
    %2244 = vmatprep.subr.mxu0 %v2197
    %2245 = vmatpush1.msra.mxu0 %v2196
    %2246 = vmatprep.subr.mxu0 %v2200
    %2247 = vmatpush1.msra.mxu0 %v2199
    %2248 = vmatprep.subr.mxu0 %v2203
    %2249 = vmatpush1.msra.mxu0 %v2202
    %2250 = vmatprep.subr.mxu0 %v2206
    %2251 = vmatpush1.msra.mxu0 %v2205
    %2252 = vmatprep.subr.mxu0 %v2209
    %2253 = vmatpush1.msra.mxu0 %v2208
    %2254 = vmatprep.subr.mxu0 %v2212
    %2255 = vmatpush1.msra.mxu0 %v2211
    %2256 = vmatprep.subr.mxu0 %v2215
    %2257 = vmatpush1.msra.mxu0 %v2214
    %2258 = vmatprep.subr.mxu0 %v2218
    %2259 = vmatpush1.msra.mxu0 %v2217
    %2260 = vmatprep.subr.mxu0 %v2221
    %2261 = vmatpush1.msra.mxu0 %v2220
    %2262 = vmatprep.subr.mxu0 %v2224
    %2263 = vmatpush1.msra.mxu0 %v2223
    %2264 = vmatprep.subr.mxu0 %v2227
    %2265 = vmatpush1.msra.mxu0 %v2226
    %2266 = vmatprep.subr.mxu0 %v2230
    %2267 = vmatpush1.msra.mxu0 %v2229
    %2268 = vmatprep.subr.mxu0 %v2233
    %2269 = vmatpush1.msra.mxu0 %v2232
    %2270 = vmatprep.subr.mxu0 %v2236
    %2271 = vmatpush1.msra.mxu0 %v2235
    %2272 = vmatprep.subr.mxu0 %v2239
    %2273 = vmatpush1.msra.mxu0 %v2238
    %2274 = vmatprep.subr.mxu0 %v2242
    %2275 = vmatpush1.msra.mxu0 %v2241
    %2276 = vmatprep.subr.mxu0 0.0
    %2277 = vmatpush1.msra.mxu0 0.0
    %2278 = vmatprep.subr.mxu0 0.0
    %2279 = vmatpush1.msra.mxu0 0.0
    %2280 = vmatprep.subr.mxu0 0.0
    %2281 = vmatpush1.msra.mxu0 0.0
    %2282 = vmatprep.subr.mxu0 0.0
    %2283 = vmatpush1.msra.mxu0 0.0
    %2284 = vmatprep.subr.mxu0 0.0
    %2285 = vmatpush1.msra.mxu0 0.0
    %2286 = vmatprep.subr.mxu0 0.0
    %2287 = vmatpush1.msra.mxu0 0.0
    %2288 = vmatprep.subr.mxu0 0.0
    %2289 = vmatpush1.msra.mxu0 0.0
    %2290 = vmatprep.subr.mxu0 0.0
    %2291 = vmatpush1.msra.mxu0 0.0
    %2292 = vmatprep.subr.mxu0 0.0
    %2293 = vmatpush1.msra.mxu0 0.0
    %2294 = vmatprep.subr.mxu0 0.0
    %2295 = vmatpush1.msra.mxu0 0.0
    %2296 = vmatprep.subr.mxu0 0.0
    %2297 = vmatpush1.msra.mxu0 0.0
    %2298 = vmatprep.subr.mxu0 0.0
    %2299 = vmatpush1.msra.mxu0 0.0
    %2300 = vmatprep.subr.mxu0 0.0
    %2301 = vmatpush1.msra.mxu0 0.0
    %2302 = vmatprep.subr.mxu0 0.0
    %2303 = vmatpush1.msra.mxu0 0.0
    %2304 = vmatprep.subr.mxu0 0.0
    %2305 = vmatpush1.msra.mxu0 0.0
    %2306 = vmatprep.subr.mxu0 0.0
    %2307 = vmatpush1.msra.mxu0 0.0
    %2308 = vmatprep.mubr.f32.mxu0 0.0
    %2309 = vmatmul.mubr.f32.gmra.mrb[0].mxu0 %v2191
    %v2310 = vpop.f32.mrb[0].mxu0
    %v2311 = vadd.f32 0.0, %v2310
    %v2312 = vpop.f32.mrb[0].mxu0
    %v2313 = vadd.f32 0.0, %v2312
    %2314 = vdwg.mxu0
    %2315 = vmatprep.subr.mxu0 0.0
    %2316 = vmatpush1.msra.mxu0 %v2198
    %2317 = vmatprep.subr.mxu0 0.0
    %2318 = vmatpush1.msra.mxu0 %v2201
    %2319 = vmatprep.subr.mxu0 0.0
    %2320 = vmatpush1.msra.mxu0 %v2204
    %2321 = vmatprep.subr.mxu0 0.0
    %2322 = vmatpush1.msra.mxu0 %v2207
    %2323 = vmatprep.subr.mxu0 0.0
    %2324 = vmatpush1.msra.mxu0 %v2210
    %2325 = vmatprep.subr.mxu0 0.0
    %2326 = vmatpush1.msra.mxu0 %v2213
    %2327 = vmatprep.subr.mxu0 0.0
    %2328 = vmatpush1.msra.mxu0 %v2216
    %2329 = vmatprep.subr.mxu0 0.0
    %2330 = vmatpush1.msra.mxu0 %v2219
    %2331 = vmatprep.subr.mxu0 0.0
    %2332 = vmatpush1.msra.mxu0 %v2222
    %2333 = vmatprep.subr.mxu0 0.0
    %2334 = vmatpush1.msra.mxu0 %v2225
    %2335 = vmatprep.subr.mxu0 0.0
    %2336 = vmatpush1.msra.mxu0 %v2228
    %2337 = vmatprep.subr.mxu0 0.0
    %2338 = vmatpush1.msra.mxu0 %v2231
    %2339 = vmatprep.subr.mxu0 0.0
    %2340 = vmatpush1.msra.mxu0 %v2234
    %2341 = vmatprep.subr.mxu0 0.0
    %2342 = vmatpush1.msra.mxu0 %v2237
    %2343 = vmatprep.subr.mxu0 0.0
    %2344 = vmatpush1.msra.mxu0 %v2240
    %2345 = vmatprep.subr.mxu0 0.0
    %2346 = vmatpush1.msra.mxu0 %v2243
    %2347 = vmatprep.subr.mxu0 0.0
    %2348 = vmatpush1.msra.mxu0 0.0
    %2349 = vmatprep.subr.mxu0 0.0
    %2350 = vmatpush1.msra.mxu0 0.0
    %2351 = vmatprep.subr.mxu0 0.0
    %2352 = vmatpush1.msra.mxu0 0.0
    %2353 = vmatprep.subr.mxu0 0.0
    %2354 = vmatpush1.msra.mxu0 0.0
    %2355 = vmatprep.subr.mxu0 0.0
    %2356 = vmatpush1.msra.mxu0 0.0
    %2357 = vmatprep.subr.mxu0 0.0
    %2358 = vmatpush1.msra.mxu0 0.0
    %2359 = vmatprep.subr.mxu0 0.0
    %2360 = vmatpush1.msra.mxu0 0.0
    %2361 = vmatprep.subr.mxu0 0.0
    %2362 = vmatpush1.msra.mxu0 0.0
    %2363 = vmatprep.subr.mxu0 0.0
    %2364 = vmatpush1.msra.mxu0 0.0
    %2365 = vmatprep.subr.mxu0 0.0
    %2366 = vmatpush1.msra.mxu0 0.0
    %2367 = vmatprep.subr.mxu0 0.0
    %2368 = vmatpush1.msra.mxu0 0.0
    %2369 = vmatprep.subr.mxu0 0.0
    %2370 = vmatpush1.msra.mxu0 0.0
    %2371 = vmatprep.subr.mxu0 0.0
    %2372 = vmatpush1.msra.mxu0 0.0
    %2373 = vmatprep.subr.mxu0 0.0
    %2374 = vmatpush1.msra.mxu0 0.0
    %2375 = vmatprep.subr.mxu0 0.0
    %2376 = vmatpush1.msra.mxu0 0.0
    %2377 = vmatprep.subr.mxu0 0.0
    %2378 = vmatpush1.msra.mxu0 0.0
    %2379 = vmatprep.mubr.f32.mxu0 0.0
    %2380 = vmatmul.mubr.f32.gmra.mrb[0].mxu0 %v2191
    %v2381 = vpop.f32.mrb[0].mxu0
    %v2382 = vadd.f32 0.0, %v2381
    %v2383 = vpop.f32.mrb[0].mxu0
    %2384 = vdwg.mxu0
    %v2385 = vadd.f32 %v2193, %v2311
    %v2386 = vxor.u32 %v2385, 2147483648
    %v2387 = vmul.f32 %v2386, 1.442695
    %v2388 = vpow.pop %v2387
    %v2389 = vadd.f32 %v2388, 1.0
    %v2390 = vrcp.pop %v2389
    %v2391 = vmul.f32 1.0, %v2390
    %v2392 = vadd.f32 %v2194, %v2313
    %v2393 = vxor.u32 %v2392, 2147483648
    %v2394 = vmul.f32 %v2393, 1.442695
    %v2395 = vpow.pop %v2394
    %v2396 = vadd.f32 %v2395, 1.0
    %v2397 = vrcp.pop %v2396
    %v2398 = vmul.f32 1.0, %v2397
    %v2399 = vld [vmem:[%s7] sm:$0x1]
    %v2401 = vlaneseq
    %v2402 = vshrl.u32 %v2401, 7
    %v2403 = vsub.s32 0, %v2402
    %v2404 = vrot.slane %v2399, %v2403
    %v2406 = vadd.f32 %v2382, %v2404
    %v2407 = vmul.f32 %v2391, %v2406
    %v2408 = vadd.f32 %v2195, %v2407
    %v2409 = vtanh.pop %v2408
    %v2410 = vsub.f32 1.0, %v2398
    %v2411 = vmul.f32 %v2410, %v2409
    %v2412 = vmul.f32 %v2398, %v2191
    %v2413 = vadd.f32 %v2411, %v2412
    %s2414 = scalar_lea.vmem [#allocation4], 56
    %2415 = vst [vmem:[%s2414] sm:$0xff] %v2413
    %s2416 = sadd.s32 %s576, 7
    %p2417 = scmp.lt.s32.totalorder %s2416, 8
    // Predicated region
    $region98: #{tpu_custom_call.1} parent=1 // pred_check
      %p2418 = pneg %p2417
    $region99: #{tpu_custom_call.1} parent=1 // pred_check_branch
      %2420 = sbr.rel (%p2418) target = $region101
    $region100: #{tpu_custom_call.1} parent=1 // pred_region
      %2421 = vst [vmem:[#allocation2] sm:$0xff] %v2413
    $region101: #{tpu_custom_call.1} parent=1 // pred_fallthru
      _
    %v2422 = vld [vmem:[#allocation4] sm:$0xff]
    %v2423 = vld [vmem:[#allocation4 + $0x8] sm:$0xff]
    %v2424 = vld [vmem:[#allocation4 + $0x10] sm:$0xff]
    %v2425 = vld [vmem:[#allocation4 + $0x18] sm:$0xff]
    %v2426 = vld [vmem:[#allocation4 + $0x20] sm:$0xff]
    %v2427 = vld [vmem:[#allocation4 + $0x28] sm:$0xff]
    %v2428 = vld [vmem:[#allocation4 + $0x30] sm:$0xff]
    %v2429 = vld [vmem:[#allocation4 + $0x38] sm:$0xff]
    %v2430 = vld [vmem:[#allocation14] sm:$0xff]
    %v2431 = vld [vmem:[#allocation14 + $0x8] sm:$0xff]
    %v2432 = vld [vmem:[#allocation14 + $0x10] sm:$0xff]
    %v2433 = vld [vmem:[#allocation14 + $0x18] sm:$0xff]
    %v2434 = vld [vmem:[#allocation14 + $0x20] sm:$0xff]
    %v2435 = vld [vmem:[#allocation14 + $0x28] sm:$0xff]
    %v2436 = vld [vmem:[#allocation14 + $0x30] sm:$0xff]
    %v2437 = vld [vmem:[#allocation14 + $0x38] sm:$0xff]
    %v2438 = vld [vmem:[#allocation14 + $0x40] sm:$0xff]
    %v2439 = vld [vmem:[#allocation14 + $0x48] sm:$0xff]
    %v2440 = vld [vmem:[#allocation14 + $0x50] sm:$0xff]
    %v2441 = vld [vmem:[#allocation14 + $0x58] sm:$0xff]
    %v2442 = vld [vmem:[#allocation14 + $0x60] sm:$0xff]
    %v2443 = vld [vmem:[#allocation14 + $0x68] sm:$0xff]
    %v2444 = vld [vmem:[#allocation14 + $0x70] sm:$0xff]
    %v2445 = vld [vmem:[#allocation14 + $0x78] sm:$0xff]
    %v2446 = vld [vmem:[%s9] sm:$0x1]
    %v2448 = vlaneseq
    %v2449 = vshrl.u32 %v2448, 7
    %v2450 = vsub.s32 0, %v2449
    %v2451 = vrot.slane %v2446, %v2450
    %2453 = vmatprep.subr.mxu0 0.0
    %2454 = vmatpush1.msra.mxu0 %v2430
    %2455 = vmatprep.subr.mxu0 0.0
    %2456 = vmatpush1.msra.mxu0 %v2431
    %2457 = vmatprep.subr.mxu0 0.0
    %2458 = vmatpush1.msra.mxu0 %v2432
    %2459 = vmatprep.subr.mxu0 0.0
    %2460 = vmatpush1.msra.mxu0 %v2433
    %2461 = vmatprep.subr.mxu0 0.0
    %2462 = vmatpush1.msra.mxu0 %v2434
    %2463 = vmatprep.subr.mxu0 0.0
    %2464 = vmatpush1.msra.mxu0 %v2435
    %2465 = vmatprep.subr.mxu0 0.0
    %2466 = vmatpush1.msra.mxu0 %v2436
    %2467 = vmatprep.subr.mxu0 0.0
    %2468 = vmatpush1.msra.mxu0 %v2437
    %2469 = vmatprep.subr.mxu0 0.0
    %2470 = vmatpush1.msra.mxu0 %v2438
    %2471 = vmatprep.subr.mxu0 0.0
    %2472 = vmatpush1.msra.mxu0 %v2439
    %2473 = vmatprep.subr.mxu0 0.0
    %2474 = vmatpush1.msra.mxu0 %v2440
    %2475 = vmatprep.subr.mxu0 0.0
    %2476 = vmatpush1.msra.mxu0 %v2441
    %2477 = vmatprep.subr.mxu0 0.0
    %2478 = vmatpush1.msra.mxu0 %v2442
    %2479 = vmatprep.subr.mxu0 0.0
    %2480 = vmatpush1.msra.mxu0 %v2443
    %2481 = vmatprep.subr.mxu0 0.0
    %2482 = vmatpush1.msra.mxu0 %v2444
    %2483 = vmatprep.subr.mxu0 0.0
    %2484 = vmatpush1.msra.mxu0 %v2445
    %2485 = vmatprep.subr.mxu0 0.0
    %2486 = vmatpush1.msra.mxu0 0.0
    %2487 = vmatprep.subr.mxu0 0.0
    %2488 = vmatpush1.msra.mxu0 0.0
    %2489 = vmatprep.subr.mxu0 0.0
    %2490 = vmatpush1.msra.mxu0 0.0
    %2491 = vmatprep.subr.mxu0 0.0
    %2492 = vmatpush1.msra.mxu0 0.0
    %2493 = vmatprep.subr.mxu0 0.0
    %2494 = vmatpush1.msra.mxu0 0.0
    %2495 = vmatprep.subr.mxu0 0.0
    %2496 = vmatpush1.msra.mxu0 0.0
    %2497 = vmatprep.subr.mxu0 0.0
    %2498 = vmatpush1.msra.mxu0 0.0
    %2499 = vmatprep.subr.mxu0 0.0
    %2500 = vmatpush1.msra.mxu0 0.0
    %2501 = vmatprep.subr.mxu0 0.0
    %2502 = vmatpush1.msra.mxu0 0.0
    %2503 = vmatprep.subr.mxu0 0.0
    %2504 = vmatpush1.msra.mxu0 0.0
    %2505 = vmatprep.subr.mxu0 0.0
    %2506 = vmatpush1.msra.mxu0 0.0
    %2507 = vmatprep.subr.mxu0 0.0
    %2508 = vmatpush1.msra.mxu0 0.0
    %2509 = vmatprep.subr.mxu0 0.0
    %2510 = vmatpush1.msra.mxu0 0.0
    %2511 = vmatprep.subr.mxu0 0.0
    %2512 = vmatpush1.msra.mxu0 0.0
    %2513 = vmatprep.subr.mxu0 0.0
    %2514 = vmatpush1.msra.mxu0 0.0
    %2515 = vmatprep.subr.mxu0 0.0
    %2516 = vmatpush1.msra.mxu0 0.0
    %2517 = vmatprep.mubr.f32.mxu0 0.0
    %2518 = vmatmul.mubr.f32.gmra.mrb[0].mxu0 %v2422
    %v2519 = vpop.f32.mrb[0].mxu0
    %v2520 = vadd.f32 %v2451, %v2519
    %v2521 = vpop.f32.mrb[0].mxu0
    %2522 = vmatprep.mubr.f32.mxu0 0.0
    %2523 = vmatmul.mubr.f32.gmra.mrb[0].mxu0 %v2423
    %v2524 = vpop.f32.mrb[0].mxu0
    %v2525 = vadd.f32 %v2451, %v2524
    %v2526 = vpop.f32.mrb[0].mxu0
    %2527 = vmatprep.mubr.f32.mxu0 0.0
    %2528 = vmatmul.mubr.f32.gmra.mrb[0].mxu0 %v2424
    %v2529 = vpop.f32.mrb[0].mxu0
    %v2530 = vadd.f32 %v2451, %v2529
    %v2531 = vpop.f32.mrb[0].mxu0
    %2532 = vmatprep.mubr.f32.mxu0 0.0
    %2533 = vmatmul.mubr.f32.gmra.mrb[0].mxu0 %v2425
    %v2534 = vpop.f32.mrb[0].mxu0
    %v2535 = vadd.f32 %v2451, %v2534
    %v2536 = vpop.f32.mrb[0].mxu0
    %2537 = vmatprep.mubr.f32.mxu0 0.0
    %2538 = vmatmul.mubr.f32.gmra.mrb[0].mxu0 %v2426
    %v2539 = vpop.f32.mrb[0].mxu0
    %v2540 = vadd.f32 %v2451, %v2539
    %v2541 = vpop.f32.mrb[0].mxu0
    %2542 = vmatprep.mubr.f32.mxu0 0.0
    %2543 = vmatmul.mubr.f32.gmra.mrb[0].mxu0 %v2427
    %v2544 = vpop.f32.mrb[0].mxu0
    %v2545 = vadd.f32 %v2451, %v2544
    %v2546 = vpop.f32.mrb[0].mxu0
    %2547 = vmatprep.mubr.f32.mxu0 0.0
    %2548 = vmatmul.mubr.f32.gmra.mrb[0].mxu0 %v2428
    %v2549 = vpop.f32.mrb[0].mxu0
    %v2550 = vadd.f32 %v2451, %v2549
    %v2551 = vpop.f32.mrb[0].mxu0
    %2552 = vmatprep.mubr.f32.mxu0 0.0
    %2553 = vmatmul.mubr.f32.gmra.mrb[0].mxu0 %v2429
    %v2554 = vpop.f32.mrb[0].mxu0
    %v2555 = vadd.f32 %v2451, %v2554
    %v2556 = vpop.f32.mrb[0].mxu0
    %2557 = vdwg.mxu0
    %2558 = vst [vmem:[#allocation16] sm:$0xff] %v2520
    %2559 = vst [vmem:[#allocation16 + $0x8] sm:$0xff] %v2525
    %2560 = vst [vmem:[#allocation16 + $0x10] sm:$0xff] %v2530
    %2561 = vst [vmem:[#allocation16 + $0x18] sm:$0xff] %v2535
    %2562 = vst [vmem:[#allocation16 + $0x20] sm:$0xff] %v2540
    %2563 = vst [vmem:[#allocation16 + $0x28] sm:$0xff] %v2545
    %2564 = vst [vmem:[#allocation16 + $0x30] sm:$0xff] %v2550
    %2565 = vst [vmem:[#allocation16 + $0x38] sm:$0xff] %v2555
    // Predicated region
    $region102: #{tpu_custom_call.1} parent=1 // pred_check
      %p2566 = pneg %p119
    $region103: #{tpu_custom_call.1} parent=1 // pred_check_branch
      %2568 = sbr.rel (%p2566) target = $region105
    $region104: #{tpu_custom_call.1} parent=1 // pred_region
      %v2569 = vld [vmem:[#allocation2] sm:$0xff]
      %2570 = vst [vmem:[#allocation17] sm:$0xff] %v2569
    $region105: #{tpu_custom_call.1} parent=1 // pred_fallthru
      _
    // Predicated region
    $region106: #{tpu_custom_call.1} parent=1 // pred_check
      _
    $region107: #{tpu_custom_call.1} parent=1 // pred_check_branch
      %2572 = sbr.rel (0) target = $region109
    $region108: #{tpu_custom_call.1} parent=1 // pred_region
      %s2574 = ssub.s32 1024, 1024
      %2575 = vsyncadd [#allocation7], %s2574
      %s2576 = sshll.u32 [#allocation16], 4
      %s2577 = int_to_ptr.vmem [resolvable:$true] %s2576
      %2582 = dma.vmem_to_hbm [thread:$0]  %s2577, 1024, %s10, [#allocation7], 128, 128, 8
    $region109: #{tpu_custom_call.1} parent=1 // pred_fallthru
      _
    // Predicated region
    $region110: #{tpu_custom_call.1} parent=1 // pred_check
      _
    $region111: #{tpu_custom_call.1} parent=1 // pred_check_branch
      %2584 = sbr.rel (0) target = $region113
    $region112: #{tpu_custom_call.1} parent=1 // pred_region
      %s2586 = ssub.s32 128, 128
      %2587 = vsyncadd [#allocation18], %s2586
      %s2589 = sshll.u32 [#allocation17], 4
      %s2590 = int_to_ptr.vmem [resolvable:$true] %s2589
      %2592 = dma.vmem_to_hbm [thread:$0]  %s2590, 128, %s11, [#allocation18]
    $region113: #{tpu_custom_call.1} parent=1 // pred_fallthru
      _
    // Predicated region
    $region114: #{tpu_custom_call.1} parent=1 // pred_check
      _
    $region115: #{tpu_custom_call.1} parent=1 // pred_check_branch
      %2594 = sbr.rel (0) target = $region117
    $region116: #{tpu_custom_call.1} parent=1 // pred_region
      %2595 = dma.done [#allocation7], 1024
    $region117: #{tpu_custom_call.1} parent=1 // pred_fallthru
      _
    // Predicated region
    $region118: #{tpu_custom_call.1} parent=1 // pred_check
      _
    $region119: #{tpu_custom_call.1} parent=1 // pred_check_branch
      %2597 = sbr.rel (0) target = $region121
    $region120: #{tpu_custom_call.1} parent=1 // pred_region
      %2598 = dma.done [#allocation18], 128
    $region121: #{tpu_custom_call.1} parent=1 // pred_fallthru
      _
    %2599 = vsyncpa [#allocation6], 1
    %2600 = vsyncpa [#allocation9], 1
    %2601 = vsyncpa [#allocation12], 1
    %2602 = vsyncpa [#allocation15], 1
    %2603 = vsyncpa [#allocation7], 1
    %2604 = vsyncpa [#allocation18], 1

</llo_original>
